<compile_context>
chip_gen: v6e
topology: v6e:2x2x1
jax: 0.10.0
libtpu: 0.0.40
codegen_flags: <defaults>
</compile_context>

<pallas_src>
import numpy as np
import jax
import jax.numpy as jnp
from jax.experimental import pallas as pl
from jax.experimental.pallas import tpu as pltpu


# ---------------------------------------------------------------------------
# Fused kernel: both ReviewEncoders + LatentFactor predict for one batch row.
# ---------------------------------------------------------------------------
def _encode(x_ref, q_ref, p_ref, cw_ref, cb_ref, aw_ref, ab_ref,
            wa_ref, ba_ref, tw_ref, tb_ref):
    """One ReviewEncoder for the current batch row.

    x_ref : (1, R, Lout, 3W)  im2col'd review word embeddings (channels-last)
    q_ref : (1, R, H)         quality-id embeddings
    p_ref : (1, 1, H)         preference-id embedding
    cw_ref: (3W, C)           conv weight in im2col layout (C padded to 128)
    cb_ref: (1, C)            conv bias (padded channels zero)
    aw_ref: (C + H, H)        fused [att_review_w ; att_id_w]
    ab_ref: (1, H)            att_review bias
    wa_ref: (1, H)            att_layer weight (row vector)
    ba_ref: (1, 1)            att_layer bias
    tw_ref: (C, H)            top_linear weight
    tb_ref: (1, H)            top_linear bias
    Returns: feature (1, H) f32, tip index (1, 1) int32
    """
    x = x_ref[0]                                                # (R, Lout, 3W)

    # Conv1d(k=3) as ONE im2col matmul on the MXU: M=R*Lout, K=3W, N=C.
    conv = jax.lax.dot_general(x, cw_ref[...], (((2,), (0,)), ((), ())),
                               preferred_element_type=jnp.float32)
    conv = jnp.maximum(conv + cb_ref[...][None], 0.0)           # bias + ReLU
    rfeat = jnp.max(conv, axis=1)                               # max-pool over time -> (R, C)

    # Fused attention projections: [rfeat | qemb] @ [W_review ; W_id] (one MXU pass).
    cat = jnp.concatenate([rfeat, q_ref[0]], axis=1)            # (R, C + H)
    h = jnp.maximum(jnp.dot(cat, aw_ref[...],
                            preferred_element_type=jnp.float32) + ab_ref[...], 0.0)
    # Attention logits stay in f32 (argmax correctness).
    s = jnp.sum(h * wa_ref[...], axis=1, keepdims=True) + ba_ref[...]   # (R, 1)

    # Softmax over reviews; divide on the EUP via approximate reciprocal.
    m = jnp.max(s, axis=0, keepdims=True)                       # (1, 1)
    e = jnp.exp(s - m)
    w = e * pl.reciprocal(jnp.sum(e, axis=0, keepdims=True), approx=True)

    att_out = jnp.sum(w * rfeat, axis=0, keepdims=True)         # (1, C)
    feat = (jnp.dot(att_out, tw_ref[...], preferred_element_type=jnp.float32)
            + tb_ref[...] + p_ref[0])                           # (1, H)

    # argmax over reviews (first occurrence, like torch.argmax), computed in f32.
    iota = jax.lax.broadcasted_iota(jnp.int32, s.shape, 0)
    tip = jnp.min(jnp.where(s >= m, iota, s.shape[0]), axis=0, keepdims=True)
    return feat, tip


def narre_fused_kernel(u_x_ref, u_q_ref, u_p_ref, u_cw_ref, u_cb_ref, u_aw_ref,
                       u_ab_ref, u_wa_ref, u_ba_ref, u_tw_ref, u_tb_ref,
                       i_x_ref, i_q_ref, i_p_ref, i_cw_ref, i_cb_ref, i_aw_ref,
                       i_ab_ref, i_wa_ref, i_ba_ref, i_tw_ref, i_tb_ref,
                       pw_ref, pb_ref, bu_ref, bi_ref,
                       pred_ref, utip_ref, itip_ref):
    uf, ut = _encode(u_x_ref, u_q_ref, u_p_ref, u_cw_ref, u_cb_ref, u_aw_ref,
                     u_ab_ref, u_wa_ref, u_ba_ref, u_tw_ref, u_tb_ref)
    itf, it = _encode(i_x_ref, i_q_ref, i_p_ref, i_cw_ref, i_cb_ref, i_aw_ref,
                      i_ab_ref, i_wa_ref, i_ba_ref, i_tw_ref, i_tb_ref)
    # LatentFactor: elementwise product + lane reduction (no N=1 MXU matmul).
    p = jnp.sum(uf * itf * pw_ref[...], axis=1, keepdims=True)           # (1, 1)
    pred_ref[0] = p + pb_ref[...] + bu_ref[0] + bi_ref[0]
    utip_ref[0] = ut
    itip_ref[0] = it


# ---------------------------------------------------------------------------
# Wrapper (plain-JAX glue: embedding gathers, im2col, weight fusion, tip gather)
# ---------------------------------------------------------------------------
def narre_forward(params, user_review, user_id, item_id_per_review,
                  item_review, item_id, user_id_per_review):
    wemb = params['word_emb']
    B, R, L = user_review.shape
    W = wemb.shape[1]
    lout = L - 2
    K3 = 3 * W
    C = params['user_layer']['conv_b'].shape[1]      # padded channel count (128)
    H = params['user_layer']['top_b'].shape[1]

    def im2col(tokens):
        emb = jnp.take(wemb, tokens, axis=0)                           # (B, R, L, W)
        return jnp.concatenate([emb[:, :, k:k + lout, :] for k in range(3)],
                               axis=-1)                                # (B, R, lout, 3W)

    def prep_encoder(p, pref_id, qual_id):
        cw = p['conv_w'].reshape(K3, C)                                # (3W, C) tap-major
        aw = jnp.concatenate([p['att_review_w'], p['att_id_w']], 0)    # (C+H, H)
        pemb = jnp.take(p['pref_emb'], pref_id[:, 0], axis=0)[:, None, :]   # (B,1,H)
        qemb = jnp.take(p['qual_emb'], qual_id, axis=0)                # (B, R, H)
        return (qemb, pemb, cw, p['conv_b'], aw, p['att_review_b'],
                p['att_layer_w_t'], p['att_layer_b'], p['top_w'], p['top_b'])

    u_x = im2col(user_review)
    i_x = im2col(item_review)
    u_args = prep_encoder(params['user_layer'], user_id, item_id_per_review)
    i_args = prep_encoder(params['item_layer'], item_id, user_id_per_review)

    pw_t = params['pred_w'].T                                          # (1, H)
    bu = jnp.take(params['b_user'], user_id[:, 0])[:, None, None]      # (B, 1, 1)
    bi = jnp.take(params['b_item'], item_id[:, 0])[:, None, None]      # (B, 1, 1)

    def enc_specs():
        return [
            pl.BlockSpec((1, R, lout, K3), lambda b: (b, 0, 0, 0)),    # im2col x
            pl.BlockSpec((1, R, H), lambda b: (b, 0, 0)),              # qemb
            pl.BlockSpec((1, 1, H), lambda b: (b, 0, 0)),              # pemb
            pl.BlockSpec((K3, C), lambda b: (0, 0)),                   # conv_w
            pl.BlockSpec((1, C), lambda b: (0, 0)),                    # conv_b
            pl.BlockSpec((C + H, H), lambda b: (0, 0)),                # fused att_w
            pl.BlockSpec((1, H), lambda b: (0, 0)),                    # att_review_b
            pl.BlockSpec((1, H), lambda b: (0, 0)),                    # att_layer_w
            pl.BlockSpec((1, 1), lambda b: (0, 0)),                    # att_layer_b
            pl.BlockSpec((C, H), lambda b: (0, 0)),                    # top_w
            pl.BlockSpec((1, H), lambda b: (0, 0)),                    # top_b
        ]

    in_specs = enc_specs() + enc_specs() + [
        pl.BlockSpec((1, H), lambda b: (0, 0)),                        # pred_w^T
        pl.BlockSpec((1, 1), lambda b: (0, 0)),                        # pred_b
        pl.BlockSpec((1, 1, 1), lambda b: (b, 0, 0)),                  # b_user[id]
        pl.BlockSpec((1, 1, 1), lambda b: (b, 0, 0)),                  # b_item[id]
    ]
    out_specs = (pl.BlockSpec((1, 1, 1), lambda b: (b, 0, 0)),
                 pl.BlockSpec((1, 1, 1), lambda b: (b, 0, 0)),
                 pl.BlockSpec((1, 1, 1), lambda b: (b, 0, 0)))

    pred3, utip3, itip3 = pl.pallas_call(
        narre_fused_kernel,
        out_shape=(jax.ShapeDtypeStruct((B, 1, 1), jnp.float32),
                   jax.ShapeDtypeStruct((B, 1, 1), jnp.int32),
                   jax.ShapeDtypeStruct((B, 1, 1), jnp.int32)),
        grid=(B,),
        in_specs=in_specs,
        out_specs=out_specs,
        compiler_params=pltpu.CompilerParams(dimension_semantics=("parallel",)),
    )(u_x, *u_args, i_x, *i_args, pw_t, params['pred_b'], bu, bi)

    predict = pred3[:, 0, 0]                                           # (B,)
    utip = utip3[:, 0, :]                                              # (B, 1)
    itip = itip3[:, 0, :]
    # tip-token gather (glue): out[b, l] = review[b, tip[b], l]
    user_tip = jnp.take_along_axis(user_review, utip[:, :, None], axis=1)[:, 0, :]
    item_tip = jnp.take_along_axis(item_review, itip[:, :, None], axis=1)[:, 0, :]
    return predict, user_tip, item_tip


# ---------------------------------------------------------------------------
# Pure-JAX reference (module math, same padded params) for correctness check
# ---------------------------------------------------------------------------
def ref_review_encoder(params, review_emb, preference_id, quality_id):
    B, R, L, W = review_emb.shape
    pemb = jnp.take(params['pref_emb'], preference_id[:, 0], axis=0)
    qemb = jnp.take(params['qual_emb'], quality_id, axis=0)
    x = review_emb.reshape(B * R, L, W)
    lout = L - 2
    acc = sum(jnp.einsum('nlw,wc->nlc', x[:, k:k + lout, :], params['conv_w'][k])
              for k in range(3))
    acc = jnp.maximum(acc + params['conv_b'][None], 0.0)
    rfeat = jnp.max(acc, axis=1).reshape(B, R, -1)
    ra = jnp.einsum('brc,ch->brh', rfeat, params['att_review_w']) + params['att_review_b'][None]
    ia = jnp.einsum('brh,hk->brk', qemb, params['att_id_w'])
    h = jnp.maximum(ra + ia, 0.0)
    s = jnp.sum(h * params['att_layer_w_t'][None], axis=2) + params['att_layer_b']
    w = jax.nn.softmax(s, axis=1)
    att_out = jnp.sum(w[:, :, None] * rfeat, axis=1)
    feat = att_out @ params['top_w'] + params['top_b'] + pemb
    tip = jnp.argmax(s, axis=1).astype(jnp.int32)[:, None]
    return feat, tip


def ref_narre_forward(params, user_review, user_id, item_id_per_review,
                      item_review, item_id, user_id_per_review):
    wemb = params['word_emb']
    ur_emb = jnp.take(wemb, user_review, axis=0)
    ir_emb = jnp.take(wemb, item_review, axis=0)
    uf, utip = ref_review_encoder(params['user_layer'], ur_emb, user_id, item_id_per_review)
    itf, itip = ref_review_encoder(params['item_layer'], ir_emb, item_id, user_id_per_review)
    dot = uf * itf
    predict = (dot @ params['pred_w'] + params['pred_b']
               + jnp.take(params['b_user'], user_id[:, 0])[:, None]
               + jnp.take(params['b_item'], item_id[:, 0])[:, None])
    user_tip = jnp.take_along_axis(user_review, utip[:, :, None], axis=1)[:, 0, :]
    item_tip = jnp.take_along_axis(item_review, itip[:, :, None], axis=1)[:, 0, :]
    return predict[:, 0], user_tip, item_tip


# ---------------------------------------------------------------------------
# Deterministic parameter construction
# ---------------------------------------------------------------------------
def init_review_encoder_params(key, pref_count, qual_count, H, W, C, C_PAD):
    ks = jax.random.split(key, 11)
    sc = 0.1

    def pad_rows(a):  # (C, H) -> (C_PAD, H), extra rows zero
        return jnp.zeros((C_PAD, a.shape[1]), jnp.float32).at[:C].set(a)

    conv_w = jax.random.normal(ks[0], (3, W, C), jnp.float32) * sc
    conv_w = jnp.zeros((3, W, C_PAD), jnp.float32).at[:, :, :C].set(conv_w)
    conv_b = jnp.zeros((1, C_PAD), jnp.float32).at[0, :C].set(
        jax.random.normal(ks[1], (C,), jnp.float32) * sc)

    return dict(
        pref_emb=jax.random.normal(ks[2], (pref_count, H), jnp.float32) * sc,
        qual_emb=jax.random.normal(ks[3], (qual_count, H), jnp.float32) * sc,
        conv_w=conv_w,
        conv_b=conv_b,
        att_review_w=pad_rows(jax.random.normal(ks[4], (C, H), jnp.float32) * sc),
        att_review_b=jax.random.normal(ks[5], (1, H), jnp.float32) * sc,
        att_id_w=jax.random.normal(ks[6], (H, H), jnp.float32) * sc,
        att_layer_w_t=jax.random.normal(ks[7], (1, H), jnp.float32) * sc,
        att_layer_b=jax.random.normal(ks[8], (1, 1), jnp.float32) * sc,
        top_w=pad_rows(jax.random.normal(ks[9], (C, H), jnp.float32) * sc),
        top_b=jax.random.normal(ks[10], (1, H), jnp.float32) * sc,
    )


if __name__ == "__main__":
    # Small shapes consistent with the module (review count 25 is hard-coded in NARRE).
    B, R, L = 2, 25, 8          # batch, review count, max_tip_len
    W, H = 16, 32               # w2v_emb_size, hidden_size
    C, C_PAD = 100, 128         # conv channels (100 in NARRE) + lane padding
    vocab = 64
    user_nums, item_nums = 7, 9

    key = jax.random.PRNGKey(0)
    k = jax.random.split(key, 14)

    params = dict(
        word_emb=jax.random.normal(k[0], (vocab, W), jnp.float32) * 0.1,
        user_layer=init_review_encoder_params(k[1], user_nums + 1, item_nums + 1,
                                              H, W, C, C_PAD),
        item_layer=init_review_encoder_params(k[2], item_nums + 1, user_nums + 1,
                                              H, W, C, C_PAD),
        b_user=jax.random.normal(k[3], (user_nums,), jnp.float32) * 0.1,
        b_item=jax.random.normal(k[4], (item_nums,), jnp.float32) * 0.1,
        pred_w=jax.random.normal(k[5], (H, 1), jnp.float32) * 0.1,
        pred_b=jax.random.normal(k[6], (1, 1), jnp.float32) * 0.1,
    )

    user_review = jax.random.randint(k[7], (B, R, L), 0, vocab)
    item_review = jax.random.randint(k[8], (B, R, L), 0, vocab)
    user_id = jax.random.randint(k[9], (B, 1), 0, user_nums)
    item_id = jax.random.randint(k[10], (B, 1), 0, item_nums)
    item_id_per_review = jax.random.randint(k[11], (B, R), 0, item_nums + 1)
    user_id_per_review = jax.random.randint(k[12], (B, R), 0, user_nums + 1)

    fwd = jax.jit(narre_forward)
    predict, user_tip, item_tip = fwd(params, user_review, user_id,
                                      item_id_per_review, item_review,
                                      item_id, user_id_per_review)
    jax.block_until_ready((predict, user_tip, item_tip))

    # Cross-check against plain-JAX reference
    rp, rut, rit = ref_narre_forward(params, user_review, user_id,
                                     item_id_per_review, item_review,
                                     item_id, user_id_per_review)
    np.testing.assert_allclose(np.asarray(predict), np.asarray(rp),
                               rtol=1e-2, atol=1e-2)
    np.testing.assert_array_equal(np.asarray(user_tip), np.asarray(rut))
    np.testing.assert_array_equal(np.asarray(item_tip), np.asarray(rit))

    print("KERNEL_OK")
</pallas_src>

<mosaic_0001>
module attributes {stable_mosaic.version = 11 : i64} {
  func.func @narre_fused_kernel(%arg0: i32, %arg1: memref<1x25x6x48xf32, #tpu.memory_space<vmem>>, %arg2: memref<1x25x32xf32, #tpu.memory_space<vmem>>, %arg3: memref<1x1x32xf32, #tpu.memory_space<vmem>>, %arg4: memref<48x128xf32, #tpu.memory_space<vmem>>, %arg5: memref<1x128xf32, #tpu.memory_space<vmem>>, %arg6: memref<160x32xf32, #tpu.memory_space<vmem>>, %arg7: memref<1x32xf32, #tpu.memory_space<vmem>>, %arg8: memref<1x32xf32, #tpu.memory_space<vmem>>, %arg9: memref<1x1xf32, #tpu.memory_space<vmem>>, %arg10: memref<128x32xf32, #tpu.memory_space<vmem>>, %arg11: memref<1x32xf32, #tpu.memory_space<vmem>>, %arg12: memref<1x25x6x48xf32, #tpu.memory_space<vmem>>, %arg13: memref<1x25x32xf32, #tpu.memory_space<vmem>>, %arg14: memref<1x1x32xf32, #tpu.memory_space<vmem>>, %arg15: memref<48x128xf32, #tpu.memory_space<vmem>>, %arg16: memref<1x128xf32, #tpu.memory_space<vmem>>, %arg17: memref<160x32xf32, #tpu.memory_space<vmem>>, %arg18: memref<1x32xf32, #tpu.memory_space<vmem>>, %arg19: memref<1x32xf32, #tpu.memory_space<vmem>>, %arg20: memref<1x1xf32, #tpu.memory_space<vmem>>, %arg21: memref<128x32xf32, #tpu.memory_space<vmem>>, %arg22: memref<1x32xf32, #tpu.memory_space<vmem>>, %arg23: memref<1x32xf32, #tpu.memory_space<vmem>>, %arg24: memref<1x1xf32, #tpu.memory_space<vmem>>, %arg25: memref<1x1x1xf32, #tpu.memory_space<vmem>>, %arg26: memref<1x1x1xf32, #tpu.memory_space<vmem>>, %arg27: memref<1x1x1xf32, #tpu.memory_space<vmem>>, %arg28: memref<1x1x1xi32, #tpu.memory_space<vmem>>, %arg29: memref<1x1x1xi32, #tpu.memory_space<vmem>>) attributes {dimension_semantics = [#tpu.dimension_semantics<parallel>], iteration_bounds = array<i64: 2>, scalar_prefetch = 0 : i64, scratch_operands = 0 : i64, tpu.core_type = #tpu.core_type<tc>, window_params = [{transform_indices = @transform_0, window_bounds = array<i64: 1, 25, 6, 48>}, {transform_indices = @transform_1, window_bounds = array<i64: 1, 25, 32>}, {transform_indices = @transform_2, window_bounds = array<i64: 1, 1, 32>}, {pipeline_mode = #tpu.pipeline_mode<synchronous>, transform_indices = @transform_3, window_bounds = array<i64: 48, 128>}, {pipeline_mode = #tpu.pipeline_mode<synchronous>, transform_indices = @transform_4, window_bounds = array<i64: 1, 128>}, {pipeline_mode = #tpu.pipeline_mode<synchronous>, transform_indices = @transform_5, window_bounds = array<i64: 160, 32>}, {pipeline_mode = #tpu.pipeline_mode<synchronous>, transform_indices = @transform_6, window_bounds = array<i64: 1, 32>}, {pipeline_mode = #tpu.pipeline_mode<synchronous>, transform_indices = @transform_7, window_bounds = array<i64: 1, 32>}, {pipeline_mode = #tpu.pipeline_mode<synchronous>, transform_indices = @transform_8, window_bounds = array<i64: 1, 1>}, {pipeline_mode = #tpu.pipeline_mode<synchronous>, transform_indices = @transform_9, window_bounds = array<i64: 128, 32>}, {pipeline_mode = #tpu.pipeline_mode<synchronous>, transform_indices = @transform_10, window_bounds = array<i64: 1, 32>}, {transform_indices = @transform_11, window_bounds = array<i64: 1, 25, 6, 48>}, {transform_indices = @transform_12, window_bounds = array<i64: 1, 25, 32>}, {transform_indices = @transform_13, window_bounds = array<i64: 1, 1, 32>}, {pipeline_mode = #tpu.pipeline_mode<synchronous>, transform_indices = @transform_14, window_bounds = array<i64: 48, 128>}, {pipeline_mode = #tpu.pipeline_mode<synchronous>, transform_indices = @transform_15, window_bounds = array<i64: 1, 128>}, {pipeline_mode = #tpu.pipeline_mode<synchronous>, transform_indices = @transform_16, window_bounds = array<i64: 160, 32>}, {pipeline_mode = #tpu.pipeline_mode<synchronous>, transform_indices = @transform_17, window_bounds = array<i64: 1, 32>}, {pipeline_mode = #tpu.pipeline_mode<synchronous>, transform_indices = @transform_18, window_bounds = array<i64: 1, 32>}, {pipeline_mode = #tpu.pipeline_mode<synchronous>, transform_indices = @transform_19, window_bounds = array<i64: 1, 1>}, {pipeline_mode = #tpu.pipeline_mode<synchronous>, transform_indices = @transform_20, window_bounds = array<i64: 128, 32>}, {pipeline_mode = #tpu.pipeline_mode<synchronous>, transform_indices = @transform_21, window_bounds = array<i64: 1, 32>}, {pipeline_mode = #tpu.pipeline_mode<synchronous>, transform_indices = @transform_22, window_bounds = array<i64: 1, 32>}, {pipeline_mode = #tpu.pipeline_mode<synchronous>, transform_indices = @transform_23, window_bounds = array<i64: 1, 1>}, {transform_indices = @transform_24, window_bounds = array<i64: 1, 1, 1>}, {transform_indices = @transform_25, window_bounds = array<i64: 1, 1, 1>}, {transform_indices = @transform_26, window_bounds = array<i64: 1, 1, 1>}, {transform_indices = @transform_27, window_bounds = array<i64: 1, 1, 1>}, {transform_indices = @transform_28, window_bounds = array<i64: 1, 1, 1>}]} {
    %c0 = arith.constant 0 : index
    %c0_0 = arith.constant 0 : index
    %c0_1 = arith.constant 0 : index
    %c0_2 = arith.constant 0 : index
    %0 = vector.load %arg1[%c0, %c0_0, %c0_1, %c0_2] : memref<1x25x6x48xf32, #tpu.memory_space<vmem>>, vector<1x25x6x48xf32>
    %1 = vector.shape_cast %0 : vector<1x25x6x48xf32> to vector<25x6x48xf32>
    %c0_3 = arith.constant 0 : index
    %c0_4 = arith.constant 0 : index
    %2 = vector.load %arg4[%c0_3, %c0_4] : memref<48x128xf32, #tpu.memory_space<vmem>>, vector<48x128xf32>
    %cst = arith.constant dense<0.000000e+00> : vector<25x6x128xf32>
    %3 = tpu.matmul %1, %2, %cst {dimension_numbers = #tpu.dot_dimension_numbers<[2], [0], [0, 1], [1], [0, 0, 0, 1, 1, 1], [], []>} : vector<25x6x48xf32>, vector<48x128xf32>, vector<25x6x128xf32> -> vector<25x6x128xf32>
    %c0_5 = arith.constant 0 : index
    %c0_6 = arith.constant 0 : index
    %4 = vector.load %arg5[%c0_5, %c0_6] : memref<1x128xf32, #tpu.memory_space<vmem>>, vector<1x128xf32>
    %5 = vector.shape_cast %4 : vector<1x128xf32> to vector<1x1x128xf32>
    %6 = vector.broadcast %5 : vector<1x1x128xf32> to vector<25x6x128xf32>
    %7 = arith.addf %3, %6 : vector<25x6x128xf32>
    %cst_7 = arith.constant 0.000000e+00 : f32
    %8 = vector.broadcast %cst_7 : f32 to vector<25x6x128xf32>
    %9 = arith.maximumf %7, %8 : vector<25x6x128xf32>
    %cst_8 = arith.constant dense<0xFF800000> : vector<25x128xf32>
    %10 = vector.multi_reduction <maximumf>, %9, %cst_8 [1] : vector<25x6x128xf32> to vector<25x128xf32>
    %c0_9 = arith.constant 0 : index
    %c0_10 = arith.constant 0 : index
    %c0_11 = arith.constant 0 : index
    %11 = vector.load %arg2[%c0_9, %c0_10, %c0_11] : memref<1x25x32xf32, #tpu.memory_space<vmem>>, vector<1x25x32xf32>
    %12 = vector.shape_cast %11 : vector<1x25x32xf32> to vector<25x32xf32>
    %13 = tpu.concatenate %10, %12 in 1 : vector<25x128xf32>, vector<25x32xf32> -> vector<25x160xf32>
    %c0_12 = arith.constant 0 : index
    %c0_13 = arith.constant 0 : index
    %14 = vector.load %arg6[%c0_12, %c0_13] : memref<160x32xf32, #tpu.memory_space<vmem>>, vector<160x32xf32>
    %cst_14 = arith.constant dense<0.000000e+00> : vector<25x32xf32>
    %15 = tpu.matmul %13, %14, %cst_14 {dimension_numbers = #tpu.dot_dimension_numbers<[1], [0], [0], [1], [0, 0, 1, 1], [], []>} : vector<25x160xf32>, vector<160x32xf32>, vector<25x32xf32> -> vector<25x32xf32>
    %c0_15 = arith.constant 0 : index
    %c0_16 = arith.constant 0 : index
    %16 = vector.load %arg7[%c0_15, %c0_16] : memref<1x32xf32, #tpu.memory_space<vmem>>, vector<1x32xf32>
    %17 = vector.broadcast %16 : vector<1x32xf32> to vector<25x32xf32>
    %18 = arith.addf %15, %17 : vector<25x32xf32>
    %cst_17 = arith.constant 0.000000e+00 : f32
    %19 = vector.broadcast %cst_17 : f32 to vector<25x32xf32>
    %20 = arith.maximumf %18, %19 : vector<25x32xf32>
    %c0_18 = arith.constant 0 : index
    %c0_19 = arith.constant 0 : index
    %21 = vector.load %arg8[%c0_18, %c0_19] : memref<1x32xf32, #tpu.memory_space<vmem>>, vector<1x32xf32>
    %22 = vector.broadcast %21 : vector<1x32xf32> to vector<25x32xf32>
    %23 = arith.mulf %20, %22 : vector<25x32xf32>
    %cst_20 = arith.constant dense<0.000000e+00> : vector<25xf32>
    %24 = vector.multi_reduction <add>, %23, %cst_20 [1] : vector<25x32xf32> to vector<25xf32>
    %25 = vector.shape_cast %24 : vector<25xf32> to vector<25x1xf32>
    %c0_21 = arith.constant 0 : index
    %c0_22 = arith.constant 0 : index
    %26 = vector.load %arg9[%c0_21, %c0_22] : memref<1x1xf32, #tpu.memory_space<vmem>>, vector<1x1xf32>
    %27 = vector.broadcast %26 : vector<1x1xf32> to vector<25x1xf32>
    %28 = arith.addf %25, %27 : vector<25x1xf32>
    %cst_23 = arith.constant dense<0xFF800000> : vector<1xf32>
    %29 = vector.multi_reduction <maximumf>, %28, %cst_23 [0] : vector<25x1xf32> to vector<1xf32>
    %30 = vector.shape_cast %29 : vector<1xf32> to vector<1x1xf32>
    %31 = vector.broadcast %30 : vector<1x1xf32> to vector<25x1xf32>
    %32 = arith.subf %28, %31 : vector<25x1xf32>
    %33 = math.exp %32 : vector<25x1xf32>
    %cst_24 = arith.constant dense<0.000000e+00> : vector<1xf32>
    %34 = vector.multi_reduction <add>, %33, %cst_24 [0] : vector<25x1xf32> to vector<1xf32>
    %35 = vector.shape_cast %34 : vector<1xf32> to vector<1x1xf32>
    %36 = tpu.reciprocal %35 {approx = true} : vector<1x1xf32> -> vector<1x1xf32>
    %37 = vector.broadcast %36 : vector<1x1xf32> to vector<25x1xf32>
    %38 = arith.mulf %33, %37 : vector<25x1xf32>
    %39 = vector.broadcast %38 : vector<25x1xf32> to vector<25x128xf32>
    %40 = arith.mulf %39, %10 : vector<25x128xf32>
    %cst_25 = arith.constant dense<0.000000e+00> : vector<128xf32>
    %41 = vector.multi_reduction <add>, %40, %cst_25 [0] : vector<25x128xf32> to vector<128xf32>
    %42 = vector.shape_cast %41 : vector<128xf32> to vector<1x128xf32>
    %c0_26 = arith.constant 0 : index
    %c0_27 = arith.constant 0 : index
    %43 = vector.load %arg10[%c0_26, %c0_27] : memref<128x32xf32, #tpu.memory_space<vmem>>, vector<128x32xf32>
    %cst_28 = arith.constant dense<0.000000e+00> : vector<1x32xf32>
    %44 = tpu.matmul %42, %43, %cst_28 {dimension_numbers = #tpu.dot_dimension_numbers<[1], [0], [0], [1], [0, 0, 1, 1], [], []>} : vector<1x128xf32>, vector<128x32xf32>, vector<1x32xf32> -> vector<1x32xf32>
    %c0_29 = arith.constant 0 : index
    %c0_30 = arith.constant 0 : index
    %45 = vector.load %arg11[%c0_29, %c0_30] : memref<1x32xf32, #tpu.memory_space<vmem>>, vector<1x32xf32>
    %46 = arith.addf %44, %45 : vector<1x32xf32>
    %c0_31 = arith.constant 0 : index
    %c0_32 = arith.constant 0 : index
    %c0_33 = arith.constant 0 : index
    %47 = vector.load %arg3[%c0_31, %c0_32, %c0_33] : memref<1x1x32xf32, #tpu.memory_space<vmem>>, vector<1x1x32xf32>
    %48 = vector.shape_cast %47 : vector<1x1x32xf32> to vector<1x32xf32>
    %49 = arith.addf %46, %48 : vector<1x32xf32>
    %50 = tpu.iota {dimensions = array<i32: 0>} : vector<25x1xi32>
    %51 = vector.broadcast %30 : vector<1x1xf32> to vector<25x1xf32>
    %52 = arith.cmpf oge, %28, %51 : vector<25x1xf32>
    %c25_i32 = arith.constant 25 : i32
    %53 = vector.broadcast %c25_i32 : i32 to vector<25x1xi32>
    %54 = arith.select %52, %50, %53 : vector<25x1xi1>, vector<25x1xi32>
    %cst_34 = arith.constant dense<2147483647> : vector<1xi32>
    %55 = vector.multi_reduction <minsi>, %54, %cst_34 [0] : vector<25x1xi32> to vector<1xi32>
    %56 = vector.shape_cast %55 : vector<1xi32> to vector<1x1xi32>
    %c0_35 = arith.constant 0 : index
    %c0_36 = arith.constant 0 : index
    %c0_37 = arith.constant 0 : index
    %c0_38 = arith.constant 0 : index
    %57 = vector.load %arg12[%c0_35, %c0_36, %c0_37, %c0_38] : memref<1x25x6x48xf32, #tpu.memory_space<vmem>>, vector<1x25x6x48xf32>
    %58 = vector.shape_cast %57 : vector<1x25x6x48xf32> to vector<25x6x48xf32>
    %c0_39 = arith.constant 0 : index
    %c0_40 = arith.constant 0 : index
    %59 = vector.load %arg15[%c0_39, %c0_40] : memref<48x128xf32, #tpu.memory_space<vmem>>, vector<48x128xf32>
    %cst_41 = arith.constant dense<0.000000e+00> : vector<25x6x128xf32>
    %60 = tpu.matmul %58, %59, %cst_41 {dimension_numbers = #tpu.dot_dimension_numbers<[2], [0], [0, 1], [1], [0, 0, 0, 1, 1, 1], [], []>} : vector<25x6x48xf32>, vector<48x128xf32>, vector<25x6x128xf32> -> vector<25x6x128xf32>
    %c0_42 = arith.constant 0 : index
    %c0_43 = arith.constant 0 : index
    %61 = vector.load %arg16[%c0_42, %c0_43] : memref<1x128xf32, #tpu.memory_space<vmem>>, vector<1x128xf32>
    %62 = vector.shape_cast %61 : vector<1x128xf32> to vector<1x1x128xf32>
    %63 = vector.broadcast %62 : vector<1x1x128xf32> to vector<25x6x128xf32>
    %64 = arith.addf %60, %63 : vector<25x6x128xf32>
    %cst_44 = arith.constant 0.000000e+00 : f32
    %65 = vector.broadcast %cst_44 : f32 to vector<25x6x128xf32>
    %66 = arith.maximumf %64, %65 : vector<25x6x128xf32>
    %cst_45 = arith.constant dense<0xFF800000> : vector<25x128xf32>
    %67 = vector.multi_reduction <maximumf>, %66, %cst_45 [1] : vector<25x6x128xf32> to vector<25x128xf32>
    %c0_46 = arith.constant 0 : index
    %c0_47 = arith.constant 0 : index
    %c0_48 = arith.constant 0 : index
    %68 = vector.load %arg13[%c0_46, %c0_47, %c0_48] : memref<1x25x32xf32, #tpu.memory_space<vmem>>, vector<1x25x32xf32>
    %69 = vector.shape_cast %68 : vector<1x25x32xf32> to vector<25x32xf32>
    %70 = tpu.concatenate %67, %69 in 1 : vector<25x128xf32>, vector<25x32xf32> -> vector<25x160xf32>
    %c0_49 = arith.constant 0 : index
    %c0_50 = arith.constant 0 : index
    %71 = vector.load %arg17[%c0_49, %c0_50] : memref<160x32xf32, #tpu.memory_space<vmem>>, vector<160x32xf32>
    %cst_51 = arith.constant dense<0.000000e+00> : vector<25x32xf32>
    %72 = tpu.matmul %70, %71, %cst_51 {dimension_numbers = #tpu.dot_dimension_numbers<[1], [0], [0], [1], [0, 0, 1, 1], [], []>} : vector<25x160xf32>, vector<160x32xf32>, vector<25x32xf32> -> vector<25x32xf32>
    %c0_52 = arith.constant 0 : index
    %c0_53 = arith.constant 0 : index
    %73 = vector.load %arg18[%c0_52, %c0_53] : memref<1x32xf32, #tpu.memory_space<vmem>>, vector<1x32xf32>
    %74 = vector.broadcast %73 : vector<1x32xf32> to vector<25x32xf32>
    %75 = arith.addf %72, %74 : vector<25x32xf32>
    %cst_54 = arith.constant 0.000000e+00 : f32
    %76 = vector.broadcast %cst_54 : f32 to vector<25x32xf32>
    %77 = arith.maximumf %75, %76 : vector<25x32xf32>
    %c0_55 = arith.constant 0 : index
    %c0_56 = arith.constant 0 : index
    %78 = vector.load %arg19[%c0_55, %c0_56] : memref<1x32xf32, #tpu.memory_space<vmem>>, vector<1x32xf32>
    %79 = vector.broadcast %78 : vector<1x32xf32> to vector<25x32xf32>
    %80 = arith.mulf %77, %79 : vector<25x32xf32>
    %cst_57 = arith.constant dense<0.000000e+00> : vector<25xf32>
    %81 = vector.multi_reduction <add>, %80, %cst_57 [1] : vector<25x32xf32> to vector<25xf32>
    %82 = vector.shape_cast %81 : vector<25xf32> to vector<25x1xf32>
    %c0_58 = arith.constant 0 : index
    %c0_59 = arith.constant 0 : index
    %83 = vector.load %arg20[%c0_58, %c0_59] : memref<1x1xf32, #tpu.memory_space<vmem>>, vector<1x1xf32>
    %84 = vector.broadcast %83 : vector<1x1xf32> to vector<25x1xf32>
    %85 = arith.addf %82, %84 : vector<25x1xf32>
    %cst_60 = arith.constant dense<0xFF800000> : vector<1xf32>
    %86 = vector.multi_reduction <maximumf>, %85, %cst_60 [0] : vector<25x1xf32> to vector<1xf32>
    %87 = vector.shape_cast %86 : vector<1xf32> to vector<1x1xf32>
    %88 = vector.broadcast %87 : vector<1x1xf32> to vector<25x1xf32>
    %89 = arith.subf %85, %88 : vector<25x1xf32>
    %90 = math.exp %89 : vector<25x1xf32>
    %cst_61 = arith.constant dense<0.000000e+00> : vector<1xf32>
    %91 = vector.multi_reduction <add>, %90, %cst_61 [0] : vector<25x1xf32> to vector<1xf32>
    %92 = vector.shape_cast %91 : vector<1xf32> to vector<1x1xf32>
    %93 = tpu.reciprocal %92 {approx = true} : vector<1x1xf32> -> vector<1x1xf32>
    %94 = vector.broadcast %93 : vector<1x1xf32> to vector<25x1xf32>
    %95 = arith.mulf %90, %94 : vector<25x1xf32>
    %96 = vector.broadcast %95 : vector<25x1xf32> to vector<25x128xf32>
    %97 = arith.mulf %96, %67 : vector<25x128xf32>
    %cst_62 = arith.constant dense<0.000000e+00> : vector<128xf32>
    %98 = vector.multi_reduction <add>, %97, %cst_62 [0] : vector<25x128xf32> to vector<128xf32>
    %99 = vector.shape_cast %98 : vector<128xf32> to vector<1x128xf32>
    %c0_63 = arith.constant 0 : index
    %c0_64 = arith.constant 0 : index
    %100 = vector.load %arg21[%c0_63, %c0_64] : memref<128x32xf32, #tpu.memory_space<vmem>>, vector<128x32xf32>
    %cst_65 = arith.constant dense<0.000000e+00> : vector<1x32xf32>
    %101 = tpu.matmul %99, %100, %cst_65 {dimension_numbers = #tpu.dot_dimension_numbers<[1], [0], [0], [1], [0, 0, 1, 1], [], []>} : vector<1x128xf32>, vector<128x32xf32>, vector<1x32xf32> -> vector<1x32xf32>
    %c0_66 = arith.constant 0 : index
    %c0_67 = arith.constant 0 : index
    %102 = vector.load %arg22[%c0_66, %c0_67] : memref<1x32xf32, #tpu.memory_space<vmem>>, vector<1x32xf32>
    %103 = arith.addf %101, %102 : vector<1x32xf32>
    %c0_68 = arith.constant 0 : index
    %c0_69 = arith.constant 0 : index
    %c0_70 = arith.constant 0 : index
    %104 = vector.load %arg14[%c0_68, %c0_69, %c0_70] : memref<1x1x32xf32, #tpu.memory_space<vmem>>, vector<1x1x32xf32>
    %105 = vector.shape_cast %104 : vector<1x1x32xf32> to vector<1x32xf32>
    %106 = arith.addf %103, %105 : vector<1x32xf32>
    %107 = tpu.iota {dimensions = array<i32: 0>} : vector<25x1xi32>
    %108 = vector.broadcast %87 : vector<1x1xf32> to vector<25x1xf32>
    %109 = arith.cmpf oge, %85, %108 : vector<25x1xf32>
    %c25_i32_71 = arith.constant 25 : i32
    %110 = vector.broadcast %c25_i32_71 : i32 to vector<25x1xi32>
    %111 = arith.select %109, %107, %110 : vector<25x1xi1>, vector<25x1xi32>
    %cst_72 = arith.constant dense<2147483647> : vector<1xi32>
    %112 = vector.multi_reduction <minsi>, %111, %cst_72 [0] : vector<25x1xi32> to vector<1xi32>
    %113 = vector.shape_cast %112 : vector<1xi32> to vector<1x1xi32>
    %114 = arith.mulf %49, %106 : vector<1x32xf32>
    %c0_73 = arith.constant 0 : index
    %c0_74 = arith.constant 0 : index
    %115 = vector.load %arg23[%c0_73, %c0_74] : memref<1x32xf32, #tpu.memory_space<vmem>>, vector<1x32xf32>
    %116 = arith.mulf %114, %115 : vector<1x32xf32>
    %cst_75 = arith.constant dense<0.000000e+00> : vector<1xf32>
    %117 = vector.multi_reduction <add>, %116, %cst_75 [1] : vector<1x32xf32> to vector<1xf32>
    %118 = vector.shape_cast %117 : vector<1xf32> to vector<1x1xf32>
    %c0_76 = arith.constant 0 : index
    %c0_77 = arith.constant 0 : index
    %119 = vector.load %arg24[%c0_76, %c0_77] : memref<1x1xf32, #tpu.memory_space<vmem>>, vector<1x1xf32>
    %120 = arith.addf %118, %119 : vector<1x1xf32>
    %c0_78 = arith.constant 0 : index
    %c0_79 = arith.constant 0 : index
    %c0_80 = arith.constant 0 : index
    %121 = vector.load %arg25[%c0_78, %c0_79, %c0_80] : memref<1x1x1xf32, #tpu.memory_space<vmem>>, vector<1x1x1xf32>
    %122 = vector.shape_cast %121 : vector<1x1x1xf32> to vector<1x1xf32>
    %123 = arith.addf %120, %122 : vector<1x1xf32>
    %c0_81 = arith.constant 0 : index
    %c0_82 = arith.constant 0 : index
    %c0_83 = arith.constant 0 : index
    %124 = vector.load %arg26[%c0_81, %c0_82, %c0_83] : memref<1x1x1xf32, #tpu.memory_space<vmem>>, vector<1x1x1xf32>
    %125 = vector.shape_cast %124 : vector<1x1x1xf32> to vector<1x1xf32>
    %126 = arith.addf %123, %125 : vector<1x1xf32>
    %c0_84 = arith.constant 0 : index
    %c0_85 = arith.constant 0 : index
    %c0_86 = arith.constant 0 : index
    %127 = vector.load %arg27[%c0_84, %c0_85, %c0_86] : memref<1x1x1xf32, #tpu.memory_space<vmem>>, vector<1x1x1xf32>
    %128 = vector.shape_cast %127 : vector<1x1x1xf32> to vector<1x1xf32>
    %129 = vector.shape_cast %126 : vector<1x1xf32> to vector<1x1x1xf32>
    tpu.vector_store %arg27[%c0_84, %c0_85, %c0_86], %129 {strides = array<i32>} : memref<1x1x1xf32, #tpu.memory_space<vmem>>, vector<1x1x1xf32>,
    %c0_87 = arith.constant 0 : index
    %c0_88 = arith.constant 0 : index
    %c0_89 = arith.constant 0 : index
    %130 = vector.load %arg28[%c0_87, %c0_88, %c0_89] : memref<1x1x1xi32, #tpu.memory_space<vmem>>, vector<1x1x1xi32>
    %131 = vector.shape_cast %130 : vector<1x1x1xi32> to vector<1x1xi32>
    %132 = vector.shape_cast %56 : vector<1x1xi32> to vector<1x1x1xi32>
    tpu.vector_store %arg28[%c0_87, %c0_88, %c0_89], %132 {strides = array<i32>} : memref<1x1x1xi32, #tpu.memory_space<vmem>>, vector<1x1x1xi32>,
    %c0_90 = arith.constant 0 : index
    %c0_91 = arith.constant 0 : index
    %c0_92 = arith.constant 0 : index
    %133 = vector.load %arg29[%c0_90, %c0_91, %c0_92] : memref<1x1x1xi32, #tpu.memory_space<vmem>>, vector<1x1x1xi32>
    %134 = vector.shape_cast %133 : vector<1x1x1xi32> to vector<1x1xi32>
    %135 = vector.shape_cast %113 : vector<1x1xi32> to vector<1x1x1xi32>
    tpu.vector_store %arg29[%c0_90, %c0_91, %c0_92], %135 {strides = array<i32>} : memref<1x1x1xi32, #tpu.memory_space<vmem>>, vector<1x1x1xi32>,
    return
  }
  func.func @transform_0(%arg0: i32) -> (i32, i32, i32, i32) {
    %c0_i32 = arith.constant 0 : i32
    %c0_i32_0 = arith.constant 0 : i32
    %c0_i32_1 = arith.constant 0 : i32
    %c0_i32_2 = arith.constant 0 : i32
    return %arg0, %c0_i32, %c0_i32_0, %c0_i32_1 : i32, i32, i32, i32
  }
  func.func @transform_1(%arg0: i32) -> (i32, i32, i32) {
    %c0_i32 = arith.constant 0 : i32
    %c0_i32_0 = arith.constant 0 : i32
    %c0_i32_1 = arith.constant 0 : i32
    return %arg0, %c0_i32, %c0_i32_0 : i32, i32, i32
  }
  func.func @transform_2(%arg0: i32) -> (i32, i32, i32) {
    %c0_i32 = arith.constant 0 : i32
    %c0_i32_0 = arith.constant 0 : i32
    %c0_i32_1 = arith.constant 0 : i32
    return %arg0, %c0_i32, %c0_i32_0 : i32, i32, i32
  }
  func.func @transform_3(%arg0: i32) -> (i32, i32) {
    %c0_i32 = arith.constant 0 : i32
    %c0_i32_0 = arith.constant 0 : i32
    %c0_i32_1 = arith.constant 0 : i32
    return %c0_i32, %c0_i32_0 : i32, i32
  }
  func.func @transform_4(%arg0: i32) -> (i32, i32) {
    %c0_i32 = arith.constant 0 : i32
    %c0_i32_0 = arith.constant 0 : i32
    %c0_i32_1 = arith.constant 0 : i32
    return %c0_i32, %c0_i32_0 : i32, i32
  }
  func.func @transform_5(%arg0: i32) -> (i32, i32) {
    %c0_i32 = arith.constant 0 : i32
    %c0_i32_0 = arith.constant 0 : i32
    %c0_i32_1 = arith.constant 0 : i32
    return %c0_i32, %c0_i32_0 : i32, i32
  }
  func.func @transform_6(%arg0: i32) -> (i32, i32) {
    %c0_i32 = arith.constant 0 : i32
    %c0_i32_0 = arith.constant 0 : i32
    %c0_i32_1 = arith.constant 0 : i32
    return %c0_i32, %c0_i32_0 : i32, i32
  }
  func.func @transform_7(%arg0: i32) -> (i32, i32) {
    %c0_i32 = arith.constant 0 : i32
    %c0_i32_0 = arith.constant 0 : i32
    %c0_i32_1 = arith.constant 0 : i32
    return %c0_i32, %c0_i32_0 : i32, i32
  }
  func.func @transform_8(%arg0: i32) -> (i32, i32) {
    %c0_i32 = arith.constant 0 : i32
    %c0_i32_0 = arith.constant 0 : i32
    %c0_i32_1 = arith.constant 0 : i32
    return %c0_i32, %c0_i32_0 : i32, i32
  }
  func.func @transform_9(%arg0: i32) -> (i32, i32) {
    %c0_i32 = arith.constant 0 : i32
    %c0_i32_0 = arith.constant 0 : i32
    %c0_i32_1 = arith.constant 0 : i32
    return %c0_i32, %c0_i32_0 : i32, i32
  }
  func.func @transform_10(%arg0: i32) -> (i32, i32) {
    %c0_i32 = arith.constant 0 : i32
    %c0_i32_0 = arith.constant 0 : i32
    %c0_i32_1 = arith.constant 0 : i32
    return %c0_i32, %c0_i32_0 : i32, i32
  }
  func.func @transform_11(%arg0: i32) -> (i32, i32, i32, i32) {
    %c0_i32 = arith.constant 0 : i32
    %c0_i32_0 = arith.constant 0 : i32
    %c0_i32_1 = arith.constant 0 : i32
    %c0_i32_2 = arith.constant 0 : i32
    return %arg0, %c0_i32, %c0_i32_0, %c0_i32_1 : i32, i32, i32, i32
  }
  func.func @transform_12(%arg0: i32) -> (i32, i32, i32) {
    %c0_i32 = arith.constant 0 : i32
    %c0_i32_0 = arith.constant 0 : i32
    %c0_i32_1 = arith.constant 0 : i32
    return %arg0, %c0_i32, %c0_i32_0 : i32, i32, i32
  }
  func.func @transform_13(%arg0: i32) -> (i32, i32, i32) {
    %c0_i32 = arith.constant 0 : i32
    %c0_i32_0 = arith.constant 0 : i32
    %c0_i32_1 = arith.constant 0 : i32
    return %arg0, %c0_i32, %c0_i32_0 : i32, i32, i32
  }
  func.func @transform_14(%arg0: i32) -> (i32, i32) {
    %c0_i32 = arith.constant 0 : i32
    %c0_i32_0 = arith.constant 0 : i32
    %c0_i32_1 = arith.constant 0 : i32
    return %c0_i32, %c0_i32_0 : i32, i32
  }
  func.func @transform_15(%arg0: i32) -> (i32, i32) {
    %c0_i32 = arith.constant 0 : i32
    %c0_i32_0 = arith.constant 0 : i32
    %c0_i32_1 = arith.constant 0 : i32
    return %c0_i32, %c0_i32_0 : i32, i32
  }
  func.func @transform_16(%arg0: i32) -> (i32, i32) {
    %c0_i32 = arith.constant 0 : i32
    %c0_i32_0 = arith.constant 0 : i32
    %c0_i32_1 = arith.constant 0 : i32
    return %c0_i32, %c0_i32_0 : i32, i32
  }
  func.func @transform_17(%arg0: i32) -> (i32, i32) {
    %c0_i32 = arith.constant 0 : i32
    %c0_i32_0 = arith.constant 0 : i32
    %c0_i32_1 = arith.constant 0 : i32
    return %c0_i32, %c0_i32_0 : i32, i32
  }
  func.func @transform_18(%arg0: i32) -> (i32, i32) {
    %c0_i32 = arith.constant 0 : i32
    %c0_i32_0 = arith.constant 0 : i32
    %c0_i32_1 = arith.constant 0 : i32
    return %c0_i32, %c0_i32_0 : i32, i32
  }
  func.func @transform_19(%arg0: i32) -> (i32, i32) {
    %c0_i32 = arith.constant 0 : i32
    %c0_i32_0 = arith.constant 0 : i32
    %c0_i32_1 = arith.constant 0 : i32
    return %c0_i32, %c0_i32_0 : i32, i32
  }
  func.func @transform_20(%arg0: i32) -> (i32, i32) {
    %c0_i32 = arith.constant 0 : i32
    %c0_i32_0 = arith.constant 0 : i32
    %c0_i32_1 = arith.constant 0 : i32
    return %c0_i32, %c0_i32_0 : i32, i32
  }
  func.func @transform_21(%arg0: i32) -> (i32, i32) {
    %c0_i32 = arith.constant 0 : i32
    %c0_i32_0 = arith.constant 0 : i32
    %c0_i32_1 = arith.constant 0 : i32
    return %c0_i32, %c0_i32_0 : i32, i32
  }
  func.func @transform_22(%arg0: i32) -> (i32, i32) {
    %c0_i32 = arith.constant 0 : i32
    %c0_i32_0 = arith.constant 0 : i32
    %c0_i32_1 = arith.constant 0 : i32
    return %c0_i32, %c0_i32_0 : i32, i32
  }
  func.func @transform_23(%arg0: i32) -> (i32, i32) {
    %c0_i32 = arith.constant 0 : i32
    %c0_i32_0 = arith.constant 0 : i32
    %c0_i32_1 = arith.constant 0 : i32
    return %c0_i32, %c0_i32_0 : i32, i32
  }
  func.func @transform_24(%arg0: i32) -> (i32, i32, i32) {
    %c0_i32 = arith.constant 0 : i32
    %c0_i32_0 = arith.constant 0 : i32
    %c0_i32_1 = arith.constant 0 : i32
    return %arg0, %c0_i32, %c0_i32_0 : i32, i32, i32
  }
  func.func @transform_25(%arg0: i32) -> (i32, i32, i32) {
    %c0_i32 = arith.constant 0 : i32
    %c0_i32_0 = arith.constant 0 : i32
    %c0_i32_1 = arith.constant 0 : i32
    return %arg0, %c0_i32, %c0_i32_0 : i32, i32, i32
  }
  func.func @transform_26(%arg0: i32) -> (i32, i32, i32) {
    %c0_i32 = arith.constant 0 : i32
    %c0_i32_0 = arith.constant 0 : i32
    %c0_i32_1 = arith.constant 0 : i32
    return %arg0, %c0_i32, %c0_i32_0 : i32, i32, i32
  }
  func.func @transform_27(%arg0: i32) -> (i32, i32, i32) {
    %c0_i32 = arith.constant 0 : i32
    %c0_i32_0 = arith.constant 0 : i32
    %c0_i32_1 = arith.constant 0 : i32
    return %arg0, %c0_i32, %c0_i32_0 : i32, i32, i32
  }
  func.func @transform_28(%arg0: i32) -> (i32, i32, i32) {
    %c0_i32 = arith.constant 0 : i32
    %c0_i32_0 = arith.constant 0 : i32
    %c0_i32_1 = arith.constant 0 : i32
    return %arg0, %c0_i32, %c0_i32_0 : i32, i32, i32
  }
}

</mosaic_0001>

<llo_original>
// kernel: narre_forward.1
$region0: #{narre_forward.1}
  #allocation0 [shape = 'u32[]', space=smem, size = 0x4, offset = 0x4, fixed_abs, tag = 'smem constant byte address 0x4 - core index']
  #allocation1 [shape = 'u32[144,128]{1,0:T(1,128)}', space=vmem, size = 0x12000, scoped, tag = 'internal scratch']
  #allocation2 [shape = 'f32[1,1]{1,0:T(1,128)S(1)}', space=vmem, size = 0x200, scoped, tag = 'scoped memory for narre_forward.1']
  #allocation3 [shape = 'f32[1,1]{1,0:T(1,128)S(1)}', space=vmem, size = 0x200, scoped, tag = 'scoped memory for narre_forward.1']
  #allocation4 [shape = 'f32[1,1]{1,0:T(1,128)S(1)}', space=vmem, size = 0x200, scoped, tag = 'scoped memory for narre_forward.1']
  %s0 = inlined_call_operand.vmem [shape: f32[2,25,6,48], index: 0, kind: input, shape index: {}]
  %s1 = inlined_call_operand.vmem [shape: f32[2,25,32], index: 1, kind: input, shape index: {}]
  %s2 = inlined_call_operand.vmem [shape: f32[2,1,32], index: 2, kind: input, shape index: {}]
  %s3 = inlined_call_operand.vmem [shape: f32[48,128], index: 3, kind: input, shape index: {}]
  %s4 = inlined_call_operand.vmem [shape: f32[1,128], index: 4, kind: input, shape index: {}]
  %s5 = inlined_call_operand.vmem [shape: f32[160,32], index: 5, kind: input, shape index: {}]
  %s6 = inlined_call_operand.vmem [shape: f32[1,32], index: 6, kind: input, shape index: {}]
  %s7 = inlined_call_operand.vmem [shape: f32[1,32], index: 7, kind: input, shape index: {}]
  %s8 = inlined_call_operand.<no memory space> [shape: f32[1,1], index: 8, kind: input, shape index: {}]
  %s9 = inlined_call_operand.vmem [shape: f32[128,32], index: 9, kind: input, shape index: {}]
  %s10 = inlined_call_operand.vmem [shape: f32[1,32], index: 10, kind: input, shape index: {}]
  %s11 = inlined_call_operand.vmem [shape: f32[2,25,6,48], index: 11, kind: input, shape index: {}]
  %s12 = inlined_call_operand.vmem [shape: f32[2,25,32], index: 12, kind: input, shape index: {}]
  %s13 = inlined_call_operand.vmem [shape: f32[2,1,32], index: 13, kind: input, shape index: {}]
  %s14 = inlined_call_operand.vmem [shape: f32[48,128], index: 14, kind: input, shape index: {}]
  %s15 = inlined_call_operand.vmem [shape: f32[1,128], index: 15, kind: input, shape index: {}]
  %s16 = inlined_call_operand.vmem [shape: f32[160,32], index: 16, kind: input, shape index: {}]
  %s17 = inlined_call_operand.vmem [shape: f32[1,32], index: 17, kind: input, shape index: {}]
  %s18 = inlined_call_operand.vmem [shape: f32[1,32], index: 18, kind: input, shape index: {}]
  %s19 = inlined_call_operand.<no memory space> [shape: f32[1,1], index: 19, kind: input, shape index: {}]
  %s20 = inlined_call_operand.vmem [shape: f32[128,32], index: 20, kind: input, shape index: {}]
  %s21 = inlined_call_operand.vmem [shape: f32[1,32], index: 21, kind: input, shape index: {}]
  %s22 = inlined_call_operand.vmem [shape: f32[1,32], index: 22, kind: input, shape index: {}]
  %s23 = inlined_call_operand.<no memory space> [shape: f32[1,1], index: 23, kind: input, shape index: {}]
  %s24 = inlined_call_operand.vmem [shape: f32[2,1,1], index: 24, kind: input, shape index: {}]
  %s25 = inlined_call_operand.vmem [shape: f32[2,1,1], index: 25, kind: input, shape index: {}]
  %s26 = inlined_call_operand.vmem [shape: f32[2,1,1], index: 26, kind: output, shape index: {0}]
  %s27 = inlined_call_operand.vmem [shape: s32[2,1,1], index: 27, kind: output, shape index: {1}]
  %s28 = inlined_call_operand.vmem [shape: s32[2,1,1], index: 28, kind: output, shape index: {2}]
  %29 = xla_tuple %s26, %s27, %s28
  %s30 = sld [smem:[#allocation0]]
  $region153: #{narre_forward.1} parent=0
    _
  %s32 = ssub.s32 1, %s30
  %s33 = scalar_select 0, %s32, %s30
  %v34 = vstv %s8
  %35 = vst [vmem:[#allocation2] sm:$0x1] %v34
  %v36 = vstv %s19
  %37 = vst [vmem:[#allocation3] sm:$0x1] %v36
  %v38 = vstv %s23
  %39 = vst [vmem:[#allocation4] sm:$0x1] %v38
  loop: start=0, step=1, limit=4
  $region2: #{narre_forward.1} parent=0 // loop_pre_header
    _
  $region3: #{narre_forward.1} parent=0 // loop_header
    %s41 = sphi 0, %s45
    %p42 = scmp.ge.s32.totalorder %s41, 4
    %s51 = sphi 0, %s53
    %s54 = sphi 0, %s51
    %s55 = sphi 0, %s54
    %s71 = sphi 0, %s55
    %s77 = sphi 0, %s79
    %s80 = sphi 0, %s77
    %s81 = sphi 0, %s80
    %s97 = sphi 0, %s81
    %s103 = sphi 0, %s105
    %s106 = sphi 0, %s103
    %s107 = sphi 0, %s106
    %s123 = sphi 0, %s107
    %s127 = sphi 0, %s127
    %s129 = sphi 0, %s127
    %s130 = sphi 0, %s129
    %s144 = sphi 0, %s130
    %s148 = sphi 0, %s148
    %s150 = sphi 0, %s148
    %s151 = sphi 0, %s150
    %s165 = sphi 0, %s151
    %s169 = sphi 0, %s169
    %s171 = sphi 0, %s169
    %s172 = sphi 0, %s171
    %s186 = sphi 0, %s172
    %s190 = sphi 0, %s190
    %s192 = sphi 0, %s190
    %s193 = sphi 0, %s192
    %s207 = sphi 0, %s193
    %s211 = sphi 0, %s211
    %s213 = sphi 0, %s211
    %s214 = sphi 0, %s213
    %s228 = sphi 0, %s214
    %s232 = sphi 0, %s232
    %s234 = sphi 0, %s232
    %s235 = sphi 0, %s234
    %s249 = sphi 0, %s235
    %s253 = sphi 0, %s253
    %s255 = sphi 0, %s253
    %s256 = sphi 0, %s255
    %s270 = sphi 0, %s256
    %s274 = sphi 0, %s274
    %s276 = sphi 0, %s274
    %s277 = sphi 0, %s276
    %s291 = sphi 0, %s277
    %s297 = sphi 0, %s299
    %s300 = sphi 0, %s297
    %s301 = sphi 0, %s300
    %s317 = sphi 0, %s301
    %s323 = sphi 0, %s325
    %s326 = sphi 0, %s323
    %s327 = sphi 0, %s326
    %s343 = sphi 0, %s327
    %s349 = sphi 0, %s351
    %s352 = sphi 0, %s349
    %s353 = sphi 0, %s352
    %s369 = sphi 0, %s353
    %s373 = sphi 0, %s373
    %s375 = sphi 0, %s373
    %s376 = sphi 0, %s375
    %s390 = sphi 0, %s376
    %s394 = sphi 0, %s394
    %s396 = sphi 0, %s394
    %s397 = sphi 0, %s396
    %s411 = sphi 0, %s397
    %s415 = sphi 0, %s415
    %s417 = sphi 0, %s415
    %s418 = sphi 0, %s417
    %s432 = sphi 0, %s418
    %s436 = sphi 0, %s436
    %s438 = sphi 0, %s436
    %s439 = sphi 0, %s438
    %s453 = sphi 0, %s439
    %s457 = sphi 0, %s457
    %s459 = sphi 0, %s457
    %s460 = sphi 0, %s459
    %s474 = sphi 0, %s460
    %s478 = sphi 0, %s478
    %s480 = sphi 0, %s478
    %s481 = sphi 0, %s480
    %s495 = sphi 0, %s481
    %s499 = sphi 0, %s499
    %s501 = sphi 0, %s499
    %s502 = sphi 0, %s501
    %s516 = sphi 0, %s502
    %s520 = sphi 0, %s520
    %s522 = sphi 0, %s520
    %s523 = sphi 0, %s522
    %s537 = sphi 0, %s523
    %s541 = sphi 0, %s541
    %s543 = sphi 0, %s541
    %s544 = sphi 0, %s543
    %s558 = sphi 0, %s544
    %s562 = sphi 0, %s562
    %s564 = sphi 0, %s562
    %s565 = sphi 0, %s564
    %s579 = sphi 0, %s565
    %s585 = sphi 0, %s587
    %s588 = sphi 0, %s585
    %s589 = sphi 0, %s588
    %s605 = sphi 0, %s589
    %s611 = sphi 0, %s613
    %s614 = sphi 0, %s611
    %s615 = sphi 0, %s614
    %s631 = sphi 0, %s615
    %s637 = sphi 0, %s639
    %s640 = sphi 0, %s637
    %s641 = sphi 0, %s640
    %s657 = sphi 0, %s641
    %s663 = sphi 0, %s665
    %s666 = sphi 0, %s663
    %s667 = sphi 0, %s666
    %s683 = sphi 0, %s667
    %s689 = sphi 0, %s691
    %s692 = sphi 0, %s689
    %s693 = sphi 0, %s692
    %s709 = sphi 0, %s693
  $region4: #{narre_forward.1} parent=0 // loop_header_branch
    %44 = sbr.rel (%p42) target = $region8
  $region5: #{narre_forward.1} parent=0 // loop_body
    %s46 = ssub.s32 %s41, 1
    %s47 = ssub.s32 %s41, 2
    %s48 = sadd.s32 %s41, 1
    %s49 = ssub.s32 %s41, %s48
    %p50 = scmp.eq.s32.totalorder %s49, 0
    %s52 = sadd.s32 %s51, 1
    %s53 = scalar_select %p50, %s51, %s52
    %p56 = pneg %p50
    %p57 = scmp.eq.s32.totalorder %s41, 1
    %p58 = por %p56, %p57
    %p59 = scmp.ne.s32.totalorder %s51, %s54
    %p60 = scmp.eq.s32.totalorder %s41, 0
    %p61 = por %p59, %p60
    %p62 = scmp.ne.s32.totalorder %s51, %s54
    %p63 = scmp.eq.s32.totalorder %s46, 1
    %p64 = por %p62, %p63
    %p65 = scmp.ne.s32.totalorder %s54, %s55
    %p66 = scmp.eq.s32.totalorder %s46, 0
    %p67 = por %p65, %p66
    %p68 = scmp.ne.s32.totalorder %s54, %s55
    %p69 = scmp.eq.s32.totalorder %s47, 1
    %p70 = por %p68, %p69
    %p72 = scmp.ne.s32.totalorder %s55, %s71
    %p73 = scmp.eq.s32.totalorder %s47, 0
    %p74 = por %p72, %p73
    %s75 = ssub.s32 %s41, %s48
    %p76 = scmp.eq.s32.totalorder %s75, 0
    %s78 = sadd.s32 %s77, 1
    %s79 = scalar_select %p76, %s77, %s78
    %p82 = pneg %p76
    %p83 = scmp.eq.s32.totalorder %s41, 1
    %p84 = por %p82, %p83
    %p85 = scmp.ne.s32.totalorder %s77, %s80
    %p86 = scmp.eq.s32.totalorder %s41, 0
    %p87 = por %p85, %p86
    %p88 = scmp.ne.s32.totalorder %s77, %s80
    %p89 = scmp.eq.s32.totalorder %s46, 1
    %p90 = por %p88, %p89
    %p91 = scmp.ne.s32.totalorder %s80, %s81
    %p92 = scmp.eq.s32.totalorder %s46, 0
    %p93 = por %p91, %p92
    %p94 = scmp.ne.s32.totalorder %s80, %s81
    %p95 = scmp.eq.s32.totalorder %s47, 1
    %p96 = por %p94, %p95
    %p98 = scmp.ne.s32.totalorder %s81, %s97
    %p99 = scmp.eq.s32.totalorder %s47, 0
    %p100 = por %p98, %p99
    %s101 = ssub.s32 %s41, %s48
    %p102 = scmp.eq.s32.totalorder %s101, 0
    %s104 = sadd.s32 %s103, 1
    %s105 = scalar_select %p102, %s103, %s104
    %p108 = pneg %p102
    %p109 = scmp.eq.s32.totalorder %s41, 1
    %p110 = por %p108, %p109
    %p111 = scmp.ne.s32.totalorder %s103, %s106
    %p112 = scmp.eq.s32.totalorder %s41, 0
    %p113 = por %p111, %p112
    %p114 = scmp.ne.s32.totalorder %s103, %s106
    %p115 = scmp.eq.s32.totalorder %s46, 1
    %p116 = por %p114, %p115
    %p117 = scmp.ne.s32.totalorder %s106, %s107
    %p118 = scmp.eq.s32.totalorder %s46, 0
    %p119 = por %p117, %p118
    %p120 = scmp.ne.s32.totalorder %s106, %s107
    %p121 = scmp.eq.s32.totalorder %s47, 1
    %p122 = por %p120, %p121
    %p124 = scmp.ne.s32.totalorder %s107, %s123
    %p125 = scmp.eq.s32.totalorder %s47, 0
    %p126 = por %p124, %p125
    %s128 = sadd.s32 %s127, 1
    %p131 = scmp.eq.s32.totalorder %s41, 1
    %p132 = scmp.ne.s32.totalorder %s127, %s129
    %p133 = scmp.eq.s32.totalorder %s41, 0
    %p134 = por %p132, %p133
    %p135 = scmp.ne.s32.totalorder %s127, %s129
    %p136 = scmp.eq.s32.totalorder %s46, 1
    %p137 = por %p135, %p136
    %p138 = scmp.ne.s32.totalorder %s129, %s130
    %p139 = scmp.eq.s32.totalorder %s46, 0
    %p140 = por %p138, %p139
    %p141 = scmp.ne.s32.totalorder %s129, %s130
    %p142 = scmp.eq.s32.totalorder %s47, 1
    %p143 = por %p141, %p142
    %p145 = scmp.ne.s32.totalorder %s130, %s144
    %p146 = scmp.eq.s32.totalorder %s47, 0
    %p147 = por %p145, %p146
    %s149 = sadd.s32 %s148, 1
    %p152 = scmp.eq.s32.totalorder %s41, 1
    %p153 = scmp.ne.s32.totalorder %s148, %s150
    %p154 = scmp.eq.s32.totalorder %s41, 0
    %p155 = por %p153, %p154
    %p156 = scmp.ne.s32.totalorder %s148, %s150
    %p157 = scmp.eq.s32.totalorder %s46, 1
    %p158 = por %p156, %p157
    %p159 = scmp.ne.s32.totalorder %s150, %s151
    %p160 = scmp.eq.s32.totalorder %s46, 0
    %p161 = por %p159, %p160
    %p162 = scmp.ne.s32.totalorder %s150, %s151
    %p163 = scmp.eq.s32.totalorder %s47, 1
    %p164 = por %p162, %p163
    %p166 = scmp.ne.s32.totalorder %s151, %s165
    %p167 = scmp.eq.s32.totalorder %s47, 0
    %p168 = por %p166, %p167
    %s170 = sadd.s32 %s169, 1
    %p173 = scmp.eq.s32.totalorder %s41, 1
    %p174 = scmp.ne.s32.totalorder %s169, %s171
    %p175 = scmp.eq.s32.totalorder %s41, 0
    %p176 = por %p174, %p175
    %p177 = scmp.ne.s32.totalorder %s169, %s171
    %p178 = scmp.eq.s32.totalorder %s46, 1
    %p179 = por %p177, %p178
    %p180 = scmp.ne.s32.totalorder %s171, %s172
    %p181 = scmp.eq.s32.totalorder %s46, 0
    %p182 = por %p180, %p181
    %p183 = scmp.ne.s32.totalorder %s171, %s172
    %p184 = scmp.eq.s32.totalorder %s47, 1
    %p185 = por %p183, %p184
    %p187 = scmp.ne.s32.totalorder %s172, %s186
    %p188 = scmp.eq.s32.totalorder %s47, 0
    %p189 = por %p187, %p188
    %s191 = sadd.s32 %s190, 1
    %p194 = scmp.eq.s32.totalorder %s41, 1
    %p195 = scmp.ne.s32.totalorder %s190, %s192
    %p196 = scmp.eq.s32.totalorder %s41, 0
    %p197 = por %p195, %p196
    %p198 = scmp.ne.s32.totalorder %s190, %s192
    %p199 = scmp.eq.s32.totalorder %s46, 1
    %p200 = por %p198, %p199
    %p201 = scmp.ne.s32.totalorder %s192, %s193
    %p202 = scmp.eq.s32.totalorder %s46, 0
    %p203 = por %p201, %p202
    %p204 = scmp.ne.s32.totalorder %s192, %s193
    %p205 = scmp.eq.s32.totalorder %s47, 1
    %p206 = por %p204, %p205
    %p208 = scmp.ne.s32.totalorder %s193, %s207
    %p209 = scmp.eq.s32.totalorder %s47, 0
    %p210 = por %p208, %p209
    %s212 = sadd.s32 %s211, 1
    %p215 = scmp.eq.s32.totalorder %s41, 1
    %p216 = scmp.ne.s32.totalorder %s211, %s213
    %p217 = scmp.eq.s32.totalorder %s41, 0
    %p218 = por %p216, %p217
    %p219 = scmp.ne.s32.totalorder %s211, %s213
    %p220 = scmp.eq.s32.totalorder %s46, 1
    %p221 = por %p219, %p220
    %p222 = scmp.ne.s32.totalorder %s213, %s214
    %p223 = scmp.eq.s32.totalorder %s46, 0
    %p224 = por %p222, %p223
    %p225 = scmp.ne.s32.totalorder %s213, %s214
    %p226 = scmp.eq.s32.totalorder %s47, 1
    %p227 = por %p225, %p226
    %p229 = scmp.ne.s32.totalorder %s214, %s228
    %p230 = scmp.eq.s32.totalorder %s47, 0
    %p231 = por %p229, %p230
    %s233 = sadd.s32 %s232, 1
    %p236 = scmp.eq.s32.totalorder %s41, 1
    %p237 = scmp.ne.s32.totalorder %s232, %s234
    %p238 = scmp.eq.s32.totalorder %s41, 0
    %p239 = por %p237, %p238
    %p240 = scmp.ne.s32.totalorder %s232, %s234
    %p241 = scmp.eq.s32.totalorder %s46, 1
    %p242 = por %p240, %p241
    %p243 = scmp.ne.s32.totalorder %s234, %s235
    %p244 = scmp.eq.s32.totalorder %s46, 0
    %p245 = por %p243, %p244
    %p246 = scmp.ne.s32.totalorder %s234, %s235
    %p247 = scmp.eq.s32.totalorder %s47, 1
    %p248 = por %p246, %p247
    %p250 = scmp.ne.s32.totalorder %s235, %s249
    %p251 = scmp.eq.s32.totalorder %s47, 0
    %p252 = por %p250, %p251
    %s254 = sadd.s32 %s253, 1
    %p257 = scmp.eq.s32.totalorder %s41, 1
    %p258 = scmp.ne.s32.totalorder %s253, %s255
    %p259 = scmp.eq.s32.totalorder %s41, 0
    %p260 = por %p258, %p259
    %p261 = scmp.ne.s32.totalorder %s253, %s255
    %p262 = scmp.eq.s32.totalorder %s46, 1
    %p263 = por %p261, %p262
    %p264 = scmp.ne.s32.totalorder %s255, %s256
    %p265 = scmp.eq.s32.totalorder %s46, 0
    %p266 = por %p264, %p265
    %p267 = scmp.ne.s32.totalorder %s255, %s256
    %p268 = scmp.eq.s32.totalorder %s47, 1
    %p269 = por %p267, %p268
    %p271 = scmp.ne.s32.totalorder %s256, %s270
    %p272 = scmp.eq.s32.totalorder %s47, 0
    %p273 = por %p271, %p272
    %s275 = sadd.s32 %s274, 1
    %p278 = scmp.eq.s32.totalorder %s41, 1
    %p279 = scmp.ne.s32.totalorder %s274, %s276
    %p280 = scmp.eq.s32.totalorder %s41, 0
    %p281 = por %p279, %p280
    %p282 = scmp.ne.s32.totalorder %s274, %s276
    %p283 = scmp.eq.s32.totalorder %s46, 1
    %p284 = por %p282, %p283
    %p285 = scmp.ne.s32.totalorder %s276, %s277
    %p286 = scmp.eq.s32.totalorder %s46, 0
    %p287 = por %p285, %p286
    %p288 = scmp.ne.s32.totalorder %s276, %s277
    %p289 = scmp.eq.s32.totalorder %s47, 1
    %p290 = por %p288, %p289
    %p292 = scmp.ne.s32.totalorder %s277, %s291
    %p293 = scmp.eq.s32.totalorder %s47, 0
    %p294 = por %p292, %p293
    %s295 = ssub.s32 %s41, %s48
    %p296 = scmp.eq.s32.totalorder %s295, 0
    %s298 = sadd.s32 %s297, 1
    %s299 = scalar_select %p296, %s297, %s298
    %p302 = pneg %p296
    %p303 = scmp.eq.s32.totalorder %s41, 1
    %p304 = por %p302, %p303
    %p305 = scmp.ne.s32.totalorder %s297, %s300
    %p306 = scmp.eq.s32.totalorder %s41, 0
    %p307 = por %p305, %p306
    %p308 = scmp.ne.s32.totalorder %s297, %s300
    %p309 = scmp.eq.s32.totalorder %s46, 1
    %p310 = por %p308, %p309
    %p311 = scmp.ne.s32.totalorder %s300, %s301
    %p312 = scmp.eq.s32.totalorder %s46, 0
    %p313 = por %p311, %p312
    %p314 = scmp.ne.s32.totalorder %s300, %s301
    %p315 = scmp.eq.s32.totalorder %s47, 1
    %p316 = por %p314, %p315
    %p318 = scmp.ne.s32.totalorder %s301, %s317
    %p319 = scmp.eq.s32.totalorder %s47, 0
    %p320 = por %p318, %p319
    %s321 = ssub.s32 %s41, %s48
    %p322 = scmp.eq.s32.totalorder %s321, 0
    %s324 = sadd.s32 %s323, 1
    %s325 = scalar_select %p322, %s323, %s324
    %p328 = pneg %p322
    %p329 = scmp.eq.s32.totalorder %s41, 1
    %p330 = por %p328, %p329
    %p331 = scmp.ne.s32.totalorder %s323, %s326
    %p332 = scmp.eq.s32.totalorder %s41, 0
    %p333 = por %p331, %p332
    %p334 = scmp.ne.s32.totalorder %s323, %s326
    %p335 = scmp.eq.s32.totalorder %s46, 1
    %p336 = por %p334, %p335
    %p337 = scmp.ne.s32.totalorder %s326, %s327
    %p338 = scmp.eq.s32.totalorder %s46, 0
    %p339 = por %p337, %p338
    %p340 = scmp.ne.s32.totalorder %s326, %s327
    %p341 = scmp.eq.s32.totalorder %s47, 1
    %p342 = por %p340, %p341
    %p344 = scmp.ne.s32.totalorder %s327, %s343
    %p345 = scmp.eq.s32.totalorder %s47, 0
    %p346 = por %p344, %p345
    %s347 = ssub.s32 %s41, %s48
    %p348 = scmp.eq.s32.totalorder %s347, 0
    %s350 = sadd.s32 %s349, 1
    %s351 = scalar_select %p348, %s349, %s350
    %p354 = pneg %p348
    %p355 = scmp.eq.s32.totalorder %s41, 1
    %p356 = por %p354, %p355
    %p357 = scmp.ne.s32.totalorder %s349, %s352
    %p358 = scmp.eq.s32.totalorder %s41, 0
    %p359 = por %p357, %p358
    %p360 = scmp.ne.s32.totalorder %s349, %s352
    %p361 = scmp.eq.s32.totalorder %s46, 1
    %p362 = por %p360, %p361
    %p363 = scmp.ne.s32.totalorder %s352, %s353
    %p364 = scmp.eq.s32.totalorder %s46, 0
    %p365 = por %p363, %p364
    %p366 = scmp.ne.s32.totalorder %s352, %s353
    %p367 = scmp.eq.s32.totalorder %s47, 1
    %p368 = por %p366, %p367
    %p370 = scmp.ne.s32.totalorder %s353, %s369
    %p371 = scmp.eq.s32.totalorder %s47, 0
    %p372 = por %p370, %p371
    %s374 = sadd.s32 %s373, 1
    %p377 = scmp.eq.s32.totalorder %s41, 1
    %p378 = scmp.ne.s32.totalorder %s373, %s375
    %p379 = scmp.eq.s32.totalorder %s41, 0
    %p380 = por %p378, %p379
    %p381 = scmp.ne.s32.totalorder %s373, %s375
    %p382 = scmp.eq.s32.totalorder %s46, 1
    %p383 = por %p381, %p382
    %p384 = scmp.ne.s32.totalorder %s375, %s376
    %p385 = scmp.eq.s32.totalorder %s46, 0
    %p386 = por %p384, %p385
    %p387 = scmp.ne.s32.totalorder %s375, %s376
    %p388 = scmp.eq.s32.totalorder %s47, 1
    %p389 = por %p387, %p388
    %p391 = scmp.ne.s32.totalorder %s376, %s390
    %p392 = scmp.eq.s32.totalorder %s47, 0
    %p393 = por %p391, %p392
    %s395 = sadd.s32 %s394, 1
    %p398 = scmp.eq.s32.totalorder %s41, 1
    %p399 = scmp.ne.s32.totalorder %s394, %s396
    %p400 = scmp.eq.s32.totalorder %s41, 0
    %p401 = por %p399, %p400
    %p402 = scmp.ne.s32.totalorder %s394, %s396
    %p403 = scmp.eq.s32.totalorder %s46, 1
    %p404 = por %p402, %p403
    %p405 = scmp.ne.s32.totalorder %s396, %s397
    %p406 = scmp.eq.s32.totalorder %s46, 0
    %p407 = por %p405, %p406
    %p408 = scmp.ne.s32.totalorder %s396, %s397
    %p409 = scmp.eq.s32.totalorder %s47, 1
    %p410 = por %p408, %p409
    %p412 = scmp.ne.s32.totalorder %s397, %s411
    %p413 = scmp.eq.s32.totalorder %s47, 0
    %p414 = por %p412, %p413
    %s416 = sadd.s32 %s415, 1
    %p419 = scmp.eq.s32.totalorder %s41, 1
    %p420 = scmp.ne.s32.totalorder %s415, %s417
    %p421 = scmp.eq.s32.totalorder %s41, 0
    %p422 = por %p420, %p421
    %p423 = scmp.ne.s32.totalorder %s415, %s417
    %p424 = scmp.eq.s32.totalorder %s46, 1
    %p425 = por %p423, %p424
    %p426 = scmp.ne.s32.totalorder %s417, %s418
    %p427 = scmp.eq.s32.totalorder %s46, 0
    %p428 = por %p426, %p427
    %p429 = scmp.ne.s32.totalorder %s417, %s418
    %p430 = scmp.eq.s32.totalorder %s47, 1
    %p431 = por %p429, %p430
    %p433 = scmp.ne.s32.totalorder %s418, %s432
    %p434 = scmp.eq.s32.totalorder %s47, 0
    %p435 = por %p433, %p434
    %s437 = sadd.s32 %s436, 1
    %p440 = scmp.eq.s32.totalorder %s41, 1
    %p441 = scmp.ne.s32.totalorder %s436, %s438
    %p442 = scmp.eq.s32.totalorder %s41, 0
    %p443 = por %p441, %p442
    %p444 = scmp.ne.s32.totalorder %s436, %s438
    %p445 = scmp.eq.s32.totalorder %s46, 1
    %p446 = por %p444, %p445
    %p447 = scmp.ne.s32.totalorder %s438, %s439
    %p448 = scmp.eq.s32.totalorder %s46, 0
    %p449 = por %p447, %p448
    %p450 = scmp.ne.s32.totalorder %s438, %s439
    %p451 = scmp.eq.s32.totalorder %s47, 1
    %p452 = por %p450, %p451
    %p454 = scmp.ne.s32.totalorder %s439, %s453
    %p455 = scmp.eq.s32.totalorder %s47, 0
    %p456 = por %p454, %p455
    %s458 = sadd.s32 %s457, 1
    %p461 = scmp.eq.s32.totalorder %s41, 1
    %p462 = scmp.ne.s32.totalorder %s457, %s459
    %p463 = scmp.eq.s32.totalorder %s41, 0
    %p464 = por %p462, %p463
    %p465 = scmp.ne.s32.totalorder %s457, %s459
    %p466 = scmp.eq.s32.totalorder %s46, 1
    %p467 = por %p465, %p466
    %p468 = scmp.ne.s32.totalorder %s459, %s460
    %p469 = scmp.eq.s32.totalorder %s46, 0
    %p470 = por %p468, %p469
    %p471 = scmp.ne.s32.totalorder %s459, %s460
    %p472 = scmp.eq.s32.totalorder %s47, 1
    %p473 = por %p471, %p472
    %p475 = scmp.ne.s32.totalorder %s460, %s474
    %p476 = scmp.eq.s32.totalorder %s47, 0
    %p477 = por %p475, %p476
    %s479 = sadd.s32 %s478, 1
    %p482 = scmp.eq.s32.totalorder %s41, 1
    %p483 = scmp.ne.s32.totalorder %s478, %s480
    %p484 = scmp.eq.s32.totalorder %s41, 0
    %p485 = por %p483, %p484
    %p486 = scmp.ne.s32.totalorder %s478, %s480
    %p487 = scmp.eq.s32.totalorder %s46, 1
    %p488 = por %p486, %p487
    %p489 = scmp.ne.s32.totalorder %s480, %s481
    %p490 = scmp.eq.s32.totalorder %s46, 0
    %p491 = por %p489, %p490
    %p492 = scmp.ne.s32.totalorder %s480, %s481
    %p493 = scmp.eq.s32.totalorder %s47, 1
    %p494 = por %p492, %p493
    %p496 = scmp.ne.s32.totalorder %s481, %s495
    %p497 = scmp.eq.s32.totalorder %s47, 0
    %p498 = por %p496, %p497
    %s500 = sadd.s32 %s499, 1
    %p503 = scmp.eq.s32.totalorder %s41, 1
    %p504 = scmp.ne.s32.totalorder %s499, %s501
    %p505 = scmp.eq.s32.totalorder %s41, 0
    %p506 = por %p504, %p505
    %p507 = scmp.ne.s32.totalorder %s499, %s501
    %p508 = scmp.eq.s32.totalorder %s46, 1
    %p509 = por %p507, %p508
    %p510 = scmp.ne.s32.totalorder %s501, %s502
    %p511 = scmp.eq.s32.totalorder %s46, 0
    %p512 = por %p510, %p511
    %p513 = scmp.ne.s32.totalorder %s501, %s502
    %p514 = scmp.eq.s32.totalorder %s47, 1
    %p515 = por %p513, %p514
    %p517 = scmp.ne.s32.totalorder %s502, %s516
    %p518 = scmp.eq.s32.totalorder %s47, 0
    %p519 = por %p517, %p518
    %s521 = sadd.s32 %s520, 1
    %p524 = scmp.eq.s32.totalorder %s41, 1
    %p525 = scmp.ne.s32.totalorder %s520, %s522
    %p526 = scmp.eq.s32.totalorder %s41, 0
    %p527 = por %p525, %p526
    %p528 = scmp.ne.s32.totalorder %s520, %s522
    %p529 = scmp.eq.s32.totalorder %s46, 1
    %p530 = por %p528, %p529
    %p531 = scmp.ne.s32.totalorder %s522, %s523
    %p532 = scmp.eq.s32.totalorder %s46, 0
    %p533 = por %p531, %p532
    %p534 = scmp.ne.s32.totalorder %s522, %s523
    %p535 = scmp.eq.s32.totalorder %s47, 1
    %p536 = por %p534, %p535
    %p538 = scmp.ne.s32.totalorder %s523, %s537
    %p539 = scmp.eq.s32.totalorder %s47, 0
    %p540 = por %p538, %p539
    %s542 = sadd.s32 %s541, 1
    %p545 = scmp.eq.s32.totalorder %s41, 1
    %p546 = scmp.ne.s32.totalorder %s541, %s543
    %p547 = scmp.eq.s32.totalorder %s41, 0
    %p548 = por %p546, %p547
    %p549 = scmp.ne.s32.totalorder %s541, %s543
    %p550 = scmp.eq.s32.totalorder %s46, 1
    %p551 = por %p549, %p550
    %p552 = scmp.ne.s32.totalorder %s543, %s544
    %p553 = scmp.eq.s32.totalorder %s46, 0
    %p554 = por %p552, %p553
    %p555 = scmp.ne.s32.totalorder %s543, %s544
    %p556 = scmp.eq.s32.totalorder %s47, 1
    %p557 = por %p555, %p556
    %p559 = scmp.ne.s32.totalorder %s544, %s558
    %p560 = scmp.eq.s32.totalorder %s47, 0
    %p561 = por %p559, %p560
    %s563 = sadd.s32 %s562, 1
    %p566 = scmp.eq.s32.totalorder %s41, 1
    %p567 = scmp.ne.s32.totalorder %s562, %s564
    %p568 = scmp.eq.s32.totalorder %s41, 0
    %p569 = por %p567, %p568
    %p570 = scmp.ne.s32.totalorder %s562, %s564
    %p571 = scmp.eq.s32.totalorder %s46, 1
    %p572 = por %p570, %p571
    %p573 = scmp.ne.s32.totalorder %s564, %s565
    %p574 = scmp.eq.s32.totalorder %s46, 0
    %p575 = por %p573, %p574
    %p576 = scmp.ne.s32.totalorder %s564, %s565
    %p577 = scmp.eq.s32.totalorder %s47, 1
    %p578 = por %p576, %p577
    %p580 = scmp.ne.s32.totalorder %s565, %s579
    %p581 = scmp.eq.s32.totalorder %s47, 0
    %p582 = por %p580, %p581
    %s583 = ssub.s32 %s41, %s48
    %p584 = scmp.eq.s32.totalorder %s583, 0
    %s586 = sadd.s32 %s585, 1
    %s587 = scalar_select %p584, %s585, %s586
    %p590 = pneg %p584
    %p591 = scmp.eq.s32.totalorder %s41, 1
    %p592 = por %p590, %p591
    %p593 = scmp.ne.s32.totalorder %s585, %s588
    %p594 = scmp.eq.s32.totalorder %s41, 0
    %p595 = por %p593, %p594
    %p596 = scmp.ne.s32.totalorder %s585, %s588
    %p597 = scmp.eq.s32.totalorder %s46, 1
    %p598 = por %p596, %p597
    %p599 = scmp.ne.s32.totalorder %s588, %s589
    %p600 = scmp.eq.s32.totalorder %s46, 0
    %p601 = por %p599, %p600
    %p602 = scmp.ne.s32.totalorder %s588, %s589
    %p603 = scmp.eq.s32.totalorder %s47, 1
    %p604 = por %p602, %p603
    %p606 = scmp.ne.s32.totalorder %s589, %s605
    %p607 = scmp.eq.s32.totalorder %s47, 0
    %p608 = por %p606, %p607
    %s609 = ssub.s32 %s41, %s48
    %p610 = scmp.eq.s32.totalorder %s609, 0
    %s612 = sadd.s32 %s611, 1
    %s613 = scalar_select %p610, %s611, %s612
    %p616 = pneg %p610
    %p617 = scmp.eq.s32.totalorder %s41, 1
    %p618 = por %p616, %p617
    %p619 = scmp.ne.s32.totalorder %s611, %s614
    %p620 = scmp.eq.s32.totalorder %s41, 0
    %p621 = por %p619, %p620
    %p622 = scmp.ne.s32.totalorder %s611, %s614
    %p623 = scmp.eq.s32.totalorder %s46, 1
    %p624 = por %p622, %p623
    %p625 = scmp.ne.s32.totalorder %s614, %s615
    %p626 = scmp.eq.s32.totalorder %s46, 0
    %p627 = por %p625, %p626
    %p628 = scmp.ne.s32.totalorder %s614, %s615
    %p629 = scmp.eq.s32.totalorder %s47, 1
    %p630 = por %p628, %p629
    %p632 = scmp.ne.s32.totalorder %s615, %s631
    %p633 = scmp.eq.s32.totalorder %s47, 0
    %p634 = por %p632, %p633
    %s635 = ssub.s32 %s41, %s48
    %p636 = scmp.eq.s32.totalorder %s635, 0
    %s638 = sadd.s32 %s637, 1
    %s639 = scalar_select %p636, %s637, %s638
    %p642 = pneg %p636
    %p643 = scmp.eq.s32.totalorder %s41, 1
    %p644 = por %p642, %p643
    %p645 = scmp.ne.s32.totalorder %s637, %s640
    %p646 = scmp.eq.s32.totalorder %s41, 0
    %p647 = por %p645, %p646
    %p648 = scmp.ne.s32.totalorder %s637, %s640
    %p649 = scmp.eq.s32.totalorder %s46, 1
    %p650 = por %p648, %p649
    %p651 = scmp.ne.s32.totalorder %s640, %s641
    %p652 = scmp.eq.s32.totalorder %s46, 0
    %p653 = por %p651, %p652
    %p654 = scmp.ne.s32.totalorder %s640, %s641
    %p655 = scmp.eq.s32.totalorder %s47, 1
    %p656 = por %p654, %p655
    %p658 = scmp.ne.s32.totalorder %s641, %s657
    %p659 = scmp.eq.s32.totalorder %s47, 0
    %p660 = por %p658, %p659
    %s661 = ssub.s32 %s41, %s48
    %p662 = scmp.eq.s32.totalorder %s661, 0
    %s664 = sadd.s32 %s663, 1
    %s665 = scalar_select %p662, %s663, %s664
    %p668 = pneg %p662
    %p669 = scmp.eq.s32.totalorder %s41, 1
    %p670 = por %p668, %p669
    %p671 = scmp.ne.s32.totalorder %s663, %s666
    %p672 = scmp.eq.s32.totalorder %s41, 0
    %p673 = por %p671, %p672
    %p674 = scmp.ne.s32.totalorder %s663, %s666
    %p675 = scmp.eq.s32.totalorder %s46, 1
    %p676 = por %p674, %p675
    %p677 = scmp.ne.s32.totalorder %s666, %s667
    %p678 = scmp.eq.s32.totalorder %s46, 0
    %p679 = por %p677, %p678
    %p680 = scmp.ne.s32.totalorder %s666, %s667
    %p681 = scmp.eq.s32.totalorder %s47, 1
    %p682 = por %p680, %p681
    %p684 = scmp.ne.s32.totalorder %s667, %s683
    %p685 = scmp.eq.s32.totalorder %s47, 0
    %p686 = por %p684, %p685
    %s687 = ssub.s32 %s41, %s48
    %p688 = scmp.eq.s32.totalorder %s687, 0
    %s690 = sadd.s32 %s689, 1
    %s691 = scalar_select %p688, %s689, %s690
    %p694 = pneg %p688
    %p695 = scmp.eq.s32.totalorder %s41, 1
    %p696 = por %p694, %p695
    %p697 = scmp.ne.s32.totalorder %s689, %s692
    %p698 = scmp.eq.s32.totalorder %s41, 0
    %p699 = por %p697, %p698
    %p700 = scmp.ne.s32.totalorder %s689, %s692
    %p701 = scmp.eq.s32.totalorder %s46, 1
    %p702 = por %p700, %p701
    %p703 = scmp.ne.s32.totalorder %s692, %s693
    %p704 = scmp.eq.s32.totalorder %s46, 0
    %p705 = por %p703, %p704
    %p706 = scmp.ne.s32.totalorder %s692, %s693
    %p707 = scmp.eq.s32.totalorder %s47, 1
    %p708 = por %p706, %p707
    %p710 = scmp.ne.s32.totalorder %s693, %s709
    %p711 = scmp.eq.s32.totalorder %s47, 0
    %p712 = por %p710, %p711
    %p713 = scmp.le.s32.totalorder 1, %s41
    %p714 = scmp.lt.s32.totalorder %s41, 3
    %p715 = pnand %p713, %p714
    %p716 = pneg %p715
    // Predicated region
    $region9: #{narre_forward.1} parent=5 // pred_check
      _
    $region10: #{narre_forward.1} parent=5 // pred_check_branch
      %718 = sbr.rel (%p715) target = $region12
    $region11: #{narre_forward.1} parent=5 // pred_region
      %s719 = ssub.s32 %s41, 1
      // Predicated region
      $region13: #{narre_forward.1} parent=11 // pred_check
        %p720 = pneg %p140
      $region14: #{narre_forward.1} parent=11 // pred_check_branch
        %722 = sbr.rel (%p720) target = $region16
      $region15: #{narre_forward.1} parent=11 // pred_region
        _
      $region16: #{narre_forward.1} parent=11 // pred_fallthru
        _
      // Predicated region
      $region17: #{narre_forward.1} parent=11 // pred_check
        %p723 = pneg %p161
      $region18: #{narre_forward.1} parent=11 // pred_check_branch
        %725 = sbr.rel (%p723) target = $region20
      $region19: #{narre_forward.1} parent=11 // pred_region
        _
      $region20: #{narre_forward.1} parent=11 // pred_fallthru
        _
      // Predicated region
      $region21: #{narre_forward.1} parent=11 // pred_check
        %p726 = pneg %p182
      $region22: #{narre_forward.1} parent=11 // pred_check_branch
        %728 = sbr.rel (%p726) target = $region24
      $region23: #{narre_forward.1} parent=11 // pred_region
        _
      $region24: #{narre_forward.1} parent=11 // pred_fallthru
        _
      // Predicated region
      $region25: #{narre_forward.1} parent=11 // pred_check
        %p729 = pneg %p203
      $region26: #{narre_forward.1} parent=11 // pred_check_branch
        %731 = sbr.rel (%p729) target = $region28
      $region27: #{narre_forward.1} parent=11 // pred_region
        _
      $region28: #{narre_forward.1} parent=11 // pred_fallthru
        _
      // Predicated region
      $region29: #{narre_forward.1} parent=11 // pred_check
        %p732 = pneg %p224
      $region30: #{narre_forward.1} parent=11 // pred_check_branch
        %734 = sbr.rel (%p732) target = $region32
      $region31: #{narre_forward.1} parent=11 // pred_region
        _
      $region32: #{narre_forward.1} parent=11 // pred_fallthru
        _
      // Predicated region
      $region33: #{narre_forward.1} parent=11 // pred_check
        %p735 = pneg %p245
      $region34: #{narre_forward.1} parent=11 // pred_check_branch
        %737 = sbr.rel (%p735) target = $region36
      $region35: #{narre_forward.1} parent=11 // pred_region
        _
      $region36: #{narre_forward.1} parent=11 // pred_fallthru
        _
      // Predicated region
      $region37: #{narre_forward.1} parent=11 // pred_check
        %p738 = pneg %p266
      $region38: #{narre_forward.1} parent=11 // pred_check_branch
        %740 = sbr.rel (%p738) target = $region40
      $region39: #{narre_forward.1} parent=11 // pred_region
        _
      $region40: #{narre_forward.1} parent=11 // pred_fallthru
        _
      // Predicated region
      $region41: #{narre_forward.1} parent=11 // pred_check
        %p741 = pneg %p287
      $region42: #{narre_forward.1} parent=11 // pred_check_branch
        %743 = sbr.rel (%p741) target = $region44
      $region43: #{narre_forward.1} parent=11 // pred_region
        _
      $region44: #{narre_forward.1} parent=11 // pred_fallthru
        _
      // Predicated region
      $region45: #{narre_forward.1} parent=11 // pred_check
        %p744 = pneg %p386
      $region46: #{narre_forward.1} parent=11 // pred_check_branch
        %746 = sbr.rel (%p744) target = $region48
      $region47: #{narre_forward.1} parent=11 // pred_region
        _
      $region48: #{narre_forward.1} parent=11 // pred_fallthru
        _
      // Predicated region
      $region49: #{narre_forward.1} parent=11 // pred_check
        %p747 = pneg %p407
      $region50: #{narre_forward.1} parent=11 // pred_check_branch
        %749 = sbr.rel (%p747) target = $region52
      $region51: #{narre_forward.1} parent=11 // pred_region
        _
      $region52: #{narre_forward.1} parent=11 // pred_fallthru
        _
      // Predicated region
      $region53: #{narre_forward.1} parent=11 // pred_check
        %p750 = pneg %p428
      $region54: #{narre_forward.1} parent=11 // pred_check_branch
        %752 = sbr.rel (%p750) target = $region56
      $region55: #{narre_forward.1} parent=11 // pred_region
        _
      $region56: #{narre_forward.1} parent=11 // pred_fallthru
        _
      // Predicated region
      $region57: #{narre_forward.1} parent=11 // pred_check
        %p753 = pneg %p449
      $region58: #{narre_forward.1} parent=11 // pred_check_branch
        %755 = sbr.rel (%p753) target = $region60
      $region59: #{narre_forward.1} parent=11 // pred_region
        _
      $region60: #{narre_forward.1} parent=11 // pred_fallthru
        _
      // Predicated region
      $region61: #{narre_forward.1} parent=11 // pred_check
        %p756 = pneg %p470
      $region62: #{narre_forward.1} parent=11 // pred_check_branch
        %758 = sbr.rel (%p756) target = $region64
      $region63: #{narre_forward.1} parent=11 // pred_region
        _
      $region64: #{narre_forward.1} parent=11 // pred_fallthru
        _
      // Predicated region
      $region65: #{narre_forward.1} parent=11 // pred_check
        %p759 = pneg %p491
      $region66: #{narre_forward.1} parent=11 // pred_check_branch
        %761 = sbr.rel (%p759) target = $region68
      $region67: #{narre_forward.1} parent=11 // pred_region
        _
      $region68: #{narre_forward.1} parent=11 // pred_fallthru
        _
      // Predicated region
      $region69: #{narre_forward.1} parent=11 // pred_check
        %p762 = pneg %p512
      $region70: #{narre_forward.1} parent=11 // pred_check_branch
        %764 = sbr.rel (%p762) target = $region72
      $region71: #{narre_forward.1} parent=11 // pred_region
        _
      $region72: #{narre_forward.1} parent=11 // pred_fallthru
        _
      // Predicated region
      $region73: #{narre_forward.1} parent=11 // pred_check
        %p765 = pneg %p533
      $region74: #{narre_forward.1} parent=11 // pred_check_branch
        %767 = sbr.rel (%p765) target = $region76
      $region75: #{narre_forward.1} parent=11 // pred_region
        _
      $region76: #{narre_forward.1} parent=11 // pred_fallthru
        _
      // Predicated region
      $region77: #{narre_forward.1} parent=11 // pred_check
        %p768 = pneg %p554
      $region78: #{narre_forward.1} parent=11 // pred_check_branch
        %770 = sbr.rel (%p768) target = $region80
      $region79: #{narre_forward.1} parent=11 // pred_region
        _
      $region80: #{narre_forward.1} parent=11 // pred_fallthru
        _
      // Predicated region
      $region81: #{narre_forward.1} parent=11 // pred_check
        %p771 = pneg %p575
      $region82: #{narre_forward.1} parent=11 // pred_check_branch
        %773 = sbr.rel (%p771) target = $region84
      $region83: #{narre_forward.1} parent=11 // pred_region
        _
      $region84: #{narre_forward.1} parent=11 // pred_fallthru
        _
    $region12: #{narre_forward.1} parent=5 // pred_fallthru
      _
    %p774 = scmp.lt.s32.totalorder %s41, 2
    // Predicated region
    $region85: #{narre_forward.1} parent=5 // pred_check
      %p775 = pneg %p774
    $region86: #{narre_forward.1} parent=5 // pred_check_branch
      %777 = sbr.rel (%p775) target = $region88
    $region87: #{narre_forward.1} parent=5 // pred_region
      // Predicated region
      $region89: #{narre_forward.1} parent=87 // pred_check
        %p778 = pneg %p61
      $region90: #{narre_forward.1} parent=87 // pred_check_branch
        %780 = sbr.rel (%p778) target = $region92
      $region91: #{narre_forward.1} parent=87 // pred_region
        %p781 = scmp.lt.s32.totalorder %s41, 1
        %s782 = scalar_select %p781, %s41, 1
        %s783 = smul.addr %s782, 25
        %s784 = smul.addr %s783, 8
        %s785 = scalar_lea.vmem %s0, %s784
      $region92: #{narre_forward.1} parent=87 // pred_fallthru
        _
      // Predicated region
      $region93: #{narre_forward.1} parent=87 // pred_check
        %p786 = pneg %p87
      $region94: #{narre_forward.1} parent=87 // pred_check_branch
        %788 = sbr.rel (%p786) target = $region96
      $region95: #{narre_forward.1} parent=87 // pred_region
        %p789 = scmp.lt.s32.totalorder %s41, 1
        %s790 = scalar_select %p789, %s41, 1
        %s791 = smul.addr %s790, 4
        %s792 = smul.addr %s791, 8
        %s793 = scalar_lea.vmem %s1, %s792
      $region96: #{narre_forward.1} parent=87 // pred_fallthru
        _
      // Predicated region
      $region97: #{narre_forward.1} parent=87 // pred_check
        %p794 = pneg %p113
      $region98: #{narre_forward.1} parent=87 // pred_check_branch
        %796 = sbr.rel (%p794) target = $region100
      $region99: #{narre_forward.1} parent=87 // pred_region
        %p797 = scmp.lt.s32.totalorder %s41, 1
        %s798 = scalar_select %p797, %s41, 1
        %s799 = scalar_lea.vmem %s2, %s798
      $region100: #{narre_forward.1} parent=87 // pred_fallthru
        _
      // Predicated region
      $region101: #{narre_forward.1} parent=87 // pred_check
        %p800 = pneg %p307
      $region102: #{narre_forward.1} parent=87 // pred_check_branch
        %802 = sbr.rel (%p800) target = $region104
      $region103: #{narre_forward.1} parent=87 // pred_region
        %p803 = scmp.lt.s32.totalorder %s41, 1
        %s804 = scalar_select %p803, %s41, 1
        %s805 = smul.addr %s804, 25
        %s806 = smul.addr %s805, 8
        %s807 = scalar_lea.vmem %s11, %s806
      $region104: #{narre_forward.1} parent=87 // pred_fallthru
        _
      // Predicated region
      $region105: #{narre_forward.1} parent=87 // pred_check
        %p808 = pneg %p333
      $region106: #{narre_forward.1} parent=87 // pred_check_branch
        %810 = sbr.rel (%p808) target = $region108
      $region107: #{narre_forward.1} parent=87 // pred_region
        %p811 = scmp.lt.s32.totalorder %s41, 1
        %s812 = scalar_select %p811, %s41, 1
        %s813 = smul.addr %s812, 4
        %s814 = smul.addr %s813, 8
        %s815 = scalar_lea.vmem %s12, %s814
      $region108: #{narre_forward.1} parent=87 // pred_fallthru
        _
      // Predicated region
      $region109: #{narre_forward.1} parent=87 // pred_check
        %p816 = pneg %p359
      $region110: #{narre_forward.1} parent=87 // pred_check_branch
        %818 = sbr.rel (%p816) target = $region112
      $region111: #{narre_forward.1} parent=87 // pred_region
        %p819 = scmp.lt.s32.totalorder %s41, 1
        %s820 = scalar_select %p819, %s41, 1
        %s821 = scalar_lea.vmem %s13, %s820
      $region112: #{narre_forward.1} parent=87 // pred_fallthru
        _
      // Predicated region
      $region113: #{narre_forward.1} parent=87 // pred_check
        %p822 = pneg %p595
      $region114: #{narre_forward.1} parent=87 // pred_check_branch
        %824 = sbr.rel (%p822) target = $region116
      $region115: #{narre_forward.1} parent=87 // pred_region
        %p825 = scmp.lt.s32.totalorder %s41, 1
        %s826 = scalar_select %p825, %s41, 1
        %s827 = scalar_lea.vmem %s24, %s826
      $region116: #{narre_forward.1} parent=87 // pred_fallthru
        _
      // Predicated region
      $region117: #{narre_forward.1} parent=87 // pred_check
        %p828 = pneg %p621
      $region118: #{narre_forward.1} parent=87 // pred_check_branch
        %830 = sbr.rel (%p828) target = $region120
      $region119: #{narre_forward.1} parent=87 // pred_region
        %p831 = scmp.lt.s32.totalorder %s41, 1
        %s832 = scalar_select %p831, %s41, 1
        %s833 = scalar_lea.vmem %s25, %s832
      $region120: #{narre_forward.1} parent=87 // pred_fallthru
        _
    $region88: #{narre_forward.1} parent=5 // pred_fallthru
      _
    %p834 = scmp.le.s32.totalorder 1, %s41
    %p835 = scmp.lt.s32.totalorder %s41, 3
    %p836 = pnand %p834, %p835
    %p837 = pneg %p836
    // Predicated region
    $region121: #{narre_forward.1} parent=5 // pred_check
      _
    $region122: #{narre_forward.1} parent=5 // pred_check_branch
      %839 = sbr.rel (%p836) target = $region124
    $region123: #{narre_forward.1} parent=5 // pred_region
      %s840 = ssub.s32 %s41, 1
      %p841 = scmp.lt.s32.totalorder %s46, 1
      %s842 = scalar_select %p841, %s46, 1
      %s843 = smul.addr %s842, 25
      %s844 = smul.addr %s843, 8
      %s845 = scalar_lea.vmem %s0, %s844
      %p846 = pneg %p67
      %p847 = pneg %p64
      %p848 = scmp.lt.s32.totalorder %s46, 1
      %s849 = scalar_select %p848, %s46, 1
      %s850 = smul.addr %s849, 4
      %s851 = smul.addr %s850, 8
      %s852 = scalar_lea.vmem %s1, %s851
      %p853 = pneg %p93
      %p854 = pneg %p90
      %p855 = scmp.lt.s32.totalorder %s46, 1
      %s856 = scalar_select %p855, %s46, 1
      %s857 = scalar_lea.vmem %s2, %s856
      %p858 = pneg %p119
      %p859 = pneg %p116
      %p860 = pneg %p140
      %p861 = pneg %p137
      %p862 = pneg %p161
      %p863 = pneg %p158
      %p864 = pneg %p182
      %p865 = pneg %p179
      %p866 = pneg %p203
      %p867 = pneg %p200
      %p868 = pneg %p224
      %p869 = pneg %p221
      %p870 = pneg %p245
      %p871 = pneg %p242
      %p872 = pneg %p266
      %p873 = pneg %p263
      %p874 = pneg %p287
      %p875 = pneg %p284
      %p876 = scmp.lt.s32.totalorder %s46, 1
      %s877 = scalar_select %p876, %s46, 1
      %s878 = smul.addr %s877, 25
      %s879 = smul.addr %s878, 8
      %s880 = scalar_lea.vmem %s11, %s879
      %p881 = pneg %p313
      %p882 = pneg %p310
      %p883 = scmp.lt.s32.totalorder %s46, 1
      %s884 = scalar_select %p883, %s46, 1
      %s885 = smul.addr %s884, 4
      %s886 = smul.addr %s885, 8
      %s887 = scalar_lea.vmem %s12, %s886
      %p888 = pneg %p339
      %p889 = pneg %p336
      %p890 = scmp.lt.s32.totalorder %s46, 1
      %s891 = scalar_select %p890, %s46, 1
      %s892 = scalar_lea.vmem %s13, %s891
      %p893 = pneg %p365
      %p894 = pneg %p362
      %p895 = pneg %p386
      %p896 = pneg %p383
      %p897 = pneg %p407
      %p898 = pneg %p404
      %p899 = pneg %p428
      %p900 = pneg %p425
      %p901 = pneg %p449
      %p902 = pneg %p446
      %p903 = pneg %p470
      %p904 = pneg %p467
      %p905 = pneg %p491
      %p906 = pneg %p488
      %p907 = pneg %p512
      %p908 = pneg %p509
      %p909 = pneg %p533
      %p910 = pneg %p530
      %p911 = pneg %p554
      %p912 = pneg %p551
      %p913 = pneg %p575
      %p914 = pneg %p572
      %p915 = scmp.lt.s32.totalorder %s46, 1
      %s916 = scalar_select %p915, %s46, 1
      %s917 = scalar_lea.vmem %s24, %s916
      %p918 = pneg %p601
      %p919 = pneg %p598
      %p920 = scmp.lt.s32.totalorder %s46, 1
      %s921 = scalar_select %p920, %s46, 1
      %s922 = scalar_lea.vmem %s25, %s921
      %p923 = pneg %p627
      %p924 = pneg %p624
      %p925 = pneg %p653
      %p926 = pneg %p650
      %p927 = scmp.lt.s32.totalorder %s46, 1
      %s928 = scalar_select %p927, %s46, 1
      %s929 = scalar_lea.vmem %s26, %s928
      %p930 = pneg %p679
      %p931 = pneg %p676
      %p932 = scmp.lt.s32.totalorder %s46, 1
      %s933 = scalar_select %p932, %s46, 1
      %s934 = scalar_lea.vmem %s27, %s933
      %p935 = pneg %p705
      %p936 = pneg %p702
      %p937 = scmp.lt.s32.totalorder %s46, 1
      %s938 = scalar_select %p937, %s46, 1
      %s939 = scalar_lea.vmem %s28, %s938
      %p940 = scmp.lt.s32.totalorder %s46, 1
      %s941 = scalar_select %p940, %s46, 1
      %s942 = smul.addr %s941, 25
      %s943 = smul.addr %s942, 8
      %s944 = scalar_lea.vmem %s0, %s943
      %p945 = scmp.lt.s32.totalorder %s46, 1
      %s946 = scalar_select %p945, %s46, 1
      %s947 = smul.addr %s946, 4
      %s948 = smul.addr %s947, 8
      %s949 = scalar_lea.vmem %s1, %s948
      %p950 = scmp.lt.s32.totalorder %s46, 1
      %s951 = scalar_select %p950, %s46, 1
      %s952 = scalar_lea.vmem %s2, %s951
      %p953 = scmp.lt.s32.totalorder %s46, 1
      %s954 = scalar_select %p953, %s46, 1
      %s955 = smul.addr %s954, 25
      %s956 = smul.addr %s955, 8
      %s957 = scalar_lea.vmem %s11, %s956
      %p958 = scmp.lt.s32.totalorder %s46, 1
      %s959 = scalar_select %p958, %s46, 1
      %s960 = smul.addr %s959, 4
      %s961 = smul.addr %s960, 8
      %s962 = scalar_lea.vmem %s12, %s961
      %p963 = scmp.lt.s32.totalorder %s46, 1
      %s964 = scalar_select %p963, %s46, 1
      %s965 = scalar_lea.vmem %s13, %s964
      %p966 = scmp.lt.s32.totalorder %s46, 1
      %s967 = scalar_select %p966, %s46, 1
      %s968 = scalar_lea.vmem %s24, %s967
      %p969 = scmp.lt.s32.totalorder %s46, 1
      %s970 = scalar_select %p969, %s46, 1
      %s971 = scalar_lea.vmem %s25, %s970
      %p972 = scmp.lt.s32.totalorder %s46, 1
      %s973 = scalar_select %p972, %s46, 1
      %s974 = scalar_lea.vmem %s26, %s973
      %p975 = scmp.lt.s32.totalorder %s46, 1
      %s976 = scalar_select %p975, %s46, 1
      %s977 = scalar_lea.vmem %s27, %s976
      %p978 = scmp.lt.s32.totalorder %s46, 1
      %s979 = scalar_select %p978, %s46, 1
      %s980 = scalar_lea.vmem %s28, %s979
      %v981 = vld [vmem:[%s944] sm:$0x3f]
      %v982 = vld [vmem:[%s944 + $0x8] sm:$0x3f]
      %v983 = vld [vmem:[%s944 + $0x10] sm:$0x3f]
      %v984 = vld [vmem:[%s944 + $0x18] sm:$0x3f]
      %v985 = vld [vmem:[%s944 + $0x20] sm:$0x3f]
      %v986 = vld [vmem:[%s944 + $0x28] sm:$0x3f]
      %v987 = vld [vmem:[%s944 + $0x30] sm:$0x3f]
      %v988 = vld [vmem:[%s944 + $0x38] sm:$0x3f]
      %v989 = vld [vmem:[%s944 + $0x40] sm:$0x3f]
      %v990 = vld [vmem:[%s944 + $0x48] sm:$0x3f]
      %v991 = vld [vmem:[%s944 + $0x50] sm:$0x3f]
      %v992 = vld [vmem:[%s944 + $0x58] sm:$0x3f]
      %v993 = vld [vmem:[%s944 + $0x60] sm:$0x3f]
      %v994 = vld [vmem:[%s944 + $0x68] sm:$0x3f]
      %v995 = vld [vmem:[%s944 + $0x70] sm:$0x3f]
      %v996 = vld [vmem:[%s944 + $0x78] sm:$0x3f]
      %v997 = vld [vmem:[%s944 + $0x80] sm:$0x3f]
      %v998 = vld [vmem:[%s944 + $0x88] sm:$0x3f]
      %v999 = vld [vmem:[%s944 + $0x90] sm:$0x3f]
      %v1000 = vld [vmem:[%s944 + $0x98] sm:$0x3f]
      %v1001 = vld [vmem:[%s944 + $0xa0] sm:$0x3f]
      %v1002 = vld [vmem:[%s944 + $0xa8] sm:$0x3f]
      %v1003 = vld [vmem:[%s944 + $0xb0] sm:$0x3f]
      %v1004 = vld [vmem:[%s944 + $0xb8] sm:$0x3f]
      %v1005 = vld [vmem:[%s944 + $0xc0] sm:$0x3f]
      %v1006 = vld [vmem:[%s3] sm:$0xff]
      %v1007 = vld [vmem:[%s3 + $0x8] sm:$0xff]
      %v1008 = vld [vmem:[%s3 + $0x10] sm:$0xff]
      %v1009 = vld [vmem:[%s3 + $0x18] sm:$0xff]
      %v1010 = vld [vmem:[%s3 + $0x20] sm:$0xff]
      %v1011 = vld [vmem:[%s3 + $0x28] sm:$0xff]
      %v1012 = vld [vmem:[%s4] sm:$0x1]
      %v1014 = vlaneseq
      %v1015 = vshrl.u32 %v1014, 7
      %v1016 = vsub.s32 0, %v1015
      %v1017 = vrot.slane %v1012, %v1016
      %v1043 = vcombine.high %v981, %v981
      %v1045 = vunpack.c.l.s4 1983009808
      %v1046 = vunpack.c.0.s8 %v1045
      %v1047 = vlaneseq
      %v1048 = vshrl.u32 %v1047, 7
      %v1049 = vsub.s32 %v1046, %v1048
      %v1050 = vrot.slane %v981, %v1049
      %v1052 = vunpack.c.l.s4 1983009808
      %v1053 = vunpack.c.0.s8 %v1052
      %v1054 = vlaneseq
      %v1055 = vshrl.u32 %v1054, 7
      %v1056 = vsub.s32 %v1053, %v1055
      %v1057 = vrot.slane %v1043, %v1056
      %v1058 = vcombine.high %v1050, %v1050
      %v1059 = vcombine.high %v982, %v982
      %v1061 = vunpack.c.l.s4 1983009808
      %v1062 = vunpack.c.0.s8 %v1061
      %v1063 = vlaneseq
      %v1064 = vshrl.u32 %v1063, 7
      %v1065 = vsub.s32 %v1062, %v1064
      %v1066 = vrot.slane %v982, %v1065
      %v1068 = vunpack.c.l.s4 1983009808
      %v1069 = vunpack.c.0.s8 %v1068
      %v1070 = vlaneseq
      %v1071 = vshrl.u32 %v1070, 7
      %v1072 = vsub.s32 %v1069, %v1071
      %v1073 = vrot.slane %v1059, %v1072
      %v1074 = vcombine.high %v1066, %v1066
      %v1075 = vcombine.high %v983, %v983
      %v1077 = vunpack.c.l.s4 1983009808
      %v1078 = vunpack.c.0.s8 %v1077
      %v1079 = vlaneseq
      %v1080 = vshrl.u32 %v1079, 7
      %v1081 = vsub.s32 %v1078, %v1080
      %v1082 = vrot.slane %v983, %v1081
      %v1084 = vunpack.c.l.s4 1983009808
      %v1085 = vunpack.c.0.s8 %v1084
      %v1086 = vlaneseq
      %v1087 = vshrl.u32 %v1086, 7
      %v1088 = vsub.s32 %v1085, %v1087
      %v1089 = vrot.slane %v1075, %v1088
      %v1090 = vcombine.high %v1082, %v1082
      %v1091 = vcombine.high %v984, %v984
      %v1093 = vunpack.c.l.s4 1983009808
      %v1094 = vunpack.c.0.s8 %v1093
      %v1095 = vlaneseq
      %v1096 = vshrl.u32 %v1095, 7
      %v1097 = vsub.s32 %v1094, %v1096
      %v1098 = vrot.slane %v984, %v1097
      %v1100 = vunpack.c.l.s4 1983009808
      %v1101 = vunpack.c.0.s8 %v1100
      %v1102 = vlaneseq
      %v1103 = vshrl.u32 %v1102, 7
      %v1104 = vsub.s32 %v1101, %v1103
      %v1105 = vrot.slane %v1091, %v1104
      %v1106 = vcombine.high %v1098, %v1098
      %v1107 = vcombine.high %v985, %v985
      %v1109 = vunpack.c.l.s4 1983009808
      %v1110 = vunpack.c.0.s8 %v1109
      %v1111 = vlaneseq
      %v1112 = vshrl.u32 %v1111, 7
      %v1113 = vsub.s32 %v1110, %v1112
      %v1114 = vrot.slane %v985, %v1113
      %v1116 = vunpack.c.l.s4 1983009808
      %v1117 = vunpack.c.0.s8 %v1116
      %v1118 = vlaneseq
      %v1119 = vshrl.u32 %v1118, 7
      %v1120 = vsub.s32 %v1117, %v1119
      %v1121 = vrot.slane %v1107, %v1120
      %v1122 = vcombine.high %v1114, %v1114
      %v1123 = vcombine.high %v986, %v986
      %v1125 = vunpack.c.l.s4 1983009808
      %v1126 = vunpack.c.0.s8 %v1125
      %v1127 = vlaneseq
      %v1128 = vshrl.u32 %v1127, 7
      %v1129 = vsub.s32 %v1126, %v1128
      %v1130 = vrot.slane %v986, %v1129
      %v1132 = vunpack.c.l.s4 1983009808
      %v1133 = vunpack.c.0.s8 %v1132
      %v1134 = vlaneseq
      %v1135 = vshrl.u32 %v1134, 7
      %v1136 = vsub.s32 %v1133, %v1135
      %v1137 = vrot.slane %v1123, %v1136
      %v1138 = vcombine.high %v1130, %v1130
      %v1139 = vcombine.high %v987, %v987
      %v1141 = vunpack.c.l.s4 1983009808
      %v1142 = vunpack.c.0.s8 %v1141
      %v1143 = vlaneseq
      %v1144 = vshrl.u32 %v1143, 7
      %v1145 = vsub.s32 %v1142, %v1144
      %v1146 = vrot.slane %v987, %v1145
      %v1148 = vunpack.c.l.s4 1983009808
      %v1149 = vunpack.c.0.s8 %v1148
      %v1150 = vlaneseq
      %v1151 = vshrl.u32 %v1150, 7
      %v1152 = vsub.s32 %v1149, %v1151
      %v1153 = vrot.slane %v1139, %v1152
      %v1154 = vcombine.high %v1146, %v1146
      %v1155 = vcombine.high %v988, %v988
      %v1157 = vunpack.c.l.s4 1983009808
      %v1158 = vunpack.c.0.s8 %v1157
      %v1159 = vlaneseq
      %v1160 = vshrl.u32 %v1159, 7
      %v1161 = vsub.s32 %v1158, %v1160
      %v1162 = vrot.slane %v988, %v1161
      %v1164 = vunpack.c.l.s4 1983009808
      %v1165 = vunpack.c.0.s8 %v1164
      %v1166 = vlaneseq
      %v1167 = vshrl.u32 %v1166, 7
      %v1168 = vsub.s32 %v1165, %v1167
      %v1169 = vrot.slane %v1155, %v1168
      %v1170 = vcombine.high %v1162, %v1162
      %v1171 = vcombine.high %v989, %v989
      %v1173 = vunpack.c.l.s4 1983009808
      %v1174 = vunpack.c.0.s8 %v1173
      %v1175 = vlaneseq
      %v1176 = vshrl.u32 %v1175, 7
      %v1177 = vsub.s32 %v1174, %v1176
      %v1178 = vrot.slane %v989, %v1177
      %v1180 = vunpack.c.l.s4 1983009808
      %v1181 = vunpack.c.0.s8 %v1180
      %v1182 = vlaneseq
      %v1183 = vshrl.u32 %v1182, 7
      %v1184 = vsub.s32 %v1181, %v1183
      %v1185 = vrot.slane %v1171, %v1184
      %v1186 = vcombine.high %v1178, %v1178
      %v1187 = vcombine.high %v990, %v990
      %v1189 = vunpack.c.l.s4 1983009808
      %v1190 = vunpack.c.0.s8 %v1189
      %v1191 = vlaneseq
      %v1192 = vshrl.u32 %v1191, 7
      %v1193 = vsub.s32 %v1190, %v1192
      %v1194 = vrot.slane %v990, %v1193
      %v1196 = vunpack.c.l.s4 1983009808
      %v1197 = vunpack.c.0.s8 %v1196
      %v1198 = vlaneseq
      %v1199 = vshrl.u32 %v1198, 7
      %v1200 = vsub.s32 %v1197, %v1199
      %v1201 = vrot.slane %v1187, %v1200
      %v1202 = vcombine.high %v1194, %v1194
      %v1203 = vcombine.high %v991, %v991
      %v1205 = vunpack.c.l.s4 1983009808
      %v1206 = vunpack.c.0.s8 %v1205
      %v1207 = vlaneseq
      %v1208 = vshrl.u32 %v1207, 7
      %v1209 = vsub.s32 %v1206, %v1208
      %v1210 = vrot.slane %v991, %v1209
      %v1212 = vunpack.c.l.s4 1983009808
      %v1213 = vunpack.c.0.s8 %v1212
      %v1214 = vlaneseq
      %v1215 = vshrl.u32 %v1214, 7
      %v1216 = vsub.s32 %v1213, %v1215
      %v1217 = vrot.slane %v1203, %v1216
      %v1218 = vcombine.high %v1210, %v1210
      %v1219 = vcombine.high %v992, %v992
      %v1221 = vunpack.c.l.s4 1983009808
      %v1222 = vunpack.c.0.s8 %v1221
      %v1223 = vlaneseq
      %v1224 = vshrl.u32 %v1223, 7
      %v1225 = vsub.s32 %v1222, %v1224
      %v1226 = vrot.slane %v992, %v1225
      %v1228 = vunpack.c.l.s4 1983009808
      %v1229 = vunpack.c.0.s8 %v1228
      %v1230 = vlaneseq
      %v1231 = vshrl.u32 %v1230, 7
      %v1232 = vsub.s32 %v1229, %v1231
      %v1233 = vrot.slane %v1219, %v1232
      %v1234 = vcombine.high %v1226, %v1226
      %v1235 = vcombine.high %v993, %v993
      %v1237 = vunpack.c.l.s4 1983009808
      %v1238 = vunpack.c.0.s8 %v1237
      %v1239 = vlaneseq
      %v1240 = vshrl.u32 %v1239, 7
      %v1241 = vsub.s32 %v1238, %v1240
      %v1242 = vrot.slane %v993, %v1241
      %v1244 = vunpack.c.l.s4 1983009808
      %v1245 = vunpack.c.0.s8 %v1244
      %v1246 = vlaneseq
      %v1247 = vshrl.u32 %v1246, 7
      %v1248 = vsub.s32 %v1245, %v1247
      %v1249 = vrot.slane %v1235, %v1248
      %v1250 = vcombine.high %v1242, %v1242
      %v1251 = vcombine.high %v994, %v994
      %v1253 = vunpack.c.l.s4 1983009808
      %v1254 = vunpack.c.0.s8 %v1253
      %v1255 = vlaneseq
      %v1256 = vshrl.u32 %v1255, 7
      %v1257 = vsub.s32 %v1254, %v1256
      %v1258 = vrot.slane %v994, %v1257
      %v1260 = vunpack.c.l.s4 1983009808
      %v1261 = vunpack.c.0.s8 %v1260
      %v1262 = vlaneseq
      %v1263 = vshrl.u32 %v1262, 7
      %v1264 = vsub.s32 %v1261, %v1263
      %v1265 = vrot.slane %v1251, %v1264
      %v1266 = vcombine.high %v1258, %v1258
      %v1267 = vcombine.high %v995, %v995
      %v1269 = vunpack.c.l.s4 1983009808
      %v1270 = vunpack.c.0.s8 %v1269
      %v1271 = vlaneseq
      %v1272 = vshrl.u32 %v1271, 7
      %v1273 = vsub.s32 %v1270, %v1272
      %v1274 = vrot.slane %v995, %v1273
      %v1276 = vunpack.c.l.s4 1983009808
      %v1277 = vunpack.c.0.s8 %v1276
      %v1278 = vlaneseq
      %v1279 = vshrl.u32 %v1278, 7
      %v1280 = vsub.s32 %v1277, %v1279
      %v1281 = vrot.slane %v1267, %v1280
      %v1282 = vcombine.high %v1274, %v1274
      %v1283 = vcombine.high %v996, %v996
      %v1285 = vunpack.c.l.s4 1983009808
      %v1286 = vunpack.c.0.s8 %v1285
      %v1287 = vlaneseq
      %v1288 = vshrl.u32 %v1287, 7
      %v1289 = vsub.s32 %v1286, %v1288
      %v1290 = vrot.slane %v996, %v1289
      %v1292 = vunpack.c.l.s4 1983009808
      %v1293 = vunpack.c.0.s8 %v1292
      %v1294 = vlaneseq
      %v1295 = vshrl.u32 %v1294, 7
      %v1296 = vsub.s32 %v1293, %v1295
      %v1297 = vrot.slane %v1283, %v1296
      %v1298 = vcombine.high %v1290, %v1290
      %v1299 = vcombine.high %v997, %v997
      %v1301 = vunpack.c.l.s4 1983009808
      %v1302 = vunpack.c.0.s8 %v1301
      %v1303 = vlaneseq
      %v1304 = vshrl.u32 %v1303, 7
      %v1305 = vsub.s32 %v1302, %v1304
      %v1306 = vrot.slane %v997, %v1305
      %v1308 = vunpack.c.l.s4 1983009808
      %v1309 = vunpack.c.0.s8 %v1308
      %v1310 = vlaneseq
      %v1311 = vshrl.u32 %v1310, 7
      %v1312 = vsub.s32 %v1309, %v1311
      %v1313 = vrot.slane %v1299, %v1312
      %v1314 = vcombine.high %v1306, %v1306
      %v1315 = vcombine.high %v998, %v998
      %v1317 = vunpack.c.l.s4 1983009808
      %v1318 = vunpack.c.0.s8 %v1317
      %v1319 = vlaneseq
      %v1320 = vshrl.u32 %v1319, 7
      %v1321 = vsub.s32 %v1318, %v1320
      %v1322 = vrot.slane %v998, %v1321
      %v1324 = vunpack.c.l.s4 1983009808
      %v1325 = vunpack.c.0.s8 %v1324
      %v1326 = vlaneseq
      %v1327 = vshrl.u32 %v1326, 7
      %v1328 = vsub.s32 %v1325, %v1327
      %v1329 = vrot.slane %v1315, %v1328
      %v1330 = vcombine.high %v1322, %v1322
      %v1331 = vcombine.high %v999, %v999
      %v1333 = vunpack.c.l.s4 1983009808
      %v1334 = vunpack.c.0.s8 %v1333
      %v1335 = vlaneseq
      %v1336 = vshrl.u32 %v1335, 7
      %v1337 = vsub.s32 %v1334, %v1336
      %v1338 = vrot.slane %v999, %v1337
      %v1340 = vunpack.c.l.s4 1983009808
      %v1341 = vunpack.c.0.s8 %v1340
      %v1342 = vlaneseq
      %v1343 = vshrl.u32 %v1342, 7
      %v1344 = vsub.s32 %v1341, %v1343
      %v1345 = vrot.slane %v1331, %v1344
      %v1346 = vcombine.high %v1338, %v1338
      %v1347 = vcombine.high %v1000, %v1000
      %v1349 = vunpack.c.l.s4 1983009808
      %v1350 = vunpack.c.0.s8 %v1349
      %v1351 = vlaneseq
      %v1352 = vshrl.u32 %v1351, 7
      %v1353 = vsub.s32 %v1350, %v1352
      %v1354 = vrot.slane %v1000, %v1353
      %v1356 = vunpack.c.l.s4 1983009808
      %v1357 = vunpack.c.0.s8 %v1356
      %v1358 = vlaneseq
      %v1359 = vshrl.u32 %v1358, 7
      %v1360 = vsub.s32 %v1357, %v1359
      %v1361 = vrot.slane %v1347, %v1360
      %v1362 = vcombine.high %v1354, %v1354
      %v1363 = vcombine.high %v1001, %v1001
      %v1365 = vunpack.c.l.s4 1983009808
      %v1366 = vunpack.c.0.s8 %v1365
      %v1367 = vlaneseq
      %v1368 = vshrl.u32 %v1367, 7
      %v1369 = vsub.s32 %v1366, %v1368
      %v1370 = vrot.slane %v1001, %v1369
      %v1372 = vunpack.c.l.s4 1983009808
      %v1373 = vunpack.c.0.s8 %v1372
      %v1374 = vlaneseq
      %v1375 = vshrl.u32 %v1374, 7
      %v1376 = vsub.s32 %v1373, %v1375
      %v1377 = vrot.slane %v1363, %v1376
      %v1378 = vcombine.high %v1370, %v1370
      %v1379 = vcombine.high %v1002, %v1002
      %v1381 = vunpack.c.l.s4 1983009808
      %v1382 = vunpack.c.0.s8 %v1381
      %v1383 = vlaneseq
      %v1384 = vshrl.u32 %v1383, 7
      %v1385 = vsub.s32 %v1382, %v1384
      %v1386 = vrot.slane %v1002, %v1385
      %v1388 = vunpack.c.l.s4 1983009808
      %v1389 = vunpack.c.0.s8 %v1388
      %v1390 = vlaneseq
      %v1391 = vshrl.u32 %v1390, 7
      %v1392 = vsub.s32 %v1389, %v1391
      %v1393 = vrot.slane %v1379, %v1392
      %v1394 = vcombine.high %v1386, %v1386
      %v1395 = vcombine.high %v1003, %v1003
      %v1397 = vunpack.c.l.s4 1983009808
      %v1398 = vunpack.c.0.s8 %v1397
      %v1399 = vlaneseq
      %v1400 = vshrl.u32 %v1399, 7
      %v1401 = vsub.s32 %v1398, %v1400
      %v1402 = vrot.slane %v1003, %v1401
      %v1404 = vunpack.c.l.s4 1983009808
      %v1405 = vunpack.c.0.s8 %v1404
      %v1406 = vlaneseq
      %v1407 = vshrl.u32 %v1406, 7
      %v1408 = vsub.s32 %v1405, %v1407
      %v1409 = vrot.slane %v1395, %v1408
      %v1410 = vcombine.high %v1402, %v1402
      %v1411 = vcombine.high %v1004, %v1004
      %v1413 = vunpack.c.l.s4 1983009808
      %v1414 = vunpack.c.0.s8 %v1413
      %v1415 = vlaneseq
      %v1416 = vshrl.u32 %v1415, 7
      %v1417 = vsub.s32 %v1414, %v1416
      %v1418 = vrot.slane %v1004, %v1417
      %v1420 = vunpack.c.l.s4 1983009808
      %v1421 = vunpack.c.0.s8 %v1420
      %v1422 = vlaneseq
      %v1423 = vshrl.u32 %v1422, 7
      %v1424 = vsub.s32 %v1421, %v1423
      %v1425 = vrot.slane %v1411, %v1424
      %v1426 = vcombine.high %v1418, %v1418
      %v1427 = vcombine.high %v1005, %v1005
      %v1429 = vunpack.c.l.s4 1983009808
      %v1430 = vunpack.c.0.s8 %v1429
      %v1431 = vlaneseq
      %v1432 = vshrl.u32 %v1431, 7
      %v1433 = vsub.s32 %v1430, %v1432
      %v1434 = vrot.slane %v1005, %v1433
      %v1436 = vunpack.c.l.s4 1983009808
      %v1437 = vunpack.c.0.s8 %v1436
      %v1438 = vlaneseq
      %v1439 = vshrl.u32 %v1438, 7
      %v1440 = vsub.s32 %v1437, %v1439
      %v1441 = vrot.slane %v1427, %v1440
      %v1442 = vcombine.high %v1434, %v1434
      %v1443 = vcombine.high %v1017, %v1017
      %v1445 = vunpack.c.l.s4 1983009808
      %v1446 = vunpack.c.0.s8 %v1445
      %v1447 = vlaneseq
      %v1448 = vshrl.u32 %v1447, 7
      %v1449 = vsub.s32 %v1446, %v1448
      %v1450 = vrot.slane %v1017, %v1449
      %v1452 = vunpack.c.l.s4 1983009808
      %v1453 = vunpack.c.0.s8 %v1452
      %v1454 = vlaneseq
      %v1455 = vshrl.u32 %v1454, 7
      %v1456 = vsub.s32 %v1453, %v1455
      %v1457 = vrot.slane %v1443, %v1456
      %v1458 = vcombine.high %v1450, %v1450
      %v1459 = vcombine.low %v1050, %v1058
      %v1460 = vcombine.low %v1057, %v1066
      %v1462 = vunpack.c.l.s4 1983009808
      %v1463 = vunpack.c.0.s8 %v1462
      %v1464 = vlaneseq
      %v1465 = vshrl.u32 %v1464, 7
      %v1466 = vsub.s32 %v1463, %v1465
      %v1467 = vrot.slane %v1459, %v1466
      %v1469 = vunpack.c.l.s4 1983009808
      %v1470 = vunpack.c.0.s8 %v1469
      %v1471 = vlaneseq
      %v1472 = vshrl.u32 %v1471, 7
      %v1473 = vsub.s32 %v1470, %v1472
      %v1474 = vrot.slane %v1460, %v1473
      %v1475 = vcombine.low %v1467, %v1474
      %v1476 = vcombine.low %v1074, %v1073
      %v1477 = vcombine.low %v1082, %v1090
      %v1479 = vunpack.c.l.s4 1983009808
      %v1480 = vunpack.c.0.s8 %v1479
      %v1481 = vlaneseq
      %v1482 = vshrl.u32 %v1481, 7
      %v1483 = vsub.s32 %v1480, %v1482
      %v1484 = vrot.slane %v1476, %v1483
      %v1486 = vunpack.c.l.s4 1983009808
      %v1487 = vunpack.c.0.s8 %v1486
      %v1488 = vlaneseq
      %v1489 = vshrl.u32 %v1488, 7
      %v1490 = vsub.s32 %v1487, %v1489
      %v1491 = vrot.slane %v1477, %v1490
      %v1492 = vcombine.low %v1484, %v1491
      %v1493 = vcombine.low %v1089, %v1098
      %v1494 = vcombine.low %v1106, %v1105
      %v1496 = vunpack.c.l.s4 1983009808
      %v1497 = vunpack.c.0.s8 %v1496
      %v1498 = vlaneseq
      %v1499 = vshrl.u32 %v1498, 7
      %v1500 = vsub.s32 %v1497, %v1499
      %v1501 = vrot.slane %v1493, %v1500
      %v1503 = vunpack.c.l.s4 1983009808
      %v1504 = vunpack.c.0.s8 %v1503
      %v1505 = vlaneseq
      %v1506 = vshrl.u32 %v1505, 7
      %v1507 = vsub.s32 %v1504, %v1506
      %v1508 = vrot.slane %v1494, %v1507
      %v1509 = vcombine.low %v1501, %v1508
      %v1510 = vcombine.low %v1114, %v1122
      %v1511 = vcombine.low %v1121, %v1130
      %v1513 = vunpack.c.l.s4 1983009808
      %v1514 = vunpack.c.0.s8 %v1513
      %v1515 = vlaneseq
      %v1516 = vshrl.u32 %v1515, 7
      %v1517 = vsub.s32 %v1514, %v1516
      %v1518 = vrot.slane %v1510, %v1517
      %v1520 = vunpack.c.l.s4 1983009808
      %v1521 = vunpack.c.0.s8 %v1520
      %v1522 = vlaneseq
      %v1523 = vshrl.u32 %v1522, 7
      %v1524 = vsub.s32 %v1521, %v1523
      %v1525 = vrot.slane %v1511, %v1524
      %v1526 = vcombine.low %v1518, %v1525
      %v1527 = vcombine.low %v1138, %v1137
      %v1528 = vcombine.low %v1146, %v1154
      %v1530 = vunpack.c.l.s4 1983009808
      %v1531 = vunpack.c.0.s8 %v1530
      %v1532 = vlaneseq
      %v1533 = vshrl.u32 %v1532, 7
      %v1534 = vsub.s32 %v1531, %v1533
      %v1535 = vrot.slane %v1527, %v1534
      %v1537 = vunpack.c.l.s4 1983009808
      %v1538 = vunpack.c.0.s8 %v1537
      %v1539 = vlaneseq
      %v1540 = vshrl.u32 %v1539, 7
      %v1541 = vsub.s32 %v1538, %v1540
      %v1542 = vrot.slane %v1528, %v1541
      %v1543 = vcombine.low %v1535, %v1542
      %v1544 = vcombine.low %v1153, %v1162
      %v1545 = vcombine.low %v1170, %v1169
      %v1547 = vunpack.c.l.s4 1983009808
      %v1548 = vunpack.c.0.s8 %v1547
      %v1549 = vlaneseq
      %v1550 = vshrl.u32 %v1549, 7
      %v1551 = vsub.s32 %v1548, %v1550
      %v1552 = vrot.slane %v1544, %v1551
      %v1554 = vunpack.c.l.s4 1983009808
      %v1555 = vunpack.c.0.s8 %v1554
      %v1556 = vlaneseq
      %v1557 = vshrl.u32 %v1556, 7
      %v1558 = vsub.s32 %v1555, %v1557
      %v1559 = vrot.slane %v1545, %v1558
      %v1560 = vcombine.low %v1552, %v1559
      %v1561 = vcombine.low %v1178, %v1186
      %v1562 = vcombine.low %v1185, %v1194
      %v1564 = vunpack.c.l.s4 1983009808
      %v1565 = vunpack.c.0.s8 %v1564
      %v1566 = vlaneseq
      %v1567 = vshrl.u32 %v1566, 7
      %v1568 = vsub.s32 %v1565, %v1567
      %v1569 = vrot.slane %v1561, %v1568
      %v1571 = vunpack.c.l.s4 1983009808
      %v1572 = vunpack.c.0.s8 %v1571
      %v1573 = vlaneseq
      %v1574 = vshrl.u32 %v1573, 7
      %v1575 = vsub.s32 %v1572, %v1574
      %v1576 = vrot.slane %v1562, %v1575
      %v1577 = vcombine.low %v1569, %v1576
      %v1578 = vcombine.low %v1202, %v1201
      %v1579 = vcombine.low %v1210, %v1218
      %v1581 = vunpack.c.l.s4 1983009808
      %v1582 = vunpack.c.0.s8 %v1581
      %v1583 = vlaneseq
      %v1584 = vshrl.u32 %v1583, 7
      %v1585 = vsub.s32 %v1582, %v1584
      %v1586 = vrot.slane %v1578, %v1585
      %v1588 = vunpack.c.l.s4 1983009808
      %v1589 = vunpack.c.0.s8 %v1588
      %v1590 = vlaneseq
      %v1591 = vshrl.u32 %v1590, 7
      %v1592 = vsub.s32 %v1589, %v1591
      %v1593 = vrot.slane %v1579, %v1592
      %v1594 = vcombine.low %v1586, %v1593
      %v1595 = vcombine.low %v1217, %v1226
      %v1596 = vcombine.low %v1234, %v1233
      %v1598 = vunpack.c.l.s4 1983009808
      %v1599 = vunpack.c.0.s8 %v1598
      %v1600 = vlaneseq
      %v1601 = vshrl.u32 %v1600, 7
      %v1602 = vsub.s32 %v1599, %v1601
      %v1603 = vrot.slane %v1595, %v1602
      %v1605 = vunpack.c.l.s4 1983009808
      %v1606 = vunpack.c.0.s8 %v1605
      %v1607 = vlaneseq
      %v1608 = vshrl.u32 %v1607, 7
      %v1609 = vsub.s32 %v1606, %v1608
      %v1610 = vrot.slane %v1596, %v1609
      %v1611 = vcombine.low %v1603, %v1610
      %v1612 = vcombine.low %v1242, %v1250
      %v1613 = vcombine.low %v1249, %v1258
      %v1615 = vunpack.c.l.s4 1983009808
      %v1616 = vunpack.c.0.s8 %v1615
      %v1617 = vlaneseq
      %v1618 = vshrl.u32 %v1617, 7
      %v1619 = vsub.s32 %v1616, %v1618
      %v1620 = vrot.slane %v1612, %v1619
      %v1622 = vunpack.c.l.s4 1983009808
      %v1623 = vunpack.c.0.s8 %v1622
      %v1624 = vlaneseq
      %v1625 = vshrl.u32 %v1624, 7
      %v1626 = vsub.s32 %v1623, %v1625
      %v1627 = vrot.slane %v1613, %v1626
      %v1628 = vcombine.low %v1620, %v1627
      %v1629 = vcombine.low %v1266, %v1265
      %v1630 = vcombine.low %v1274, %v1282
      %v1632 = vunpack.c.l.s4 1983009808
      %v1633 = vunpack.c.0.s8 %v1632
      %v1634 = vlaneseq
      %v1635 = vshrl.u32 %v1634, 7
      %v1636 = vsub.s32 %v1633, %v1635
      %v1637 = vrot.slane %v1629, %v1636
      %v1639 = vunpack.c.l.s4 1983009808
      %v1640 = vunpack.c.0.s8 %v1639
      %v1641 = vlaneseq
      %v1642 = vshrl.u32 %v1641, 7
      %v1643 = vsub.s32 %v1640, %v1642
      %v1644 = vrot.slane %v1630, %v1643
      %v1645 = vcombine.low %v1637, %v1644
      %v1646 = vcombine.low %v1281, %v1290
      %v1647 = vcombine.low %v1298, %v1297
      %v1649 = vunpack.c.l.s4 1983009808
      %v1650 = vunpack.c.0.s8 %v1649
      %v1651 = vlaneseq
      %v1652 = vshrl.u32 %v1651, 7
      %v1653 = vsub.s32 %v1650, %v1652
      %v1654 = vrot.slane %v1646, %v1653
      %v1656 = vunpack.c.l.s4 1983009808
      %v1657 = vunpack.c.0.s8 %v1656
      %v1658 = vlaneseq
      %v1659 = vshrl.u32 %v1658, 7
      %v1660 = vsub.s32 %v1657, %v1659
      %v1661 = vrot.slane %v1647, %v1660
      %v1662 = vcombine.low %v1654, %v1661
      %v1663 = vcombine.low %v1306, %v1314
      %v1664 = vcombine.low %v1313, %v1322
      %v1666 = vunpack.c.l.s4 1983009808
      %v1667 = vunpack.c.0.s8 %v1666
      %v1668 = vlaneseq
      %v1669 = vshrl.u32 %v1668, 7
      %v1670 = vsub.s32 %v1667, %v1669
      %v1671 = vrot.slane %v1663, %v1670
      %v1673 = vunpack.c.l.s4 1983009808
      %v1674 = vunpack.c.0.s8 %v1673
      %v1675 = vlaneseq
      %v1676 = vshrl.u32 %v1675, 7
      %v1677 = vsub.s32 %v1674, %v1676
      %v1678 = vrot.slane %v1664, %v1677
      %v1679 = vcombine.low %v1671, %v1678
      %v1680 = vcombine.low %v1330, %v1329
      %v1681 = vcombine.low %v1338, %v1346
      %v1683 = vunpack.c.l.s4 1983009808
      %v1684 = vunpack.c.0.s8 %v1683
      %v1685 = vlaneseq
      %v1686 = vshrl.u32 %v1685, 7
      %v1687 = vsub.s32 %v1684, %v1686
      %v1688 = vrot.slane %v1680, %v1687
      %v1690 = vunpack.c.l.s4 1983009808
      %v1691 = vunpack.c.0.s8 %v1690
      %v1692 = vlaneseq
      %v1693 = vshrl.u32 %v1692, 7
      %v1694 = vsub.s32 %v1691, %v1693
      %v1695 = vrot.slane %v1681, %v1694
      %v1696 = vcombine.low %v1688, %v1695
      %v1697 = vcombine.low %v1345, %v1354
      %v1698 = vcombine.low %v1362, %v1361
      %v1700 = vunpack.c.l.s4 1983009808
      %v1701 = vunpack.c.0.s8 %v1700
      %v1702 = vlaneseq
      %v1703 = vshrl.u32 %v1702, 7
      %v1704 = vsub.s32 %v1701, %v1703
      %v1705 = vrot.slane %v1697, %v1704
      %v1707 = vunpack.c.l.s4 1983009808
      %v1708 = vunpack.c.0.s8 %v1707
      %v1709 = vlaneseq
      %v1710 = vshrl.u32 %v1709, 7
      %v1711 = vsub.s32 %v1708, %v1710
      %v1712 = vrot.slane %v1698, %v1711
      %v1713 = vcombine.low %v1705, %v1712
      %v1714 = vcombine.low %v1370, %v1378
      %v1715 = vcombine.low %v1377, %v1386
      %v1717 = vunpack.c.l.s4 1983009808
      %v1718 = vunpack.c.0.s8 %v1717
      %v1719 = vlaneseq
      %v1720 = vshrl.u32 %v1719, 7
      %v1721 = vsub.s32 %v1718, %v1720
      %v1722 = vrot.slane %v1714, %v1721
      %v1724 = vunpack.c.l.s4 1983009808
      %v1725 = vunpack.c.0.s8 %v1724
      %v1726 = vlaneseq
      %v1727 = vshrl.u32 %v1726, 7
      %v1728 = vsub.s32 %v1725, %v1727
      %v1729 = vrot.slane %v1715, %v1728
      %v1730 = vcombine.low %v1722, %v1729
      %v1731 = vcombine.low %v1394, %v1393
      %v1732 = vcombine.low %v1402, %v1410
      %v1734 = vunpack.c.l.s4 1983009808
      %v1735 = vunpack.c.0.s8 %v1734
      %v1736 = vlaneseq
      %v1737 = vshrl.u32 %v1736, 7
      %v1738 = vsub.s32 %v1735, %v1737
      %v1739 = vrot.slane %v1731, %v1738
      %v1741 = vunpack.c.l.s4 1983009808
      %v1742 = vunpack.c.0.s8 %v1741
      %v1743 = vlaneseq
      %v1744 = vshrl.u32 %v1743, 7
      %v1745 = vsub.s32 %v1742, %v1744
      %v1746 = vrot.slane %v1732, %v1745
      %v1747 = vcombine.low %v1739, %v1746
      %v1748 = vcombine.low %v1409, %v1418
      %v1749 = vcombine.low %v1426, %v1425
      %v1751 = vunpack.c.l.s4 1983009808
      %v1752 = vunpack.c.0.s8 %v1751
      %v1753 = vlaneseq
      %v1754 = vshrl.u32 %v1753, 7
      %v1755 = vsub.s32 %v1752, %v1754
      %v1756 = vrot.slane %v1748, %v1755
      %v1758 = vunpack.c.l.s4 1983009808
      %v1759 = vunpack.c.0.s8 %v1758
      %v1760 = vlaneseq
      %v1761 = vshrl.u32 %v1760, 7
      %v1762 = vsub.s32 %v1759, %v1761
      %v1763 = vrot.slane %v1749, %v1762
      %v1764 = vcombine.low %v1756, %v1763
      %v1765 = vcombine.low %v1434, %v1442
      %v1767 = vunpack.c.l.s4 1983009808
      %v1768 = vunpack.c.0.s8 %v1767
      %v1769 = vlaneseq
      %v1770 = vshrl.u32 %v1769, 7
      %v1771 = vsub.s32 %v1768, %v1770
      %v1772 = vrot.slane %v1765, %v1771
      %v1774 = vunpack.c.l.s4 1983009808
      %v1775 = vunpack.c.0.s8 %v1774
      %v1776 = vlaneseq
      %v1777 = vshrl.u32 %v1776, 7
      %v1778 = vsub.s32 %v1775, %v1777
      %v1779 = vrot.slane %v1441, %v1778
      %v1780 = vcombine.low %v1772, %v1779
      %v1781 = vcombine.low %v1450, %v1458
      %v1782 = vcombine.low %v1457, %v1450
      %v1784 = vunpack.c.l.s4 1983009808
      %v1785 = vunpack.c.0.s8 %v1784
      %v1786 = vlaneseq
      %v1787 = vshrl.u32 %v1786, 7
      %v1788 = vsub.s32 %v1785, %v1787
      %v1789 = vrot.slane %v1781, %v1788
      %v1791 = vunpack.c.l.s4 1983009808
      %v1792 = vunpack.c.0.s8 %v1791
      %v1793 = vlaneseq
      %v1794 = vshrl.u32 %v1793, 7
      %v1795 = vsub.s32 %v1792, %v1794
      %v1796 = vrot.slane %v1782, %v1795
      %v1797 = vcombine.low %v1789, %v1796
      %v1798 = vcombine.low %v1458, %v1457
      %v1800 = vunpack.c.l.s4 1983009808
      %v1801 = vunpack.c.0.s8 %v1800
      %v1802 = vlaneseq
      %v1803 = vshrl.u32 %v1802, 7
      %v1804 = vsub.s32 %v1801, %v1803
      %v1805 = vrot.slane %v1798, %v1804
      %v1806 = vcombine.low %v1805, %v1789
      %v1807 = vcombine.low %v1796, %v1805
      %v1809 = vunpack.c.l.s4 1983009808
      %v1810 = vunpack.c.0.s8 %v1809
      %v1811 = vlaneseq
      %v1812 = vshrl.u32 %v1811, 7
      %v1813 = vsub.s32 %v1810, %v1812
      %v1814 = vrot.slane %v1457, %v1813
      %v1815 = vcombine.low %v1789, %v1814
      %vm1820 = vcmask 392192
      %v1821 = vsel %vm1820, %v1475, 0
      %v1823 = vsel %vm1820, %v1492, 0
      %v1825 = vsel %vm1820, %v1509, 0
      %v1827 = vsel %vm1820, %v1526, 0
      %v1829 = vsel %vm1820, %v1543, 0
      %v1831 = vsel %vm1820, %v1560, 0
      %v1833 = vsel %vm1820, %v1577, 0
      %v1835 = vsel %vm1820, %v1594, 0
      %v1837 = vsel %vm1820, %v1611, 0
      %v1839 = vsel %vm1820, %v1628, 0
      %v1841 = vsel %vm1820, %v1645, 0
      %v1843 = vsel %vm1820, %v1662, 0
      %v1845 = vsel %vm1820, %v1679, 0
      %v1847 = vsel %vm1820, %v1696, 0
      %v1849 = vsel %vm1820, %v1713, 0
      %v1851 = vsel %vm1820, %v1730, 0
      %v1853 = vsel %vm1820, %v1747, 0
      %v1855 = vsel %vm1820, %v1764, 0
      %v1857 = vsel %vm1820, %v1780, 0
      %1859 = vmatprep.subr.mxu0 0.0
      %1860 = vmatpush1.msra.mxu0 0.0
      %1861 = vmatprep.subr.mxu0 0.0
      %1862 = vmatpush1.msra.mxu0 0.0
      %1863 = vmatprep.subr.mxu0 0.0
      %1864 = vmatpush1.msra.mxu0 0.0
      %1865 = vmatprep.subr.mxu0 0.0
      %1866 = vmatpush1.msra.mxu0 0.0
      %1867 = vmatprep.subr.mxu0 0.0
      %1868 = vmatpush1.msra.mxu0 0.0
      %1869 = vmatprep.subr.mxu0 0.0
      %1870 = vmatpush1.msra.mxu0 0.0
      %1871 = vmatprep.subr.mxu0 0.0
      %1872 = vmatpush1.msra.mxu0 0.0
      %1873 = vmatprep.subr.mxu0 0.0
      %1874 = vmatpush1.msra.mxu0 0.0
      %1875 = vmatprep.subr.mxu0 0.0
      %1876 = vmatpush1.msra.mxu0 0.0
      %1877 = vmatprep.subr.mxu0 0.0
      %1878 = vmatpush1.msra.mxu0 0.0
      %1879 = vmatprep.subr.mxu0 0.0
      %1880 = vmatpush1.msra.mxu0 %v1011
      %1881 = vmatprep.subr.mxu0 0.0
      %1882 = vmatpush1.msra.mxu0 %v1010
      %1883 = vmatprep.subr.mxu0 0.0
      %1884 = vmatpush1.msra.mxu0 %v1009
      %1885 = vmatprep.subr.mxu0 0.0
      %1886 = vmatpush1.msra.mxu0 %v1008
      %1887 = vmatprep.subr.mxu0 0.0
      %1888 = vmatpush1.msra.mxu0 %v1007
      %1889 = vmatprep.subr.mxu0 0.0
      %1890 = vmatpush1.msra.mxu0 %v1006
      %1891 = vmatprep.subr.mxu0 0.0
      %1892 = vmatpush2.msra.mxu0 0.0
      %1893 = vmatprep.subr.mxu0 0.0
      %1894 = vmatpush2.msra.mxu0 0.0
      %1895 = vmatprep.subr.mxu0 0.0
      %1896 = vmatpush2.msra.mxu0 0.0
      %1897 = vmatprep.subr.mxu0 0.0
      %1898 = vmatpush2.msra.mxu0 0.0
      %1899 = vmatprep.subr.mxu0 0.0
      %1900 = vmatpush2.msra.mxu0 0.0
      %1901 = vmatprep.subr.mxu0 0.0
      %1902 = vmatpush2.msra.mxu0 0.0
      %1903 = vmatprep.subr.mxu0 0.0
      %1904 = vmatpush2.msra.mxu0 0.0
      %1905 = vmatprep.subr.mxu0 0.0
      %1906 = vmatpush2.msra.mxu0 0.0
      %1907 = vmatprep.subr.mxu0 0.0
      %1908 = vmatpush2.msra.mxu0 0.0
      %1909 = vmatprep.subr.mxu0 0.0
      %1910 = vmatpush2.msra.mxu0 0.0
      %1911 = vmatprep.subr.mxu0 0.0
      %1912 = vmatpush2.msra.mxu0 0.0
      %1913 = vmatprep.subr.mxu0 0.0
      %1914 = vmatpush2.msra.mxu0 0.0
      %1915 = vmatprep.subr.mxu0 0.0
      %1916 = vmatpush2.msra.mxu0 0.0
      %1917 = vmatprep.subr.mxu0 0.0
      %1918 = vmatpush2.msra.mxu0 0.0
      %1919 = vmatprep.subr.mxu0 0.0
      %1920 = vmatpush2.msra.mxu0 0.0
      %1921 = vmatprep.subr.mxu0 0.0
      %1922 = vmatpush2.msra.mxu0 0.0
      %1923 = vmatprep.mubr.f32.mxu0 0.0
      %1924 = vmatmul.mubr.f32.gmra.mxu0 %v1821
      %v1925 = vpop.f32.mrf.mxu0
      %v1926 = vadd.f32 %v1797, %v1925
      %v1927 = vpop.f32.mrf.mxu0
      %1928 = vmatprep.mubr.f32.mxu0 0.0
      %1929 = vmatmul.mubr.f32.gmra.mxu0 %v1823
      %v1930 = vpop.f32.mrf.mxu0
      %v1931 = vadd.f32 %v1806, %v1930
      %v1932 = vpop.f32.mrf.mxu0
      %1933 = vmatprep.mubr.f32.mxu0 0.0
      %1934 = vmatmul.mubr.f32.gmra.mxu0 %v1825
      %v1935 = vpop.f32.mrf.mxu0
      %v1936 = vadd.f32 %v1807, %v1935
      %v1937 = vpop.f32.mrf.mxu0
      %1938 = vmatprep.mubr.f32.mxu0 0.0
      %1939 = vmatmul.mubr.f32.gmra.mxu0 %v1827
      %v1940 = vpop.f32.mrf.mxu0
      %v1941 = vadd.f32 %v1797, %v1940
      %v1942 = vpop.f32.mrf.mxu0
      %1943 = vmatprep.mubr.f32.mxu0 0.0
      %1944 = vmatmul.mubr.f32.gmra.mxu0 %v1829
      %v1945 = vpop.f32.mrf.mxu0
      %v1946 = vadd.f32 %v1806, %v1945
      %v1947 = vpop.f32.mrf.mxu0
      %1948 = vmatprep.mubr.f32.mxu0 0.0
      %1949 = vmatmul.mubr.f32.gmra.mxu0 %v1831
      %v1950 = vpop.f32.mrf.mxu0
      %v1951 = vadd.f32 %v1807, %v1950
      %v1952 = vpop.f32.mrf.mxu0
      %1953 = vmatprep.mubr.f32.mxu0 0.0
      %1954 = vmatmul.mubr.f32.gmra.mxu0 %v1833
      %v1955 = vpop.f32.mrf.mxu0
      %v1956 = vadd.f32 %v1797, %v1955
      %v1957 = vpop.f32.mrf.mxu0
      %1958 = vmatprep.mubr.f32.mxu0 0.0
      %1959 = vmatmul.mubr.f32.gmra.mxu0 %v1835
      %v1960 = vpop.f32.mrf.mxu0
      %v1961 = vadd.f32 %v1806, %v1960
      %v1962 = vpop.f32.mrf.mxu0
      %1963 = vmatprep.mubr.f32.mxu0 0.0
      %1964 = vmatmul.mubr.f32.gmra.mxu0 %v1837
      %v1965 = vpop.f32.mrf.mxu0
      %v1966 = vadd.f32 %v1807, %v1965
      %v1967 = vpop.f32.mrf.mxu0
      %1968 = vmatprep.mubr.f32.mxu0 0.0
      %1969 = vmatmul.mubr.f32.gmra.mxu0 %v1839
      %v1970 = vpop.f32.mrf.mxu0
      %v1971 = vadd.f32 %v1797, %v1970
      %v1972 = vpop.f32.mrf.mxu0
      %1973 = vmatprep.mubr.f32.mxu0 0.0
      %1974 = vmatmul.mubr.f32.gmra.mxu0 %v1841
      %v1975 = vpop.f32.mrf.mxu0
      %v1976 = vadd.f32 %v1806, %v1975
      %v1977 = vpop.f32.mrf.mxu0
      %1978 = vmatprep.mubr.f32.mxu0 0.0
      %1979 = vmatmul.mubr.f32.gmra.mxu0 %v1843
      %v1980 = vpop.f32.mrf.mxu0
      %v1981 = vadd.f32 %v1807, %v1980
      %v1982 = vpop.f32.mrf.mxu0
      %1983 = vmatprep.mubr.f32.mxu0 0.0
      %1984 = vmatmul.mubr.f32.gmra.mxu0 %v1845
      %v1985 = vpop.f32.mrf.mxu0
      %v1986 = vadd.f32 %v1797, %v1985
      %v1987 = vpop.f32.mrf.mxu0
      %1988 = vmatprep.mubr.f32.mxu0 0.0
      %1989 = vmatmul.mubr.f32.gmra.mxu0 %v1847
      %v1990 = vpop.f32.mrf.mxu0
      %v1991 = vadd.f32 %v1806, %v1990
      %v1992 = vpop.f32.mrf.mxu0
      %1993 = vmatprep.mubr.f32.mxu0 0.0
      %1994 = vmatmul.mubr.f32.gmra.mxu0 %v1849
      %v1995 = vpop.f32.mrf.mxu0
      %v1996 = vadd.f32 %v1807, %v1995
      %v1997 = vpop.f32.mrf.mxu0
      %1998 = vmatprep.mubr.f32.mxu0 0.0
      %1999 = vmatmul.mubr.f32.gmra.mxu0 %v1851
      %v2000 = vpop.f32.mrf.mxu0
      %v2001 = vadd.f32 %v1797, %v2000
      %v2002 = vpop.f32.mrf.mxu0
      %2003 = vmatprep.mubr.f32.mxu0 0.0
      %2004 = vmatmul.mubr.f32.gmra.mxu0 %v1853
      %v2005 = vpop.f32.mrf.mxu0
      %v2006 = vadd.f32 %v1806, %v2005
      %v2007 = vpop.f32.mrf.mxu0
      %2008 = vmatprep.mubr.f32.mxu0 0.0
      %2009 = vmatmul.mubr.f32.gmra.mxu0 %v1855
      %v2010 = vpop.f32.mrf.mxu0
      %v2011 = vadd.f32 %v1807, %v2010
      %v2012 = vpop.f32.mrf.mxu0
      %2013 = vmatprep.mubr.f32.mxu0 0.0
      %2014 = vmatmul.mubr.f32.gmra.mxu0 %v1857
      %v2015 = vpop.f32.mrf.mxu0
      %v2016 = vadd.f32 %v1815, %v2015
      %v2017 = vpop.f32.mrf.mxu0
      %2018 = vdwg.mxu0
      %v2038 = vcombine.high %v1926, %v1926
      %v2040 = vunpack.c.l.s4 1983009808
      %v2041 = vunpack.c.0.s8 %v2040
      %v2042 = vlaneseq
      %v2043 = vshrl.u32 %v2042, 7
      %v2044 = vsub.s32 %v2041, %v2043
      %v2045 = vrot.slane %v1926, %v2044
      %v2047 = vunpack.c.l.s4 1983009808
      %v2048 = vunpack.c.0.s8 %v2047
      %v2049 = vlaneseq
      %v2050 = vshrl.u32 %v2049, 7
      %v2051 = vsub.s32 %v2048, %v2050
      %v2052 = vrot.slane %v2038, %v2051
      %v2053 = vcombine.high %v2045, %v2045
      %v2054 = vcombine.high %v2052, %v2052
      %v2055 = vcombine.high %v1931, %v1931
      %v2057 = vunpack.c.l.s4 1983009808
      %v2058 = vunpack.c.0.s8 %v2057
      %v2059 = vlaneseq
      %v2060 = vshrl.u32 %v2059, 7
      %v2061 = vsub.s32 %v2058, %v2060
      %v2062 = vrot.slane %v1931, %v2061
      %v2064 = vunpack.c.l.s4 1983009808
      %v2065 = vunpack.c.0.s8 %v2064
      %v2066 = vlaneseq
      %v2067 = vshrl.u32 %v2066, 7
      %v2068 = vsub.s32 %v2065, %v2067
      %v2069 = vrot.slane %v2055, %v2068
      %v2070 = vcombine.high %v2062, %v2062
      %v2071 = vcombine.high %v2069, %v2069
      %v2072 = vcombine.high %v1936, %v1936
      %v2074 = vunpack.c.l.s4 1983009808
      %v2075 = vunpack.c.0.s8 %v2074
      %v2076 = vlaneseq
      %v2077 = vshrl.u32 %v2076, 7
      %v2078 = vsub.s32 %v2075, %v2077
      %v2079 = vrot.slane %v1936, %v2078
      %v2081 = vunpack.c.l.s4 1983009808
      %v2082 = vunpack.c.0.s8 %v2081
      %v2083 = vlaneseq
      %v2084 = vshrl.u32 %v2083, 7
      %v2085 = vsub.s32 %v2082, %v2084
      %v2086 = vrot.slane %v2072, %v2085
      %v2087 = vcombine.high %v2079, %v2079
      %v2088 = vcombine.high %v2086, %v2086
      %v2089 = vcombine.high %v1941, %v1941
      %v2091 = vunpack.c.l.s4 1983009808
      %v2092 = vunpack.c.0.s8 %v2091
      %v2093 = vlaneseq
      %v2094 = vshrl.u32 %v2093, 7
      %v2095 = vsub.s32 %v2092, %v2094
      %v2096 = vrot.slane %v1941, %v2095
      %v2098 = vunpack.c.l.s4 1983009808
      %v2099 = vunpack.c.0.s8 %v2098
      %v2100 = vlaneseq
      %v2101 = vshrl.u32 %v2100, 7
      %v2102 = vsub.s32 %v2099, %v2101
      %v2103 = vrot.slane %v2089, %v2102
      %v2104 = vcombine.high %v2096, %v2096
      %v2105 = vcombine.high %v2103, %v2103
      %v2106 = vcombine.high %v1946, %v1946
      %v2108 = vunpack.c.l.s4 1983009808
      %v2109 = vunpack.c.0.s8 %v2108
      %v2110 = vlaneseq
      %v2111 = vshrl.u32 %v2110, 7
      %v2112 = vsub.s32 %v2109, %v2111
      %v2113 = vrot.slane %v1946, %v2112
      %v2115 = vunpack.c.l.s4 1983009808
      %v2116 = vunpack.c.0.s8 %v2115
      %v2117 = vlaneseq
      %v2118 = vshrl.u32 %v2117, 7
      %v2119 = vsub.s32 %v2116, %v2118
      %v2120 = vrot.slane %v2106, %v2119
      %v2121 = vcombine.high %v2113, %v2113
      %v2122 = vcombine.high %v2120, %v2120
      %v2123 = vcombine.high %v1951, %v1951
      %v2125 = vunpack.c.l.s4 1983009808
      %v2126 = vunpack.c.0.s8 %v2125
      %v2127 = vlaneseq
      %v2128 = vshrl.u32 %v2127, 7
      %v2129 = vsub.s32 %v2126, %v2128
      %v2130 = vrot.slane %v1951, %v2129
      %v2132 = vunpack.c.l.s4 1983009808
      %v2133 = vunpack.c.0.s8 %v2132
      %v2134 = vlaneseq
      %v2135 = vshrl.u32 %v2134, 7
      %v2136 = vsub.s32 %v2133, %v2135
      %v2137 = vrot.slane %v2123, %v2136
      %v2138 = vcombine.high %v2130, %v2130
      %v2139 = vcombine.high %v2137, %v2137
      %v2140 = vcombine.high %v1956, %v1956
      %v2142 = vunpack.c.l.s4 1983009808
      %v2143 = vunpack.c.0.s8 %v2142
      %v2144 = vlaneseq
      %v2145 = vshrl.u32 %v2144, 7
      %v2146 = vsub.s32 %v2143, %v2145
      %v2147 = vrot.slane %v1956, %v2146
      %v2149 = vunpack.c.l.s4 1983009808
      %v2150 = vunpack.c.0.s8 %v2149
      %v2151 = vlaneseq
      %v2152 = vshrl.u32 %v2151, 7
      %v2153 = vsub.s32 %v2150, %v2152
      %v2154 = vrot.slane %v2140, %v2153
      %v2155 = vcombine.high %v2147, %v2147
      %v2156 = vcombine.high %v2154, %v2154
      %v2157 = vcombine.high %v1961, %v1961
      %v2159 = vunpack.c.l.s4 1983009808
      %v2160 = vunpack.c.0.s8 %v2159
      %v2161 = vlaneseq
      %v2162 = vshrl.u32 %v2161, 7
      %v2163 = vsub.s32 %v2160, %v2162
      %v2164 = vrot.slane %v1961, %v2163
      %v2166 = vunpack.c.l.s4 1983009808
      %v2167 = vunpack.c.0.s8 %v2166
      %v2168 = vlaneseq
      %v2169 = vshrl.u32 %v2168, 7
      %v2170 = vsub.s32 %v2167, %v2169
      %v2171 = vrot.slane %v2157, %v2170
      %v2172 = vcombine.high %v2164, %v2164
      %v2173 = vcombine.high %v2171, %v2171
      %v2174 = vcombine.high %v1966, %v1966
      %v2176 = vunpack.c.l.s4 1983009808
      %v2177 = vunpack.c.0.s8 %v2176
      %v2178 = vlaneseq
      %v2179 = vshrl.u32 %v2178, 7
      %v2180 = vsub.s32 %v2177, %v2179
      %v2181 = vrot.slane %v1966, %v2180
      %v2183 = vunpack.c.l.s4 1983009808
      %v2184 = vunpack.c.0.s8 %v2183
      %v2185 = vlaneseq
      %v2186 = vshrl.u32 %v2185, 7
      %v2187 = vsub.s32 %v2184, %v2186
      %v2188 = vrot.slane %v2174, %v2187
      %v2189 = vcombine.high %v2181, %v2181
      %v2190 = vcombine.high %v2188, %v2188
      %v2191 = vcombine.high %v1971, %v1971
      %v2193 = vunpack.c.l.s4 1983009808
      %v2194 = vunpack.c.0.s8 %v2193
      %v2195 = vlaneseq
      %v2196 = vshrl.u32 %v2195, 7
      %v2197 = vsub.s32 %v2194, %v2196
      %v2198 = vrot.slane %v1971, %v2197
      %v2200 = vunpack.c.l.s4 1983009808
      %v2201 = vunpack.c.0.s8 %v2200
      %v2202 = vlaneseq
      %v2203 = vshrl.u32 %v2202, 7
      %v2204 = vsub.s32 %v2201, %v2203
      %v2205 = vrot.slane %v2191, %v2204
      %v2206 = vcombine.high %v2198, %v2198
      %v2207 = vcombine.high %v2205, %v2205
      %v2208 = vcombine.high %v1976, %v1976
      %v2210 = vunpack.c.l.s4 1983009808
      %v2211 = vunpack.c.0.s8 %v2210
      %v2212 = vlaneseq
      %v2213 = vshrl.u32 %v2212, 7
      %v2214 = vsub.s32 %v2211, %v2213
      %v2215 = vrot.slane %v1976, %v2214
      %v2217 = vunpack.c.l.s4 1983009808
      %v2218 = vunpack.c.0.s8 %v2217
      %v2219 = vlaneseq
      %v2220 = vshrl.u32 %v2219, 7
      %v2221 = vsub.s32 %v2218, %v2220
      %v2222 = vrot.slane %v2208, %v2221
      %v2223 = vcombine.high %v2215, %v2215
      %v2224 = vcombine.high %v2222, %v2222
      %v2225 = vcombine.high %v1981, %v1981
      %v2227 = vunpack.c.l.s4 1983009808
      %v2228 = vunpack.c.0.s8 %v2227
      %v2229 = vlaneseq
      %v2230 = vshrl.u32 %v2229, 7
      %v2231 = vsub.s32 %v2228, %v2230
      %v2232 = vrot.slane %v1981, %v2231
      %v2234 = vunpack.c.l.s4 1983009808
      %v2235 = vunpack.c.0.s8 %v2234
      %v2236 = vlaneseq
      %v2237 = vshrl.u32 %v2236, 7
      %v2238 = vsub.s32 %v2235, %v2237
      %v2239 = vrot.slane %v2225, %v2238
      %v2240 = vcombine.high %v2232, %v2232
      %v2241 = vcombine.high %v2239, %v2239
      %v2242 = vcombine.high %v1986, %v1986
      %v2244 = vunpack.c.l.s4 1983009808
      %v2245 = vunpack.c.0.s8 %v2244
      %v2246 = vlaneseq
      %v2247 = vshrl.u32 %v2246, 7
      %v2248 = vsub.s32 %v2245, %v2247
      %v2249 = vrot.slane %v1986, %v2248
      %v2251 = vunpack.c.l.s4 1983009808
      %v2252 = vunpack.c.0.s8 %v2251
      %v2253 = vlaneseq
      %v2254 = vshrl.u32 %v2253, 7
      %v2255 = vsub.s32 %v2252, %v2254
      %v2256 = vrot.slane %v2242, %v2255
      %v2257 = vcombine.high %v2249, %v2249
      %v2258 = vcombine.high %v2256, %v2256
      %v2259 = vcombine.high %v1991, %v1991
      %v2261 = vunpack.c.l.s4 1983009808
      %v2262 = vunpack.c.0.s8 %v2261
      %v2263 = vlaneseq
      %v2264 = vshrl.u32 %v2263, 7
      %v2265 = vsub.s32 %v2262, %v2264
      %v2266 = vrot.slane %v1991, %v2265
      %v2268 = vunpack.c.l.s4 1983009808
      %v2269 = vunpack.c.0.s8 %v2268
      %v2270 = vlaneseq
      %v2271 = vshrl.u32 %v2270, 7
      %v2272 = vsub.s32 %v2269, %v2271
      %v2273 = vrot.slane %v2259, %v2272
      %v2274 = vcombine.high %v2266, %v2266
      %v2275 = vcombine.high %v2273, %v2273
      %v2276 = vcombine.high %v1996, %v1996
      %v2278 = vunpack.c.l.s4 1983009808
      %v2279 = vunpack.c.0.s8 %v2278
      %v2280 = vlaneseq
      %v2281 = vshrl.u32 %v2280, 7
      %v2282 = vsub.s32 %v2279, %v2281
      %v2283 = vrot.slane %v1996, %v2282
      %v2285 = vunpack.c.l.s4 1983009808
      %v2286 = vunpack.c.0.s8 %v2285
      %v2287 = vlaneseq
      %v2288 = vshrl.u32 %v2287, 7
      %v2289 = vsub.s32 %v2286, %v2288
      %v2290 = vrot.slane %v2276, %v2289
      %v2291 = vcombine.high %v2283, %v2283
      %v2292 = vcombine.high %v2290, %v2290
      %v2293 = vcombine.high %v2001, %v2001
      %v2295 = vunpack.c.l.s4 1983009808
      %v2296 = vunpack.c.0.s8 %v2295
      %v2297 = vlaneseq
      %v2298 = vshrl.u32 %v2297, 7
      %v2299 = vsub.s32 %v2296, %v2298
      %v2300 = vrot.slane %v2001, %v2299
      %v2302 = vunpack.c.l.s4 1983009808
      %v2303 = vunpack.c.0.s8 %v2302
      %v2304 = vlaneseq
      %v2305 = vshrl.u32 %v2304, 7
      %v2306 = vsub.s32 %v2303, %v2305
      %v2307 = vrot.slane %v2293, %v2306
      %v2308 = vcombine.high %v2300, %v2300
      %v2309 = vcombine.high %v2307, %v2307
      %v2310 = vcombine.high %v2006, %v2006
      %v2312 = vunpack.c.l.s4 1983009808
      %v2313 = vunpack.c.0.s8 %v2312
      %v2314 = vlaneseq
      %v2315 = vshrl.u32 %v2314, 7
      %v2316 = vsub.s32 %v2313, %v2315
      %v2317 = vrot.slane %v2006, %v2316
      %v2319 = vunpack.c.l.s4 1983009808
      %v2320 = vunpack.c.0.s8 %v2319
      %v2321 = vlaneseq
      %v2322 = vshrl.u32 %v2321, 7
      %v2323 = vsub.s32 %v2320, %v2322
      %v2324 = vrot.slane %v2310, %v2323
      %v2325 = vcombine.high %v2317, %v2317
      %v2326 = vcombine.high %v2324, %v2324
      %v2327 = vcombine.high %v2011, %v2011
      %v2329 = vunpack.c.l.s4 1983009808
      %v2330 = vunpack.c.0.s8 %v2329
      %v2331 = vlaneseq
      %v2332 = vshrl.u32 %v2331, 7
      %v2333 = vsub.s32 %v2330, %v2332
      %v2334 = vrot.slane %v2011, %v2333
      %v2336 = vunpack.c.l.s4 1983009808
      %v2337 = vunpack.c.0.s8 %v2336
      %v2338 = vlaneseq
      %v2339 = vshrl.u32 %v2338, 7
      %v2340 = vsub.s32 %v2337, %v2339
      %v2341 = vrot.slane %v2327, %v2340
      %v2342 = vcombine.high %v2334, %v2334
      %v2343 = vcombine.high %v2341, %v2341
      %v2344 = vcombine.high %v2016, %v2016
      %v2346 = vunpack.c.l.s4 1983009808
      %v2347 = vunpack.c.0.s8 %v2346
      %v2348 = vlaneseq
      %v2349 = vshrl.u32 %v2348, 7
      %v2350 = vsub.s32 %v2347, %v2349
      %v2351 = vrot.slane %v2016, %v2350
      %v2353 = vunpack.c.l.s4 1983009808
      %v2354 = vunpack.c.0.s8 %v2353
      %v2355 = vlaneseq
      %v2356 = vshrl.u32 %v2355, 7
      %v2357 = vsub.s32 %v2354, %v2356
      %v2358 = vrot.slane %v2344, %v2357
      %v2359 = vcombine.high %v2351, %v2351
      %v2435 = vmax.f32 %v2045, 0.0
      %v2436 = vmax.f32 %v2053, 0.0
      %v2437 = vmax.f32 %v2052, 0.0
      %v2438 = vmax.f32 %v2054, 0.0
      %v2439 = vmax.f32 %v2062, 0.0
      %v2440 = vmax.f32 %v2070, 0.0
      %v2441 = vmax.f32 %v2069, 0.0
      %v2442 = vmax.f32 %v2071, 0.0
      %v2443 = vmax.f32 %v2079, 0.0
      %v2444 = vmax.f32 %v2087, 0.0
      %v2445 = vmax.f32 %v2086, 0.0
      %v2446 = vmax.f32 %v2088, 0.0
      %v2447 = vmax.f32 %v2096, 0.0
      %v2448 = vmax.f32 %v2104, 0.0
      %v2449 = vmax.f32 %v2103, 0.0
      %v2450 = vmax.f32 %v2105, 0.0
      %v2451 = vmax.f32 %v2113, 0.0
      %v2452 = vmax.f32 %v2121, 0.0
      %v2453 = vmax.f32 %v2120, 0.0
      %v2454 = vmax.f32 %v2122, 0.0
      %v2455 = vmax.f32 %v2130, 0.0
      %v2456 = vmax.f32 %v2138, 0.0
      %v2457 = vmax.f32 %v2137, 0.0
      %v2458 = vmax.f32 %v2139, 0.0
      %v2459 = vmax.f32 %v2147, 0.0
      %v2460 = vmax.f32 %v2155, 0.0
      %v2461 = vmax.f32 %v2154, 0.0
      %v2462 = vmax.f32 %v2156, 0.0
      %v2463 = vmax.f32 %v2164, 0.0
      %v2464 = vmax.f32 %v2172, 0.0
      %v2465 = vmax.f32 %v2171, 0.0
      %v2466 = vmax.f32 %v2173, 0.0
      %v2467 = vmax.f32 %v2181, 0.0
      %v2468 = vmax.f32 %v2189, 0.0
      %v2469 = vmax.f32 %v2188, 0.0
      %v2470 = vmax.f32 %v2190, 0.0
      %v2471 = vmax.f32 %v2198, 0.0
      %v2472 = vmax.f32 %v2206, 0.0
      %v2473 = vmax.f32 %v2205, 0.0
      %v2474 = vmax.f32 %v2207, 0.0
      %v2475 = vmax.f32 %v2215, 0.0
      %v2476 = vmax.f32 %v2223, 0.0
      %v2477 = vmax.f32 %v2222, 0.0
      %v2478 = vmax.f32 %v2224, 0.0
      %v2479 = vmax.f32 %v2232, 0.0
      %v2480 = vmax.f32 %v2240, 0.0
      %v2481 = vmax.f32 %v2239, 0.0
      %v2482 = vmax.f32 %v2241, 0.0
      %v2483 = vmax.f32 %v2249, 0.0
      %v2484 = vmax.f32 %v2257, 0.0
      %v2485 = vmax.f32 %v2256, 0.0
      %v2486 = vmax.f32 %v2258, 0.0
      %v2487 = vmax.f32 %v2266, 0.0
      %v2488 = vmax.f32 %v2274, 0.0
      %v2489 = vmax.f32 %v2273, 0.0
      %v2490 = vmax.f32 %v2275, 0.0
      %v2491 = vmax.f32 %v2283, 0.0
      %v2492 = vmax.f32 %v2291, 0.0
      %v2493 = vmax.f32 %v2290, 0.0
      %v2494 = vmax.f32 %v2292, 0.0
      %v2495 = vmax.f32 %v2300, 0.0
      %v2496 = vmax.f32 %v2308, 0.0
      %v2497 = vmax.f32 %v2307, 0.0
      %v2498 = vmax.f32 %v2309, 0.0
      %v2499 = vmax.f32 %v2317, 0.0
      %v2500 = vmax.f32 %v2325, 0.0
      %v2501 = vmax.f32 %v2324, 0.0
      %v2502 = vmax.f32 %v2326, 0.0
      %v2503 = vmax.f32 %v2334, 0.0
      %v2504 = vmax.f32 %v2342, 0.0
      %v2505 = vmax.f32 %v2341, 0.0
      %v2506 = vmax.f32 %v2343, 0.0
      %v2507 = vmax.f32 %v2351, 0.0
      %v2508 = vmax.f32 %v2359, 0.0
      %v2509 = vmax.f32 %v2358, 0.0
      %v2585 = vcombine.low %v2435, %v2436
      %v2587 = vunpack.c.l.s4 1983009808
      %v2588 = vunpack.c.0.s8 %v2587
      %v2589 = vlaneseq
      %v2590 = vshrl.u32 %v2589, 7
      %v2591 = vsub.s32 %v2588, %v2590
      %v2592 = vrot.slane %v2585, %v2591
      %v2594 = vunpack.c.l.s4 1983009808
      %v2595 = vunpack.c.0.s8 %v2594
      %v2596 = vlaneseq
      %v2597 = vshrl.u32 %v2596, 7
      %v2598 = vsub.s32 %v2595, %v2597
      %v2599 = vrot.slane %v2437, %v2598
      %v2600 = vcombine.low %v2592, %v2599
      %v2601 = vcombine.low %v2438, %v2439
      %v2603 = vunpack.c.l.s4 1983009808
      %v2604 = vunpack.c.0.s8 %v2603
      %v2605 = vlaneseq
      %v2606 = vshrl.u32 %v2605, 7
      %v2607 = vsub.s32 %v2604, %v2606
      %v2608 = vrot.slane %v2601, %v2607
      %v2610 = vunpack.c.l.s4 1983009808
      %v2611 = vunpack.c.0.s8 %v2610
      %v2612 = vlaneseq
      %v2613 = vshrl.u32 %v2612, 7
      %v2614 = vsub.s32 %v2611, %v2613
      %v2615 = vrot.slane %v2440, %v2614
      %v2616 = vcombine.low %v2608, %v2615
      %v2617 = vcombine.low %v2441, %v2442
      %v2619 = vunpack.c.l.s4 1983009808
      %v2620 = vunpack.c.0.s8 %v2619
      %v2621 = vlaneseq
      %v2622 = vshrl.u32 %v2621, 7
      %v2623 = vsub.s32 %v2620, %v2622
      %v2624 = vrot.slane %v2617, %v2623
      %v2626 = vunpack.c.l.s4 1983009808
      %v2627 = vunpack.c.0.s8 %v2626
      %v2628 = vlaneseq
      %v2629 = vshrl.u32 %v2628, 7
      %v2630 = vsub.s32 %v2627, %v2629
      %v2631 = vrot.slane %v2443, %v2630
      %v2632 = vcombine.low %v2624, %v2631
      %v2633 = vcombine.low %v2444, %v2445
      %v2635 = vunpack.c.l.s4 1983009808
      %v2636 = vunpack.c.0.s8 %v2635
      %v2637 = vlaneseq
      %v2638 = vshrl.u32 %v2637, 7
      %v2639 = vsub.s32 %v2636, %v2638
      %v2640 = vrot.slane %v2633, %v2639
      %v2642 = vunpack.c.l.s4 1983009808
      %v2643 = vunpack.c.0.s8 %v2642
      %v2644 = vlaneseq
      %v2645 = vshrl.u32 %v2644, 7
      %v2646 = vsub.s32 %v2643, %v2645
      %v2647 = vrot.slane %v2446, %v2646
      %v2648 = vcombine.low %v2640, %v2647
      %v2649 = vcombine.low %v2447, %v2448
      %v2651 = vunpack.c.l.s4 1983009808
      %v2652 = vunpack.c.0.s8 %v2651
      %v2653 = vlaneseq
      %v2654 = vshrl.u32 %v2653, 7
      %v2655 = vsub.s32 %v2652, %v2654
      %v2656 = vrot.slane %v2649, %v2655
      %v2658 = vunpack.c.l.s4 1983009808
      %v2659 = vunpack.c.0.s8 %v2658
      %v2660 = vlaneseq
      %v2661 = vshrl.u32 %v2660, 7
      %v2662 = vsub.s32 %v2659, %v2661
      %v2663 = vrot.slane %v2449, %v2662
      %v2664 = vcombine.low %v2656, %v2663
      %v2665 = vcombine.low %v2450, %v2451
      %v2667 = vunpack.c.l.s4 1983009808
      %v2668 = vunpack.c.0.s8 %v2667
      %v2669 = vlaneseq
      %v2670 = vshrl.u32 %v2669, 7
      %v2671 = vsub.s32 %v2668, %v2670
      %v2672 = vrot.slane %v2665, %v2671
      %v2674 = vunpack.c.l.s4 1983009808
      %v2675 = vunpack.c.0.s8 %v2674
      %v2676 = vlaneseq
      %v2677 = vshrl.u32 %v2676, 7
      %v2678 = vsub.s32 %v2675, %v2677
      %v2679 = vrot.slane %v2452, %v2678
      %v2680 = vcombine.low %v2672, %v2679
      %v2681 = vcombine.low %v2453, %v2454
      %v2683 = vunpack.c.l.s4 1983009808
      %v2684 = vunpack.c.0.s8 %v2683
      %v2685 = vlaneseq
      %v2686 = vshrl.u32 %v2685, 7
      %v2687 = vsub.s32 %v2684, %v2686
      %v2688 = vrot.slane %v2681, %v2687
      %v2690 = vunpack.c.l.s4 1983009808
      %v2691 = vunpack.c.0.s8 %v2690
      %v2692 = vlaneseq
      %v2693 = vshrl.u32 %v2692, 7
      %v2694 = vsub.s32 %v2691, %v2693
      %v2695 = vrot.slane %v2455, %v2694
      %v2696 = vcombine.low %v2688, %v2695
      %v2697 = vcombine.low %v2456, %v2457
      %v2699 = vunpack.c.l.s4 1983009808
      %v2700 = vunpack.c.0.s8 %v2699
      %v2701 = vlaneseq
      %v2702 = vshrl.u32 %v2701, 7
      %v2703 = vsub.s32 %v2700, %v2702
      %v2704 = vrot.slane %v2697, %v2703
      %v2706 = vunpack.c.l.s4 1983009808
      %v2707 = vunpack.c.0.s8 %v2706
      %v2708 = vlaneseq
      %v2709 = vshrl.u32 %v2708, 7
      %v2710 = vsub.s32 %v2707, %v2709
      %v2711 = vrot.slane %v2458, %v2710
      %v2712 = vcombine.low %v2704, %v2711
      %v2713 = vcombine.low %v2459, %v2460
      %v2715 = vunpack.c.l.s4 1983009808
      %v2716 = vunpack.c.0.s8 %v2715
      %v2717 = vlaneseq
      %v2718 = vshrl.u32 %v2717, 7
      %v2719 = vsub.s32 %v2716, %v2718
      %v2720 = vrot.slane %v2713, %v2719
      %v2722 = vunpack.c.l.s4 1983009808
      %v2723 = vunpack.c.0.s8 %v2722
      %v2724 = vlaneseq
      %v2725 = vshrl.u32 %v2724, 7
      %v2726 = vsub.s32 %v2723, %v2725
      %v2727 = vrot.slane %v2461, %v2726
      %v2728 = vcombine.low %v2720, %v2727
      %v2729 = vcombine.low %v2462, %v2463
      %v2731 = vunpack.c.l.s4 1983009808
      %v2732 = vunpack.c.0.s8 %v2731
      %v2733 = vlaneseq
      %v2734 = vshrl.u32 %v2733, 7
      %v2735 = vsub.s32 %v2732, %v2734
      %v2736 = vrot.slane %v2729, %v2735
      %v2738 = vunpack.c.l.s4 1983009808
      %v2739 = vunpack.c.0.s8 %v2738
      %v2740 = vlaneseq
      %v2741 = vshrl.u32 %v2740, 7
      %v2742 = vsub.s32 %v2739, %v2741
      %v2743 = vrot.slane %v2464, %v2742
      %v2744 = vcombine.low %v2736, %v2743
      %v2745 = vcombine.low %v2465, %v2466
      %v2747 = vunpack.c.l.s4 1983009808
      %v2748 = vunpack.c.0.s8 %v2747
      %v2749 = vlaneseq
      %v2750 = vshrl.u32 %v2749, 7
      %v2751 = vsub.s32 %v2748, %v2750
      %v2752 = vrot.slane %v2745, %v2751
      %v2754 = vunpack.c.l.s4 1983009808
      %v2755 = vunpack.c.0.s8 %v2754
      %v2756 = vlaneseq
      %v2757 = vshrl.u32 %v2756, 7
      %v2758 = vsub.s32 %v2755, %v2757
      %v2759 = vrot.slane %v2467, %v2758
      %v2760 = vcombine.low %v2752, %v2759
      %v2761 = vcombine.low %v2468, %v2469
      %v2763 = vunpack.c.l.s4 1983009808
      %v2764 = vunpack.c.0.s8 %v2763
      %v2765 = vlaneseq
      %v2766 = vshrl.u32 %v2765, 7
      %v2767 = vsub.s32 %v2764, %v2766
      %v2768 = vrot.slane %v2761, %v2767
      %v2770 = vunpack.c.l.s4 1983009808
      %v2771 = vunpack.c.0.s8 %v2770
      %v2772 = vlaneseq
      %v2773 = vshrl.u32 %v2772, 7
      %v2774 = vsub.s32 %v2771, %v2773
      %v2775 = vrot.slane %v2470, %v2774
      %v2776 = vcombine.low %v2768, %v2775
      %v2777 = vcombine.low %v2471, %v2472
      %v2779 = vunpack.c.l.s4 1983009808
      %v2780 = vunpack.c.0.s8 %v2779
      %v2781 = vlaneseq
      %v2782 = vshrl.u32 %v2781, 7
      %v2783 = vsub.s32 %v2780, %v2782
      %v2784 = vrot.slane %v2777, %v2783
      %v2786 = vunpack.c.l.s4 1983009808
      %v2787 = vunpack.c.0.s8 %v2786
      %v2788 = vlaneseq
      %v2789 = vshrl.u32 %v2788, 7
      %v2790 = vsub.s32 %v2787, %v2789
      %v2791 = vrot.slane %v2473, %v2790
      %v2792 = vcombine.low %v2784, %v2791
      %v2793 = vcombine.low %v2474, %v2475
      %v2795 = vunpack.c.l.s4 1983009808
      %v2796 = vunpack.c.0.s8 %v2795
      %v2797 = vlaneseq
      %v2798 = vshrl.u32 %v2797, 7
      %v2799 = vsub.s32 %v2796, %v2798
      %v2800 = vrot.slane %v2793, %v2799
      %v2802 = vunpack.c.l.s4 1983009808
      %v2803 = vunpack.c.0.s8 %v2802
      %v2804 = vlaneseq
      %v2805 = vshrl.u32 %v2804, 7
      %v2806 = vsub.s32 %v2803, %v2805
      %v2807 = vrot.slane %v2476, %v2806
      %v2808 = vcombine.low %v2800, %v2807
      %v2809 = vcombine.low %v2477, %v2478
      %v2811 = vunpack.c.l.s4 1983009808
      %v2812 = vunpack.c.0.s8 %v2811
      %v2813 = vlaneseq
      %v2814 = vshrl.u32 %v2813, 7
      %v2815 = vsub.s32 %v2812, %v2814
      %v2816 = vrot.slane %v2809, %v2815
      %v2818 = vunpack.c.l.s4 1983009808
      %v2819 = vunpack.c.0.s8 %v2818
      %v2820 = vlaneseq
      %v2821 = vshrl.u32 %v2820, 7
      %v2822 = vsub.s32 %v2819, %v2821
      %v2823 = vrot.slane %v2479, %v2822
      %v2824 = vcombine.low %v2816, %v2823
      %v2825 = vcombine.low %v2480, %v2481
      %v2827 = vunpack.c.l.s4 1983009808
      %v2828 = vunpack.c.0.s8 %v2827
      %v2829 = vlaneseq
      %v2830 = vshrl.u32 %v2829, 7
      %v2831 = vsub.s32 %v2828, %v2830
      %v2832 = vrot.slane %v2825, %v2831
      %v2834 = vunpack.c.l.s4 1983009808
      %v2835 = vunpack.c.0.s8 %v2834
      %v2836 = vlaneseq
      %v2837 = vshrl.u32 %v2836, 7
      %v2838 = vsub.s32 %v2835, %v2837
      %v2839 = vrot.slane %v2482, %v2838
      %v2840 = vcombine.low %v2832, %v2839
      %v2841 = vcombine.low %v2483, %v2484
      %v2843 = vunpack.c.l.s4 1983009808
      %v2844 = vunpack.c.0.s8 %v2843
      %v2845 = vlaneseq
      %v2846 = vshrl.u32 %v2845, 7
      %v2847 = vsub.s32 %v2844, %v2846
      %v2848 = vrot.slane %v2841, %v2847
      %v2850 = vunpack.c.l.s4 1983009808
      %v2851 = vunpack.c.0.s8 %v2850
      %v2852 = vlaneseq
      %v2853 = vshrl.u32 %v2852, 7
      %v2854 = vsub.s32 %v2851, %v2853
      %v2855 = vrot.slane %v2485, %v2854
      %v2856 = vcombine.low %v2848, %v2855
      %v2857 = vcombine.low %v2486, %v2487
      %v2859 = vunpack.c.l.s4 1983009808
      %v2860 = vunpack.c.0.s8 %v2859
      %v2861 = vlaneseq
      %v2862 = vshrl.u32 %v2861, 7
      %v2863 = vsub.s32 %v2860, %v2862
      %v2864 = vrot.slane %v2857, %v2863
      %v2866 = vunpack.c.l.s4 1983009808
      %v2867 = vunpack.c.0.s8 %v2866
      %v2868 = vlaneseq
      %v2869 = vshrl.u32 %v2868, 7
      %v2870 = vsub.s32 %v2867, %v2869
      %v2871 = vrot.slane %v2488, %v2870
      %v2872 = vcombine.low %v2864, %v2871
      %v2873 = vcombine.low %v2489, %v2490
      %v2875 = vunpack.c.l.s4 1983009808
      %v2876 = vunpack.c.0.s8 %v2875
      %v2877 = vlaneseq
      %v2878 = vshrl.u32 %v2877, 7
      %v2879 = vsub.s32 %v2876, %v2878
      %v2880 = vrot.slane %v2873, %v2879
      %v2882 = vunpack.c.l.s4 1983009808
      %v2883 = vunpack.c.0.s8 %v2882
      %v2884 = vlaneseq
      %v2885 = vshrl.u32 %v2884, 7
      %v2886 = vsub.s32 %v2883, %v2885
      %v2887 = vrot.slane %v2491, %v2886
      %v2888 = vcombine.low %v2880, %v2887
      %v2889 = vcombine.low %v2492, %v2493
      %v2891 = vunpack.c.l.s4 1983009808
      %v2892 = vunpack.c.0.s8 %v2891
      %v2893 = vlaneseq
      %v2894 = vshrl.u32 %v2893, 7
      %v2895 = vsub.s32 %v2892, %v2894
      %v2896 = vrot.slane %v2889, %v2895
      %v2898 = vunpack.c.l.s4 1983009808
      %v2899 = vunpack.c.0.s8 %v2898
      %v2900 = vlaneseq
      %v2901 = vshrl.u32 %v2900, 7
      %v2902 = vsub.s32 %v2899, %v2901
      %v2903 = vrot.slane %v2494, %v2902
      %v2904 = vcombine.low %v2896, %v2903
      %v2905 = vcombine.low %v2495, %v2496
      %v2907 = vunpack.c.l.s4 1983009808
      %v2908 = vunpack.c.0.s8 %v2907
      %v2909 = vlaneseq
      %v2910 = vshrl.u32 %v2909, 7
      %v2911 = vsub.s32 %v2908, %v2910
      %v2912 = vrot.slane %v2905, %v2911
      %v2914 = vunpack.c.l.s4 1983009808
      %v2915 = vunpack.c.0.s8 %v2914
      %v2916 = vlaneseq
      %v2917 = vshrl.u32 %v2916, 7
      %v2918 = vsub.s32 %v2915, %v2917
      %v2919 = vrot.slane %v2497, %v2918
      %v2920 = vcombine.low %v2912, %v2919
      %v2921 = vcombine.low %v2498, %v2499
      %v2923 = vunpack.c.l.s4 1983009808
      %v2924 = vunpack.c.0.s8 %v2923
      %v2925 = vlaneseq
      %v2926 = vshrl.u32 %v2925, 7
      %v2927 = vsub.s32 %v2924, %v2926
      %v2928 = vrot.slane %v2921, %v2927
      %v2930 = vunpack.c.l.s4 1983009808
      %v2931 = vunpack.c.0.s8 %v2930
      %v2932 = vlaneseq
      %v2933 = vshrl.u32 %v2932, 7
      %v2934 = vsub.s32 %v2931, %v2933
      %v2935 = vrot.slane %v2500, %v2934
      %v2936 = vcombine.low %v2928, %v2935
      %v2937 = vcombine.low %v2501, %v2502
      %v2939 = vunpack.c.l.s4 1983009808
      %v2940 = vunpack.c.0.s8 %v2939
      %v2941 = vlaneseq
      %v2942 = vshrl.u32 %v2941, 7
      %v2943 = vsub.s32 %v2940, %v2942
      %v2944 = vrot.slane %v2937, %v2943
      %v2946 = vunpack.c.l.s4 1983009808
      %v2947 = vunpack.c.0.s8 %v2946
      %v2948 = vlaneseq
      %v2949 = vshrl.u32 %v2948, 7
      %v2950 = vsub.s32 %v2947, %v2949
      %v2951 = vrot.slane %v2503, %v2950
      %v2952 = vcombine.low %v2944, %v2951
      %v2953 = vcombine.low %v2504, %v2505
      %v2955 = vunpack.c.l.s4 1983009808
      %v2956 = vunpack.c.0.s8 %v2955
      %v2957 = vlaneseq
      %v2958 = vshrl.u32 %v2957, 7
      %v2959 = vsub.s32 %v2956, %v2958
      %v2960 = vrot.slane %v2953, %v2959
      %v2962 = vunpack.c.l.s4 1983009808
      %v2963 = vunpack.c.0.s8 %v2962
      %v2964 = vlaneseq
      %v2965 = vshrl.u32 %v2964, 7
      %v2966 = vsub.s32 %v2963, %v2965
      %v2967 = vrot.slane %v2506, %v2966
      %v2968 = vcombine.low %v2960, %v2967
      %v2969 = vcombine.low %v2507, %v2508
      %v2971 = vunpack.c.l.s4 1983009808
      %v2972 = vunpack.c.0.s8 %v2971
      %v2973 = vlaneseq
      %v2974 = vshrl.u32 %v2973, 7
      %v2975 = vsub.s32 %v2972, %v2974
      %v2976 = vrot.slane %v2969, %v2975
      %v2978 = vunpack.c.l.s4 1983009808
      %v2979 = vunpack.c.0.s8 %v2978
      %v2980 = vlaneseq
      %v2981 = vshrl.u32 %v2980, 7
      %v2982 = vsub.s32 %v2979, %v2981
      %v2983 = vrot.slane %v2509, %v2982
      %v2984 = vcombine.low %v2976, %v2983
      %vm3010 = vcmask 1045504
      %v3011 = vsel %vm3010, %v2600, -inf
      %v3012 = vrot.slane %v3011, 4
      %v3013 = vmax.f32 %v3011, %v3012
      %v3014 = vrot.slane %v3013, 2
      %v3015 = vmax.f32 %v3013, %v3014
      %v3016 = vrot.slane %v3015, 1
      %v3017 = vmax.f32 %v3015, %v3016
      %v3018 = vsel %vm3010, %v2616, -inf
      %v3019 = vrot.slane %v3018, 4
      %v3020 = vmax.f32 %v3018, %v3019
      %v3021 = vrot.slane %v3020, 2
      %v3022 = vmax.f32 %v3020, %v3021
      %v3023 = vrot.slane %v3022, 1
      %v3024 = vmax.f32 %v3022, %v3023
      %v3025 = vsel %vm3010, %v2632, -inf
      %v3026 = vrot.slane %v3025, 4
      %v3027 = vmax.f32 %v3025, %v3026
      %v3028 = vrot.slane %v3027, 2
      %v3029 = vmax.f32 %v3027, %v3028
      %v3030 = vrot.slane %v3029, 1
      %v3031 = vmax.f32 %v3029, %v3030
      %v3032 = vsel %vm3010, %v2648, -inf
      %v3033 = vrot.slane %v3032, 4
      %v3034 = vmax.f32 %v3032, %v3033
      %v3035 = vrot.slane %v3034, 2
      %v3036 = vmax.f32 %v3034, %v3035
      %v3037 = vrot.slane %v3036, 1
      %v3038 = vmax.f32 %v3036, %v3037
      %v3039 = vsel %vm3010, %v2664, -inf
      %v3040 = vrot.slane %v3039, 4
      %v3041 = vmax.f32 %v3039, %v3040
      %v3042 = vrot.slane %v3041, 2
      %v3043 = vmax.f32 %v3041, %v3042
      %v3044 = vrot.slane %v3043, 1
      %v3045 = vmax.f32 %v3043, %v3044
      %v3046 = vsel %vm3010, %v2680, -inf
      %v3047 = vrot.slane %v3046, 4
      %v3048 = vmax.f32 %v3046, %v3047
      %v3049 = vrot.slane %v3048, 2
      %v3050 = vmax.f32 %v3048, %v3049
      %v3051 = vrot.slane %v3050, 1
      %v3052 = vmax.f32 %v3050, %v3051
      %v3053 = vsel %vm3010, %v2696, -inf
      %v3054 = vrot.slane %v3053, 4
      %v3055 = vmax.f32 %v3053, %v3054
      %v3056 = vrot.slane %v3055, 2
      %v3057 = vmax.f32 %v3055, %v3056
      %v3058 = vrot.slane %v3057, 1
      %v3059 = vmax.f32 %v3057, %v3058
      %v3060 = vsel %vm3010, %v2712, -inf
      %v3061 = vrot.slane %v3060, 4
      %v3062 = vmax.f32 %v3060, %v3061
      %v3063 = vrot.slane %v3062, 2
      %v3064 = vmax.f32 %v3062, %v3063
      %v3065 = vrot.slane %v3064, 1
      %v3066 = vmax.f32 %v3064, %v3065
      %v3067 = vsel %vm3010, %v2728, -inf
      %v3068 = vrot.slane %v3067, 4
      %v3069 = vmax.f32 %v3067, %v3068
      %v3070 = vrot.slane %v3069, 2
      %v3071 = vmax.f32 %v3069, %v3070
      %v3072 = vrot.slane %v3071, 1
      %v3073 = vmax.f32 %v3071, %v3072
      %v3074 = vsel %vm3010, %v2744, -inf
      %v3075 = vrot.slane %v3074, 4
      %v3076 = vmax.f32 %v3074, %v3075
      %v3077 = vrot.slane %v3076, 2
      %v3078 = vmax.f32 %v3076, %v3077
      %v3079 = vrot.slane %v3078, 1
      %v3080 = vmax.f32 %v3078, %v3079
      %v3081 = vsel %vm3010, %v2760, -inf
      %v3082 = vrot.slane %v3081, 4
      %v3083 = vmax.f32 %v3081, %v3082
      %v3084 = vrot.slane %v3083, 2
      %v3085 = vmax.f32 %v3083, %v3084
      %v3086 = vrot.slane %v3085, 1
      %v3087 = vmax.f32 %v3085, %v3086
      %v3088 = vsel %vm3010, %v2776, -inf
      %v3089 = vrot.slane %v3088, 4
      %v3090 = vmax.f32 %v3088, %v3089
      %v3091 = vrot.slane %v3090, 2
      %v3092 = vmax.f32 %v3090, %v3091
      %v3093 = vrot.slane %v3092, 1
      %v3094 = vmax.f32 %v3092, %v3093
      %v3095 = vsel %vm3010, %v2792, -inf
      %v3096 = vrot.slane %v3095, 4
      %v3097 = vmax.f32 %v3095, %v3096
      %v3098 = vrot.slane %v3097, 2
      %v3099 = vmax.f32 %v3097, %v3098
      %v3100 = vrot.slane %v3099, 1
      %v3101 = vmax.f32 %v3099, %v3100
      %v3102 = vsel %vm3010, %v2808, -inf
      %v3103 = vrot.slane %v3102, 4
      %v3104 = vmax.f32 %v3102, %v3103
      %v3105 = vrot.slane %v3104, 2
      %v3106 = vmax.f32 %v3104, %v3105
      %v3107 = vrot.slane %v3106, 1
      %v3108 = vmax.f32 %v3106, %v3107
      %v3109 = vsel %vm3010, %v2824, -inf
      %v3110 = vrot.slane %v3109, 4
      %v3111 = vmax.f32 %v3109, %v3110
      %v3112 = vrot.slane %v3111, 2
      %v3113 = vmax.f32 %v3111, %v3112
      %v3114 = vrot.slane %v3113, 1
      %v3115 = vmax.f32 %v3113, %v3114
      %v3116 = vsel %vm3010, %v2840, -inf
      %v3117 = vrot.slane %v3116, 4
      %v3118 = vmax.f32 %v3116, %v3117
      %v3119 = vrot.slane %v3118, 2
      %v3120 = vmax.f32 %v3118, %v3119
      %v3121 = vrot.slane %v3120, 1
      %v3122 = vmax.f32 %v3120, %v3121
      %v3123 = vsel %vm3010, %v2856, -inf
      %v3124 = vrot.slane %v3123, 4
      %v3125 = vmax.f32 %v3123, %v3124
      %v3126 = vrot.slane %v3125, 2
      %v3127 = vmax.f32 %v3125, %v3126
      %v3128 = vrot.slane %v3127, 1
      %v3129 = vmax.f32 %v3127, %v3128
      %v3130 = vsel %vm3010, %v2872, -inf
      %v3131 = vrot.slane %v3130, 4
      %v3132 = vmax.f32 %v3130, %v3131
      %v3133 = vrot.slane %v3132, 2
      %v3134 = vmax.f32 %v3132, %v3133
      %v3135 = vrot.slane %v3134, 1
      %v3136 = vmax.f32 %v3134, %v3135
      %v3137 = vsel %vm3010, %v2888, -inf
      %v3138 = vrot.slane %v3137, 4
      %v3139 = vmax.f32 %v3137, %v3138
      %v3140 = vrot.slane %v3139, 2
      %v3141 = vmax.f32 %v3139, %v3140
      %v3142 = vrot.slane %v3141, 1
      %v3143 = vmax.f32 %v3141, %v3142
      %v3144 = vsel %vm3010, %v2904, -inf
      %v3145 = vrot.slane %v3144, 4
      %v3146 = vmax.f32 %v3144, %v3145
      %v3147 = vrot.slane %v3146, 2
      %v3148 = vmax.f32 %v3146, %v3147
      %v3149 = vrot.slane %v3148, 1
      %v3150 = vmax.f32 %v3148, %v3149
      %v3151 = vsel %vm3010, %v2920, -inf
      %v3152 = vrot.slane %v3151, 4
      %v3153 = vmax.f32 %v3151, %v3152
      %v3154 = vrot.slane %v3153, 2
      %v3155 = vmax.f32 %v3153, %v3154
      %v3156 = vrot.slane %v3155, 1
      %v3157 = vmax.f32 %v3155, %v3156
      %v3158 = vsel %vm3010, %v2936, -inf
      %v3159 = vrot.slane %v3158, 4
      %v3160 = vmax.f32 %v3158, %v3159
      %v3161 = vrot.slane %v3160, 2
      %v3162 = vmax.f32 %v3160, %v3161
      %v3163 = vrot.slane %v3162, 1
      %v3164 = vmax.f32 %v3162, %v3163
      %v3165 = vsel %vm3010, %v2952, -inf
      %v3166 = vrot.slane %v3165, 4
      %v3167 = vmax.f32 %v3165, %v3166
      %v3168 = vrot.slane %v3167, 2
      %v3169 = vmax.f32 %v3167, %v3168
      %v3170 = vrot.slane %v3169, 1
      %v3171 = vmax.f32 %v3169, %v3170
      %v3172 = vsel %vm3010, %v2968, -inf
      %v3173 = vrot.slane %v3172, 4
      %v3174 = vmax.f32 %v3172, %v3173
      %v3175 = vrot.slane %v3174, 2
      %v3176 = vmax.f32 %v3174, %v3175
      %v3177 = vrot.slane %v3176, 1
      %v3178 = vmax.f32 %v3176, %v3177
      %v3179 = vsel %vm3010, %v2984, -inf
      %v3180 = vrot.slane %v3179, 4
      %v3181 = vmax.f32 %v3179, %v3180
      %v3182 = vrot.slane %v3181, 2
      %v3183 = vmax.f32 %v3181, %v3182
      %v3184 = vrot.slane %v3183, 1
      %v3185 = vmax.f32 %v3183, %v3184
      %v3186 = vld [vmem:[%s949] sm:$0xff]
      %v3187 = vld [vmem:[%s949 + $0x8] sm:$0xff]
      %v3188 = vld [vmem:[%s949 + $0x10] sm:$0xff]
      %v3189 = vld [vmem:[%s949 + $0x18] sm:$0x1]
      %vm3215 = vcmask 1041409
      %v3216 = vsel %vm3215, %v3024, %v3017
      %vm3217 = vcmask 1042434
      %v3218 = vsel %vm3217, %v3031, %v3216
      %vm3219 = vcmask 1043459
      %v3220 = vsel %vm3219, %v3038, %v3218
      %vm3221 = vcmask 1044484
      %v3222 = vsel %vm3221, %v3045, %v3220
      %vm3223 = vcmask 1045509
      %v3224 = vsel %vm3223, %v3052, %v3222
      %vm3225 = vcmask 1046534
      %v3226 = vsel %vm3225, %v3059, %v3224
      %vm3227 = vcmask 1047559
      %v3228 = vsel %vm3227, %v3066, %v3226
      %v3229 = vsel %vm3215, %v3080, %v3073
      %v3230 = vsel %vm3217, %v3087, %v3229
      %v3231 = vsel %vm3219, %v3094, %v3230
      %v3232 = vsel %vm3221, %v3101, %v3231
      %v3233 = vsel %vm3223, %v3108, %v3232
      %v3234 = vsel %vm3225, %v3115, %v3233
      %v3235 = vsel %vm3227, %v3122, %v3234
      %v3236 = vsel %vm3215, %v3136, %v3129
      %v3237 = vsel %vm3217, %v3143, %v3236
      %v3238 = vsel %vm3219, %v3150, %v3237
      %v3239 = vsel %vm3221, %v3157, %v3238
      %v3240 = vsel %vm3223, %v3164, %v3239
      %v3241 = vsel %vm3225, %v3171, %v3240
      %v3242 = vsel %vm3227, %v3178, %v3241
      %v3247 = vld [vmem:[%s5] sm:$0xff]
      %v3248 = vld [vmem:[%s5 + $0x8] sm:$0xff]
      %v3249 = vld [vmem:[%s5 + $0x10] sm:$0xff]
      %v3250 = vld [vmem:[%s5 + $0x18] sm:$0xff]
      %v3251 = vld [vmem:[%s5 + $0x20] sm:$0xff]
      %v3252 = vld [vmem:[%s5 + $0x28] sm:$0xff]
      %v3253 = vld [vmem:[%s5 + $0x30] sm:$0xff]
      %v3254 = vld [vmem:[%s5 + $0x38] sm:$0xff]
      %v3255 = vld [vmem:[%s5 + $0x40] sm:$0xff]
      %v3256 = vld [vmem:[%s5 + $0x48] sm:$0xff]
      %v3257 = vld [vmem:[%s5 + $0x50] sm:$0xff]
      %v3258 = vld [vmem:[%s5 + $0x58] sm:$0xff]
      %v3259 = vld [vmem:[%s5 + $0x60] sm:$0xff]
      %v3260 = vld [vmem:[%s5 + $0x68] sm:$0xff]
      %v3261 = vld [vmem:[%s5 + $0x70] sm:$0xff]
      %v3262 = vld [vmem:[%s5 + $0x78] sm:$0xff]
      %v3263 = vld [vmem:[%s5 + $0x80] sm:$0xff]
      %v3264 = vld [vmem:[%s5 + $0x88] sm:$0xff]
      %v3265 = vld [vmem:[%s5 + $0x90] sm:$0xff]
      %v3266 = vld [vmem:[%s5 + $0x98] sm:$0xff]
      %v3267 = vld [vmem:[%s6] sm:$0x1]
      %v3269 = vlaneseq
      %v3270 = vshrl.u32 %v3269, 7
      %v3271 = vsub.s32 0, %v3270
      %v3272 = vrot.slane %v3267, %v3271
      %vm3274 = vcmask 261120
      %v3276 = vsel %vm3274, %v3186, 0
      %v3279 = vsel %vm3274, %v3187, 0
      %v3282 = vsel %vm3274, %v3188, 0
      %v3285 = vsel %vm3274, %v3189, 0
      %3287 = vmatprep.subr.mxu0 0.0
      %3288 = vmatpush1.msra.mxu0 %v3262
      %3289 = vmatprep.subr.mxu0 0.0
      %3290 = vmatpush1.msra.mxu0 %v3261
      %3291 = vmatprep.subr.mxu0 0.0
      %3292 = vmatpush1.msra.mxu0 %v3260
      %3293 = vmatprep.subr.mxu0 0.0
      %3294 = vmatpush1.msra.mxu0 %v3259
      %3295 = vmatprep.subr.mxu0 0.0
      %3296 = vmatpush1.msra.mxu0 %v3258
      %3297 = vmatprep.subr.mxu0 0.0
      %3298 = vmatpush1.msra.mxu0 %v3257
      %3299 = vmatprep.subr.mxu0 0.0
      %3300 = vmatpush1.msra.mxu0 %v3256
      %3301 = vmatprep.subr.mxu0 0.0
      %3302 = vmatpush1.msra.mxu0 %v3255
      %3303 = vmatprep.subr.mxu0 0.0
      %3304 = vmatpush1.msra.mxu0 %v3254
      %3305 = vmatprep.subr.mxu0 0.0
      %3306 = vmatpush1.msra.mxu0 %v3253
      %3307 = vmatprep.subr.mxu0 0.0
      %3308 = vmatpush1.msra.mxu0 %v3252
      %3309 = vmatprep.subr.mxu0 0.0
      %3310 = vmatpush1.msra.mxu0 %v3251
      %3311 = vmatprep.subr.mxu0 0.0
      %3312 = vmatpush1.msra.mxu0 %v3250
      %3313 = vmatprep.subr.mxu0 0.0
      %3314 = vmatpush1.msra.mxu0 %v3249
      %3315 = vmatprep.subr.mxu0 0.0
      %3316 = vmatpush1.msra.mxu0 %v3248
      %3317 = vmatprep.subr.mxu0 0.0
      %3318 = vmatpush1.msra.mxu0 %v3247
      %3319 = vmatprep.subr.mxu0 0.0
      %3320 = vmatpush2.msra.mxu0 0.0
      %3321 = vmatprep.subr.mxu0 0.0
      %3322 = vmatpush2.msra.mxu0 0.0
      %3323 = vmatprep.subr.mxu0 0.0
      %3324 = vmatpush2.msra.mxu0 0.0
      %3325 = vmatprep.subr.mxu0 0.0
      %3326 = vmatpush2.msra.mxu0 0.0
      %3327 = vmatprep.subr.mxu0 0.0
      %3328 = vmatpush2.msra.mxu0 0.0
      %3329 = vmatprep.subr.mxu0 0.0
      %3330 = vmatpush2.msra.mxu0 0.0
      %3331 = vmatprep.subr.mxu0 0.0
      %3332 = vmatpush2.msra.mxu0 0.0
      %3333 = vmatprep.subr.mxu0 0.0
      %3334 = vmatpush2.msra.mxu0 0.0
      %3335 = vmatprep.subr.mxu0 0.0
      %3336 = vmatpush2.msra.mxu0 0.0
      %3337 = vmatprep.subr.mxu0 0.0
      %3338 = vmatpush2.msra.mxu0 0.0
      %3339 = vmatprep.subr.mxu0 0.0
      %3340 = vmatpush2.msra.mxu0 0.0
      %3341 = vmatprep.subr.mxu0 0.0
      %3342 = vmatpush2.msra.mxu0 0.0
      %3343 = vmatprep.subr.mxu0 0.0
      %3344 = vmatpush2.msra.mxu0 %v3266
      %3345 = vmatprep.subr.mxu0 0.0
      %3346 = vmatpush2.msra.mxu0 %v3265
      %3347 = vmatprep.subr.mxu0 0.0
      %3348 = vmatpush2.msra.mxu0 %v3264
      %3349 = vmatprep.subr.mxu0 0.0
      %3350 = vmatpush2.msra.mxu0 %v3263
      %3351 = vmatprep.mubr.f32.mxu0 %v3276
      %3352 = vmatmul.mubr.f32.gmra.mxu0 %v3228
      %v3353 = vpop.f32.mrf.mxu0
      %v3354 = vadd.f32 %v3272, %v3353
      %v3355 = vpop.f32.mrf.mxu0
      %3356 = vmatprep.mubr.f32.mxu0 %v3279
      %3357 = vmatmul.mubr.f32.gmra.mxu0 %v3235
      %v3358 = vpop.f32.mrf.mxu0
      %v3359 = vadd.f32 %v3272, %v3358
      %v3360 = vpop.f32.mrf.mxu0
      %3361 = vmatprep.mubr.f32.mxu0 %v3282
      %3362 = vmatmul.mubr.f32.gmra.mxu0 %v3242
      %v3363 = vpop.f32.mrf.mxu0
      %v3364 = vadd.f32 %v3272, %v3363
      %v3365 = vpop.f32.mrf.mxu0
      %3366 = vmatprep.mubr.f32.mxu0 %v3285
      %3367 = vmatmul.mubr.f32.gmra.mxu0 %v3185
      %v3368 = vpop.f32.mrf.mxu0
      %v3369 = vadd.f32 %v3272, %v3368
      %v3370 = vpop.f32.mrf.mxu0
      %3371 = vdwg.mxu0
      %v3372 = vmax.f32 %v3354, 0.0
      %v3373 = vmax.f32 %v3359, 0.0
      %v3374 = vmax.f32 %v3364, 0.0
      %v3375 = vmax.f32 %v3369, 0.0
      %v3376 = vld [vmem:[%s7] sm:$0x1]
      %v3378 = vlaneseq
      %v3379 = vshrl.u32 %v3378, 7
      %v3380 = vsub.s32 0, %v3379
      %v3381 = vrot.slane %v3376, %v3380
      %v3383 = vmul.f32 %v3372, %v3381
      %v3384 = vmul.f32 %v3373, %v3381
      %v3385 = vmul.f32 %v3374, %v3381
      %v3386 = vmul.f32 %v3375, %v3381
      %v3387 = vsel %vm3274, %v3383, 0.0
      %3388 = vadd.xlane.f32.xlu0 %v3387
      %v3389 = vpop.xlane.xlu0 %3388
      %v3390 = vsel %vm3274, %v3384, 0.0
      %3391 = vadd.xlane.f32.xlu0 %v3390
      %v3392 = vpop.xlane.xlu0 %3391
      %v3393 = vsel %vm3274, %v3385, 0.0
      %3394 = vadd.xlane.f32.xlu0 %v3393
      %v3395 = vpop.xlane.xlu0 %3394
      %vm3396 = vcmask 253952
      %v3397 = vsel %vm3396, %v3386, 0.0
      %3398 = vadd.xlane.f32.xlu0 %v3397
      %v3399 = vpop.xlane.xlu0 %3398
      %v3400 = vld [vmem:[#allocation2] sm:$0x1]
      %v3402 = vlaneseq
      %v3403 = vshrl.u32 %v3402, 7
      %v3404 = vsub.s32 0, %v3403
      %v3405 = vrot.slane %v3400, %v3404
      %v3407 = vadd.f32 %v3389, %v3405
      %v3408 = vadd.f32 %v3392, %v3405
      %v3409 = vadd.f32 %v3395, %v3405
      %v3410 = vadd.f32 %v3399, %v3405
      %vm3411 = vcmask 7168
      %v3412 = vsel %vm3411, %v3407, -inf
      %v3413 = vsel %vm3411, %v3408, -inf
      %v3414 = vsel %vm3411, %v3409, -inf
      %vm3415 = vcmask 0
      %v3416 = vsel %vm3415, %v3410, -inf
      %v3417 = vmax.f32 %v3412, %v3413
      %v3418 = vmax.f32 %v3414, %v3416
      %v3419 = vmax.f32 %v3417, %v3418
      %v3420 = vrot.slane %v3419, 4
      %v3421 = vmax.f32 %v3419, %v3420
      %v3422 = vrot.slane %v3421, 2
      %v3423 = vmax.f32 %v3421, %v3422
      %v3424 = vrot.slane %v3423, 1
      %v3425 = vmax.f32 %v3423, %v3424
      %v3426 = vsub.f32 %v3407, %v3425
      %v3427 = vsub.f32 %v3408, %v3425
      %v3428 = vsub.f32 %v3409, %v3425
      %v3429 = vsub.f32 %v3410, %v3425
      %v3430 = vmul.f32 %v3426, 1.442695
      %v3431 = vpow.pop %v3430
      %v3432 = vmul.f32 %v3427, 1.442695
      %v3433 = vpow.pop %v3432
      %v3434 = vmul.f32 %v3428, 1.442695
      %v3435 = vpow.pop %v3434
      %v3436 = vmul.f32 %v3429, 1.442695
      %v3437 = vpow.pop %v3436
      %v3438 = vsel %vm3411, %v3431, 0.0
      %v3439 = vsel %vm3411, %v3433, 0.0
      %v3440 = vadd.f32 %v3438, %v3439
      %v3441 = vsel %vm3411, %v3435, 0.0
      %v3442 = vadd.f32 %v3440, %v3441
      %v3443 = vsel %vm3415, %v3437, 0.0
      %v3444 = vadd.f32 %v3442, %v3443
      %v3445 = vrot.slane %v3444, 4
      %v3446 = vadd.f32 %v3444, %v3445
      %v3447 = vrot.slane %v3446, 2
      %v3448 = vadd.f32 %v3446, %v3447
      %v3449 = vrot.slane %v3448, 1
      %v3450 = vadd.f32 %v3448, %v3449
      %v3451 = vrcp.pop %v3450
      %v3452 = vmul.f32 %v3431, %v3451
      %v3453 = vmul.f32 %v3433, %v3451
      %v3454 = vmul.f32 %v3435, %v3451
      %v3455 = vmul.f32 %v3437, %v3451
      %3457 = vset.pattern.permute.xlu0 0
      %3458 = vperm.xlu0 %3457, %v3452
      %v3459 = vpop.permute.xlu0 %3458
      %3462 = vset.pattern.permute.xlu0 0
      %3463 = vperm.xlu0 %3462, %v3453
      %v3464 = vpop.permute.xlu0 %3463
      %3467 = vset.pattern.permute.xlu0 0
      %3468 = vperm.xlu0 %3467, %v3454
      %v3469 = vpop.permute.xlu0 %3468
      %3472 = vset.pattern.permute.xlu0 0
      %3473 = vperm.xlu0 %3472, %v3455
      %v3474 = vpop.permute.xlu0 %3473
      %v3476 = vmul.f32 %v3459, %v3228
      %v3477 = vmul.f32 %v3464, %v3235
      %v3478 = vmul.f32 %v3469, %v3242
      %v3479 = vmul.f32 %v3474, %v3185
      %v3480 = vadd.f32 %v3476, %v3477
      %v3481 = vadd.f32 %v3480, %v3478
      %vm3482 = vcmask 1040384
      %v3483 = vsel %vm3482, %v3479, 0.0
      %v3484 = vadd.f32 %v3481, %v3483
      %v3485 = vrot.slane %v3484, 4
      %v3486 = vadd.f32 %v3484, %v3485
      %v3487 = vrot.slane %v3486, 2
      %v3488 = vadd.f32 %v3486, %v3487
      %v3489 = vrot.slane %v3488, 1
      %v3490 = vadd.f32 %v3488, %v3489
      %v3491 = vld [vmem:[%s9] sm:$0xff]
      %v3492 = vld [vmem:[%s9 + $0x8] sm:$0xff]
      %v3493 = vld [vmem:[%s9 + $0x10] sm:$0xff]
      %v3494 = vld [vmem:[%s9 + $0x18] sm:$0xff]
      %v3495 = vld [vmem:[%s9 + $0x20] sm:$0xff]
      %v3496 = vld [vmem:[%s9 + $0x28] sm:$0xff]
      %v3497 = vld [vmem:[%s9 + $0x30] sm:$0xff]
      %v3498 = vld [vmem:[%s9 + $0x38] sm:$0xff]
      %v3499 = vld [vmem:[%s9 + $0x40] sm:$0xff]
      %v3500 = vld [vmem:[%s9 + $0x48] sm:$0xff]
      %v3501 = vld [vmem:[%s9 + $0x50] sm:$0xff]
      %v3502 = vld [vmem:[%s9 + $0x58] sm:$0xff]
      %v3503 = vld [vmem:[%s9 + $0x60] sm:$0xff]
      %v3504 = vld [vmem:[%s9 + $0x68] sm:$0xff]
      %v3505 = vld [vmem:[%s9 + $0x70] sm:$0xff]
      %v3506 = vld [vmem:[%s9 + $0x78] sm:$0xff]
      %v3507 = vld [vmem:[%s10] sm:$0x1]
      %3508 = vmatprep.subr.mxu0 0.0
      %3509 = vmatpush1.msra.mxu0 %v3506
      %3510 = vmatprep.subr.mxu0 0.0
      %3511 = vmatpush1.msra.mxu0 %v3505
      %3512 = vmatprep.subr.mxu0 0.0
      %3513 = vmatpush1.msra.mxu0 %v3504
      %3514 = vmatprep.subr.mxu0 0.0
      %3515 = vmatpush1.msra.mxu0 %v3503
      %3516 = vmatprep.subr.mxu0 0.0
      %3517 = vmatpush1.msra.mxu0 %v3502
      %3518 = vmatprep.subr.mxu0 0.0
      %3519 = vmatpush1.msra.mxu0 %v3501
      %3520 = vmatprep.subr.mxu0 0.0
      %3521 = vmatpush1.msra.mxu0 %v3500
      %3522 = vmatprep.subr.mxu0 0.0
      %3523 = vmatpush1.msra.mxu0 %v3499
      %3524 = vmatprep.subr.mxu0 0.0
      %3525 = vmatpush1.msra.mxu0 %v3498
      %3526 = vmatprep.subr.mxu0 0.0
      %3527 = vmatpush1.msra.mxu0 %v3497
      %3528 = vmatprep.subr.mxu0 0.0
      %3529 = vmatpush1.msra.mxu0 %v3496
      %3530 = vmatprep.subr.mxu0 0.0
      %3531 = vmatpush1.msra.mxu0 %v3495
      %3532 = vmatprep.subr.mxu0 0.0
      %3533 = vmatpush1.msra.mxu0 %v3494
      %3534 = vmatprep.subr.mxu0 0.0
      %3535 = vmatpush1.msra.mxu0 %v3493
      %3536 = vmatprep.subr.mxu0 0.0
      %3537 = vmatpush1.msra.mxu0 %v3492
      %3538 = vmatprep.subr.mxu0 0.0
      %3539 = vmatpush1.msra.mxu0 %v3491
      %3540 = vmatprep.subr.mxu0 0.0
      %3541 = vmatpush2.msra.mxu0 0.0
      %3542 = vmatprep.subr.mxu0 0.0
      %3543 = vmatpush2.msra.mxu0 0.0
      %3544 = vmatprep.subr.mxu0 0.0
      %3545 = vmatpush2.msra.mxu0 0.0
      %3546 = vmatprep.subr.mxu0 0.0
      %3547 = vmatpush2.msra.mxu0 0.0
      %3548 = vmatprep.subr.mxu0 0.0
      %3549 = vmatpush2.msra.mxu0 0.0
      %3550 = vmatprep.subr.mxu0 0.0
      %3551 = vmatpush2.msra.mxu0 0.0
      %3552 = vmatprep.subr.mxu0 0.0
      %3553 = vmatpush2.msra.mxu0 0.0
      %3554 = vmatprep.subr.mxu0 0.0
      %3555 = vmatpush2.msra.mxu0 0.0
      %3556 = vmatprep.subr.mxu0 0.0
      %3557 = vmatpush2.msra.mxu0 0.0
      %3558 = vmatprep.subr.mxu0 0.0
      %3559 = vmatpush2.msra.mxu0 0.0
      %3560 = vmatprep.subr.mxu0 0.0
      %3561 = vmatpush2.msra.mxu0 0.0
      %3562 = vmatprep.subr.mxu0 0.0
      %3563 = vmatpush2.msra.mxu0 0.0
      %3564 = vmatprep.subr.mxu0 0.0
      %3565 = vmatpush2.msra.mxu0 0.0
      %3566 = vmatprep.subr.mxu0 0.0
      %3567 = vmatpush2.msra.mxu0 0.0
      %3568 = vmatprep.subr.mxu0 0.0
      %3569 = vmatpush2.msra.mxu0 0.0
      %3570 = vmatprep.subr.mxu0 0.0
      %3571 = vmatpush2.msra.mxu0 0.0
      %3572 = vmatprep.mubr.f32.mxu0 0.0
      %3573 = vmatmul.mubr.f32.gmra.mxu0 %v3490
      %v3574 = vpop.f32.mrf.mxu0
      %v3575 = vadd.f32 %v3507, %v3574
      %v3576 = vpop.f32.mrf.mxu0
      %3577 = vdwg.mxu0
      %v3578 = vld [vmem:[%s952] sm:$0x1]
      %v3579 = vadd.f32 %v3575, %v3578
      %v3580 = vlaneseq
      %v3581 = vshrl.u32 %v3580, 7
      %v3582 = vadd.s32 %v3581, 8
      %v3583 = vadd.s32 %v3581, 16
      %v3584 = vadd.s32 %v3581, 24
      %vm3585 = vcmp.ge.f32.partialorder %v3407, %v3425
      %vm3586 = vcmp.ge.f32.partialorder %v3408, %v3425
      %vm3587 = vcmp.ge.f32.partialorder %v3409, %v3425
      %vm3588 = vcmp.ge.f32.partialorder %v3410, %v3425
      %v3589 = vsel %vm3585, %v3581, 25
      %v3590 = vsel %vm3586, %v3582, 25
      %v3591 = vsel %vm3587, %v3583, 25
      %v3592 = vsel %vm3588, %v3584, 25
      %v3593 = vsel %vm3411, %v3589, 2147483647
      %v3594 = vsel %vm3411, %v3590, 2147483647
      %v3595 = vsel %vm3411, %v3591, 2147483647
      %v3596 = vsel %vm3415, %v3592, 2147483647
      %vm3597 = vcmp.lt.s32.totalorder %v3593, %v3594
      %v3598 = vsel %vm3597, %v3593, %v3594
      %vm3599 = vcmp.lt.s32.totalorder %v3595, %v3596
      %v3600 = vsel %vm3599, %v3595, %v3596
      %vm3601 = vcmp.lt.s32.totalorder %v3598, %v3600
      %v3602 = vsel %vm3601, %v3598, %v3600
      %v3603 = vrot.slane %v3602, 4
      %vm3604 = vcmp.lt.s32.totalorder %v3602, %v3603
      %v3605 = vsel %vm3604, %v3602, %v3603
      %v3606 = vrot.slane %v3605, 2
      %vm3607 = vcmp.lt.s32.totalorder %v3605, %v3606
      %v3608 = vsel %vm3607, %v3605, %v3606
      %v3609 = vrot.slane %v3608, 1
      %vm3610 = vcmp.lt.s32.totalorder %v3608, %v3609
      %v3611 = vsel %vm3610, %v3608, %v3609
      %v3612 = vld [vmem:[%s957] sm:$0x3f]
      %v3613 = vld [vmem:[%s957 + $0x8] sm:$0x3f]
      %v3614 = vld [vmem:[%s957 + $0x10] sm:$0x3f]
      %v3615 = vld [vmem:[%s957 + $0x18] sm:$0x3f]
      %v3616 = vld [vmem:[%s957 + $0x20] sm:$0x3f]
      %v3617 = vld [vmem:[%s957 + $0x28] sm:$0x3f]
      %v3618 = vld [vmem:[%s957 + $0x30] sm:$0x3f]
      %v3619 = vld [vmem:[%s957 + $0x38] sm:$0x3f]
      %v3620 = vld [vmem:[%s957 + $0x40] sm:$0x3f]
      %v3621 = vld [vmem:[%s957 + $0x48] sm:$0x3f]
      %v3622 = vld [vmem:[%s957 + $0x50] sm:$0x3f]
      %v3623 = vld [vmem:[%s957 + $0x58] sm:$0x3f]
      %v3624 = vld [vmem:[%s957 + $0x60] sm:$0x3f]
      %v3625 = vld [vmem:[%s957 + $0x68] sm:$0x3f]
      %v3626 = vld [vmem:[%s957 + $0x70] sm:$0x3f]
      %v3627 = vld [vmem:[%s957 + $0x78] sm:$0x3f]
      %v3628 = vld [vmem:[%s957 + $0x80] sm:$0x3f]
      %v3629 = vld [vmem:[%s957 + $0x88] sm:$0x3f]
      %v3630 = vld [vmem:[%s957 + $0x90] sm:$0x3f]
      %v3631 = vld [vmem:[%s957 + $0x98] sm:$0x3f]
      %v3632 = vld [vmem:[%s957 + $0xa0] sm:$0x3f]
      %v3633 = vld [vmem:[%s957 + $0xa8] sm:$0x3f]
      %v3634 = vld [vmem:[%s957 + $0xb0] sm:$0x3f]
      %v3635 = vld [vmem:[%s957 + $0xb8] sm:$0x3f]
      %v3636 = vld [vmem:[%s957 + $0xc0] sm:$0x3f]
      %v3637 = vld [vmem:[%s14] sm:$0xff]
      %v3638 = vld [vmem:[%s14 + $0x8] sm:$0xff]
      %v3639 = vld [vmem:[%s14 + $0x10] sm:$0xff]
      %v3640 = vld [vmem:[%s14 + $0x18] sm:$0xff]
      %v3641 = vld [vmem:[%s14 + $0x20] sm:$0xff]
      %v3642 = vld [vmem:[%s14 + $0x28] sm:$0xff]
      %v3643 = vld [vmem:[%s15] sm:$0x1]
      %v3645 = vlaneseq
      %v3646 = vshrl.u32 %v3645, 7
      %v3647 = vsub.s32 0, %v3646
      %v3648 = vrot.slane %v3643, %v3647
      %v3674 = vcombine.high %v3612, %v3612
      %v3676 = vunpack.c.l.s4 1983009808
      %v3677 = vunpack.c.0.s8 %v3676
      %v3678 = vlaneseq
      %v3679 = vshrl.u32 %v3678, 7
      %v3680 = vsub.s32 %v3677, %v3679
      %v3681 = vrot.slane %v3612, %v3680
      %v3683 = vunpack.c.l.s4 1983009808
      %v3684 = vunpack.c.0.s8 %v3683
      %v3685 = vlaneseq
      %v3686 = vshrl.u32 %v3685, 7
      %v3687 = vsub.s32 %v3684, %v3686
      %v3688 = vrot.slane %v3674, %v3687
      %v3689 = vcombine.high %v3681, %v3681
      %v3690 = vcombine.high %v3613, %v3613
      %v3692 = vunpack.c.l.s4 1983009808
      %v3693 = vunpack.c.0.s8 %v3692
      %v3694 = vlaneseq
      %v3695 = vshrl.u32 %v3694, 7
      %v3696 = vsub.s32 %v3693, %v3695
      %v3697 = vrot.slane %v3613, %v3696
      %v3699 = vunpack.c.l.s4 1983009808
      %v3700 = vunpack.c.0.s8 %v3699
      %v3701 = vlaneseq
      %v3702 = vshrl.u32 %v3701, 7
      %v3703 = vsub.s32 %v3700, %v3702
      %v3704 = vrot.slane %v3690, %v3703
      %v3705 = vcombine.high %v3697, %v3697
      %v3706 = vcombine.high %v3614, %v3614
      %v3708 = vunpack.c.l.s4 1983009808
      %v3709 = vunpack.c.0.s8 %v3708
      %v3710 = vlaneseq
      %v3711 = vshrl.u32 %v3710, 7
      %v3712 = vsub.s32 %v3709, %v3711
      %v3713 = vrot.slane %v3614, %v3712
      %v3715 = vunpack.c.l.s4 1983009808
      %v3716 = vunpack.c.0.s8 %v3715
      %v3717 = vlaneseq
      %v3718 = vshrl.u32 %v3717, 7
      %v3719 = vsub.s32 %v3716, %v3718
      %v3720 = vrot.slane %v3706, %v3719
      %v3721 = vcombine.high %v3713, %v3713
      %v3722 = vcombine.high %v3615, %v3615
      %v3724 = vunpack.c.l.s4 1983009808
      %v3725 = vunpack.c.0.s8 %v3724
      %v3726 = vlaneseq
      %v3727 = vshrl.u32 %v3726, 7
      %v3728 = vsub.s32 %v3725, %v3727
      %v3729 = vrot.slane %v3615, %v3728
      %v3731 = vunpack.c.l.s4 1983009808
      %v3732 = vunpack.c.0.s8 %v3731
      %v3733 = vlaneseq
      %v3734 = vshrl.u32 %v3733, 7
      %v3735 = vsub.s32 %v3732, %v3734
      %v3736 = vrot.slane %v3722, %v3735
      %v3737 = vcombine.high %v3729, %v3729
      %v3738 = vcombine.high %v3616, %v3616
      %v3740 = vunpack.c.l.s4 1983009808
      %v3741 = vunpack.c.0.s8 %v3740
      %v3742 = vlaneseq
      %v3743 = vshrl.u32 %v3742, 7
      %v3744 = vsub.s32 %v3741, %v3743
      %v3745 = vrot.slane %v3616, %v3744
      %v3747 = vunpack.c.l.s4 1983009808
      %v3748 = vunpack.c.0.s8 %v3747
      %v3749 = vlaneseq
      %v3750 = vshrl.u32 %v3749, 7
      %v3751 = vsub.s32 %v3748, %v3750
      %v3752 = vrot.slane %v3738, %v3751
      %v3753 = vcombine.high %v3745, %v3745
      %v3754 = vcombine.high %v3617, %v3617
      %v3756 = vunpack.c.l.s4 1983009808
      %v3757 = vunpack.c.0.s8 %v3756
      %v3758 = vlaneseq
      %v3759 = vshrl.u32 %v3758, 7
      %v3760 = vsub.s32 %v3757, %v3759
      %v3761 = vrot.slane %v3617, %v3760
      %v3763 = vunpack.c.l.s4 1983009808
      %v3764 = vunpack.c.0.s8 %v3763
      %v3765 = vlaneseq
      %v3766 = vshrl.u32 %v3765, 7
      %v3767 = vsub.s32 %v3764, %v3766
      %v3768 = vrot.slane %v3754, %v3767
      %v3769 = vcombine.high %v3761, %v3761
      %v3770 = vcombine.high %v3618, %v3618
      %v3772 = vunpack.c.l.s4 1983009808
      %v3773 = vunpack.c.0.s8 %v3772
      %v3774 = vlaneseq
      %v3775 = vshrl.u32 %v3774, 7
      %v3776 = vsub.s32 %v3773, %v3775
      %v3777 = vrot.slane %v3618, %v3776
      %v3779 = vunpack.c.l.s4 1983009808
      %v3780 = vunpack.c.0.s8 %v3779
      %v3781 = vlaneseq
      %v3782 = vshrl.u32 %v3781, 7
      %v3783 = vsub.s32 %v3780, %v3782
      %v3784 = vrot.slane %v3770, %v3783
      %v3785 = vcombine.high %v3777, %v3777
      %v3786 = vcombine.high %v3619, %v3619
      %v3788 = vunpack.c.l.s4 1983009808
      %v3789 = vunpack.c.0.s8 %v3788
      %v3790 = vlaneseq
      %v3791 = vshrl.u32 %v3790, 7
      %v3792 = vsub.s32 %v3789, %v3791
      %v3793 = vrot.slane %v3619, %v3792
      %v3795 = vunpack.c.l.s4 1983009808
      %v3796 = vunpack.c.0.s8 %v3795
      %v3797 = vlaneseq
      %v3798 = vshrl.u32 %v3797, 7
      %v3799 = vsub.s32 %v3796, %v3798
      %v3800 = vrot.slane %v3786, %v3799
      %v3801 = vcombine.high %v3793, %v3793
      %v3802 = vcombine.high %v3620, %v3620
      %v3804 = vunpack.c.l.s4 1983009808
      %v3805 = vunpack.c.0.s8 %v3804
      %v3806 = vlaneseq
      %v3807 = vshrl.u32 %v3806, 7
      %v3808 = vsub.s32 %v3805, %v3807
      %v3809 = vrot.slane %v3620, %v3808
      %v3811 = vunpack.c.l.s4 1983009808
      %v3812 = vunpack.c.0.s8 %v3811
      %v3813 = vlaneseq
      %v3814 = vshrl.u32 %v3813, 7
      %v3815 = vsub.s32 %v3812, %v3814
      %v3816 = vrot.slane %v3802, %v3815
      %v3817 = vcombine.high %v3809, %v3809
      %v3818 = vcombine.high %v3621, %v3621
      %v3820 = vunpack.c.l.s4 1983009808
      %v3821 = vunpack.c.0.s8 %v3820
      %v3822 = vlaneseq
      %v3823 = vshrl.u32 %v3822, 7
      %v3824 = vsub.s32 %v3821, %v3823
      %v3825 = vrot.slane %v3621, %v3824
      %v3827 = vunpack.c.l.s4 1983009808
      %v3828 = vunpack.c.0.s8 %v3827
      %v3829 = vlaneseq
      %v3830 = vshrl.u32 %v3829, 7
      %v3831 = vsub.s32 %v3828, %v3830
      %v3832 = vrot.slane %v3818, %v3831
      %v3833 = vcombine.high %v3825, %v3825
      %v3834 = vcombine.high %v3622, %v3622
      %v3836 = vunpack.c.l.s4 1983009808
      %v3837 = vunpack.c.0.s8 %v3836
      %v3838 = vlaneseq
      %v3839 = vshrl.u32 %v3838, 7
      %v3840 = vsub.s32 %v3837, %v3839
      %v3841 = vrot.slane %v3622, %v3840
      %v3843 = vunpack.c.l.s4 1983009808
      %v3844 = vunpack.c.0.s8 %v3843
      %v3845 = vlaneseq
      %v3846 = vshrl.u32 %v3845, 7
      %v3847 = vsub.s32 %v3844, %v3846
      %v3848 = vrot.slane %v3834, %v3847
      %v3849 = vcombine.high %v3841, %v3841
      %v3850 = vcombine.high %v3623, %v3623
      %v3852 = vunpack.c.l.s4 1983009808
      %v3853 = vunpack.c.0.s8 %v3852
      %v3854 = vlaneseq
      %v3855 = vshrl.u32 %v3854, 7
      %v3856 = vsub.s32 %v3853, %v3855
      %v3857 = vrot.slane %v3623, %v3856
      %v3859 = vunpack.c.l.s4 1983009808
      %v3860 = vunpack.c.0.s8 %v3859
      %v3861 = vlaneseq
      %v3862 = vshrl.u32 %v3861, 7
      %v3863 = vsub.s32 %v3860, %v3862
      %v3864 = vrot.slane %v3850, %v3863
      %v3865 = vcombine.high %v3857, %v3857
      %v3866 = vcombine.high %v3624, %v3624
      %v3868 = vunpack.c.l.s4 1983009808
      %v3869 = vunpack.c.0.s8 %v3868
      %v3870 = vlaneseq
      %v3871 = vshrl.u32 %v3870, 7
      %v3872 = vsub.s32 %v3869, %v3871
      %v3873 = vrot.slane %v3624, %v3872
      %v3875 = vunpack.c.l.s4 1983009808
      %v3876 = vunpack.c.0.s8 %v3875
      %v3877 = vlaneseq
      %v3878 = vshrl.u32 %v3877, 7
      %v3879 = vsub.s32 %v3876, %v3878
      %v3880 = vrot.slane %v3866, %v3879
      %v3881 = vcombine.high %v3873, %v3873
      %v3882 = vcombine.high %v3625, %v3625
      %v3884 = vunpack.c.l.s4 1983009808
      %v3885 = vunpack.c.0.s8 %v3884
      %v3886 = vlaneseq
      %v3887 = vshrl.u32 %v3886, 7
      %v3888 = vsub.s32 %v3885, %v3887
      %v3889 = vrot.slane %v3625, %v3888
      %v3891 = vunpack.c.l.s4 1983009808
      %v3892 = vunpack.c.0.s8 %v3891
      %v3893 = vlaneseq
      %v3894 = vshrl.u32 %v3893, 7
      %v3895 = vsub.s32 %v3892, %v3894
      %v3896 = vrot.slane %v3882, %v3895
      %v3897 = vcombine.high %v3889, %v3889
      %v3898 = vcombine.high %v3626, %v3626
      %v3900 = vunpack.c.l.s4 1983009808
      %v3901 = vunpack.c.0.s8 %v3900
      %v3902 = vlaneseq
      %v3903 = vshrl.u32 %v3902, 7
      %v3904 = vsub.s32 %v3901, %v3903
      %v3905 = vrot.slane %v3626, %v3904
      %v3907 = vunpack.c.l.s4 1983009808
      %v3908 = vunpack.c.0.s8 %v3907
      %v3909 = vlaneseq
      %v3910 = vshrl.u32 %v3909, 7
      %v3911 = vsub.s32 %v3908, %v3910
      %v3912 = vrot.slane %v3898, %v3911
      %v3913 = vcombine.high %v3905, %v3905
      %v3914 = vcombine.high %v3627, %v3627
      %v3916 = vunpack.c.l.s4 1983009808
      %v3917 = vunpack.c.0.s8 %v3916
      %v3918 = vlaneseq
      %v3919 = vshrl.u32 %v3918, 7
      %v3920 = vsub.s32 %v3917, %v3919
      %v3921 = vrot.slane %v3627, %v3920
      %v3923 = vunpack.c.l.s4 1983009808
      %v3924 = vunpack.c.0.s8 %v3923
      %v3925 = vlaneseq
      %v3926 = vshrl.u32 %v3925, 7
      %v3927 = vsub.s32 %v3924, %v3926
      %v3928 = vrot.slane %v3914, %v3927
      %v3929 = vcombine.high %v3921, %v3921
      %v3930 = vcombine.high %v3628, %v3628
      %v3932 = vunpack.c.l.s4 1983009808
      %v3933 = vunpack.c.0.s8 %v3932
      %v3934 = vlaneseq
      %v3935 = vshrl.u32 %v3934, 7
      %v3936 = vsub.s32 %v3933, %v3935
      %v3937 = vrot.slane %v3628, %v3936
      %v3939 = vunpack.c.l.s4 1983009808
      %v3940 = vunpack.c.0.s8 %v3939
      %v3941 = vlaneseq
      %v3942 = vshrl.u32 %v3941, 7
      %v3943 = vsub.s32 %v3940, %v3942
      %v3944 = vrot.slane %v3930, %v3943
      %v3945 = vcombine.high %v3937, %v3937
      %v3946 = vcombine.high %v3629, %v3629
      %v3948 = vunpack.c.l.s4 1983009808
      %v3949 = vunpack.c.0.s8 %v3948
      %v3950 = vlaneseq
      %v3951 = vshrl.u32 %v3950, 7
      %v3952 = vsub.s32 %v3949, %v3951
      %v3953 = vrot.slane %v3629, %v3952
      %v3955 = vunpack.c.l.s4 1983009808
      %v3956 = vunpack.c.0.s8 %v3955
      %v3957 = vlaneseq
      %v3958 = vshrl.u32 %v3957, 7
      %v3959 = vsub.s32 %v3956, %v3958
      %v3960 = vrot.slane %v3946, %v3959
      %v3961 = vcombine.high %v3953, %v3953
      %v3962 = vcombine.high %v3630, %v3630
      %v3964 = vunpack.c.l.s4 1983009808
      %v3965 = vunpack.c.0.s8 %v3964
      %v3966 = vlaneseq
      %v3967 = vshrl.u32 %v3966, 7
      %v3968 = vsub.s32 %v3965, %v3967
      %v3969 = vrot.slane %v3630, %v3968
      %v3971 = vunpack.c.l.s4 1983009808
      %v3972 = vunpack.c.0.s8 %v3971
      %v3973 = vlaneseq
      %v3974 = vshrl.u32 %v3973, 7
      %v3975 = vsub.s32 %v3972, %v3974
      %v3976 = vrot.slane %v3962, %v3975
      %v3977 = vcombine.high %v3969, %v3969
      %v3978 = vcombine.high %v3631, %v3631
      %v3980 = vunpack.c.l.s4 1983009808
      %v3981 = vunpack.c.0.s8 %v3980
      %v3982 = vlaneseq
      %v3983 = vshrl.u32 %v3982, 7
      %v3984 = vsub.s32 %v3981, %v3983
      %v3985 = vrot.slane %v3631, %v3984
      %v3987 = vunpack.c.l.s4 1983009808
      %v3988 = vunpack.c.0.s8 %v3987
      %v3989 = vlaneseq
      %v3990 = vshrl.u32 %v3989, 7
      %v3991 = vsub.s32 %v3988, %v3990
      %v3992 = vrot.slane %v3978, %v3991
      %v3993 = vcombine.high %v3985, %v3985
      %v3994 = vcombine.high %v3632, %v3632
      %v3996 = vunpack.c.l.s4 1983009808
      %v3997 = vunpack.c.0.s8 %v3996
      %v3998 = vlaneseq
      %v3999 = vshrl.u32 %v3998, 7
      %v4000 = vsub.s32 %v3997, %v3999
      %v4001 = vrot.slane %v3632, %v4000
      %v4003 = vunpack.c.l.s4 1983009808
      %v4004 = vunpack.c.0.s8 %v4003
      %v4005 = vlaneseq
      %v4006 = vshrl.u32 %v4005, 7
      %v4007 = vsub.s32 %v4004, %v4006
      %v4008 = vrot.slane %v3994, %v4007
      %v4009 = vcombine.high %v4001, %v4001
      %v4010 = vcombine.high %v3633, %v3633
      %v4012 = vunpack.c.l.s4 1983009808
      %v4013 = vunpack.c.0.s8 %v4012
      %v4014 = vlaneseq
      %v4015 = vshrl.u32 %v4014, 7
      %v4016 = vsub.s32 %v4013, %v4015
      %v4017 = vrot.slane %v3633, %v4016
      %v4019 = vunpack.c.l.s4 1983009808
      %v4020 = vunpack.c.0.s8 %v4019
      %v4021 = vlaneseq
      %v4022 = vshrl.u32 %v4021, 7
      %v4023 = vsub.s32 %v4020, %v4022
      %v4024 = vrot.slane %v4010, %v4023
      %v4025 = vcombine.high %v4017, %v4017
      %v4026 = vcombine.high %v3634, %v3634
      %v4028 = vunpack.c.l.s4 1983009808
      %v4029 = vunpack.c.0.s8 %v4028
      %v4030 = vlaneseq
      %v4031 = vshrl.u32 %v4030, 7
      %v4032 = vsub.s32 %v4029, %v4031
      %v4033 = vrot.slane %v3634, %v4032
      %v4035 = vunpack.c.l.s4 1983009808
      %v4036 = vunpack.c.0.s8 %v4035
      %v4037 = vlaneseq
      %v4038 = vshrl.u32 %v4037, 7
      %v4039 = vsub.s32 %v4036, %v4038
      %v4040 = vrot.slane %v4026, %v4039
      %v4041 = vcombine.high %v4033, %v4033
      %v4042 = vcombine.high %v3635, %v3635
      %v4044 = vunpack.c.l.s4 1983009808
      %v4045 = vunpack.c.0.s8 %v4044
      %v4046 = vlaneseq
      %v4047 = vshrl.u32 %v4046, 7
      %v4048 = vsub.s32 %v4045, %v4047
      %v4049 = vrot.slane %v3635, %v4048
      %v4051 = vunpack.c.l.s4 1983009808
      %v4052 = vunpack.c.0.s8 %v4051
      %v4053 = vlaneseq
      %v4054 = vshrl.u32 %v4053, 7
      %v4055 = vsub.s32 %v4052, %v4054
      %v4056 = vrot.slane %v4042, %v4055
      %v4057 = vcombine.high %v4049, %v4049
      %v4058 = vcombine.high %v3636, %v3636
      %v4060 = vunpack.c.l.s4 1983009808
      %v4061 = vunpack.c.0.s8 %v4060
      %v4062 = vlaneseq
      %v4063 = vshrl.u32 %v4062, 7
      %v4064 = vsub.s32 %v4061, %v4063
      %v4065 = vrot.slane %v3636, %v4064
      %v4067 = vunpack.c.l.s4 1983009808
      %v4068 = vunpack.c.0.s8 %v4067
      %v4069 = vlaneseq
      %v4070 = vshrl.u32 %v4069, 7
      %v4071 = vsub.s32 %v4068, %v4070
      %v4072 = vrot.slane %v4058, %v4071
      %v4073 = vcombine.high %v4065, %v4065
      %v4074 = vcombine.high %v3648, %v3648
      %v4076 = vunpack.c.l.s4 1983009808
      %v4077 = vunpack.c.0.s8 %v4076
      %v4078 = vlaneseq
      %v4079 = vshrl.u32 %v4078, 7
      %v4080 = vsub.s32 %v4077, %v4079
      %v4081 = vrot.slane %v3648, %v4080
      %v4083 = vunpack.c.l.s4 1983009808
      %v4084 = vunpack.c.0.s8 %v4083
      %v4085 = vlaneseq
      %v4086 = vshrl.u32 %v4085, 7
      %v4087 = vsub.s32 %v4084, %v4086
      %v4088 = vrot.slane %v4074, %v4087
      %v4089 = vcombine.high %v4081, %v4081
      %v4090 = vcombine.low %v3681, %v3689
      %v4091 = vcombine.low %v3688, %v3697
      %v4093 = vunpack.c.l.s4 1983009808
      %v4094 = vunpack.c.0.s8 %v4093
      %v4095 = vlaneseq
      %v4096 = vshrl.u32 %v4095, 7
      %v4097 = vsub.s32 %v4094, %v4096
      %v4098 = vrot.slane %v4090, %v4097
      %v4100 = vunpack.c.l.s4 1983009808
      %v4101 = vunpack.c.0.s8 %v4100
      %v4102 = vlaneseq
      %v4103 = vshrl.u32 %v4102, 7
      %v4104 = vsub.s32 %v4101, %v4103
      %v4105 = vrot.slane %v4091, %v4104
      %v4106 = vcombine.low %v4098, %v4105
      %v4107 = vcombine.low %v3705, %v3704
      %v4108 = vcombine.low %v3713, %v3721
      %v4110 = vunpack.c.l.s4 1983009808
      %v4111 = vunpack.c.0.s8 %v4110
      %v4112 = vlaneseq
      %v4113 = vshrl.u32 %v4112, 7
      %v4114 = vsub.s32 %v4111, %v4113
      %v4115 = vrot.slane %v4107, %v4114
      %v4117 = vunpack.c.l.s4 1983009808
      %v4118 = vunpack.c.0.s8 %v4117
      %v4119 = vlaneseq
      %v4120 = vshrl.u32 %v4119, 7
      %v4121 = vsub.s32 %v4118, %v4120
      %v4122 = vrot.slane %v4108, %v4121
      %v4123 = vcombine.low %v4115, %v4122
      %v4124 = vcombine.low %v3720, %v3729
      %v4125 = vcombine.low %v3737, %v3736
      %v4127 = vunpack.c.l.s4 1983009808
      %v4128 = vunpack.c.0.s8 %v4127
      %v4129 = vlaneseq
      %v4130 = vshrl.u32 %v4129, 7
      %v4131 = vsub.s32 %v4128, %v4130
      %v4132 = vrot.slane %v4124, %v4131
      %v4134 = vunpack.c.l.s4 1983009808
      %v4135 = vunpack.c.0.s8 %v4134
      %v4136 = vlaneseq
      %v4137 = vshrl.u32 %v4136, 7
      %v4138 = vsub.s32 %v4135, %v4137
      %v4139 = vrot.slane %v4125, %v4138
      %v4140 = vcombine.low %v4132, %v4139
      %v4141 = vcombine.low %v3745, %v3753
      %v4142 = vcombine.low %v3752, %v3761
      %v4144 = vunpack.c.l.s4 1983009808
      %v4145 = vunpack.c.0.s8 %v4144
      %v4146 = vlaneseq
      %v4147 = vshrl.u32 %v4146, 7
      %v4148 = vsub.s32 %v4145, %v4147
      %v4149 = vrot.slane %v4141, %v4148
      %v4151 = vunpack.c.l.s4 1983009808
      %v4152 = vunpack.c.0.s8 %v4151
      %v4153 = vlaneseq
      %v4154 = vshrl.u32 %v4153, 7
      %v4155 = vsub.s32 %v4152, %v4154
      %v4156 = vrot.slane %v4142, %v4155
      %v4157 = vcombine.low %v4149, %v4156
      %v4158 = vcombine.low %v3769, %v3768
      %v4159 = vcombine.low %v3777, %v3785
      %v4161 = vunpack.c.l.s4 1983009808
      %v4162 = vunpack.c.0.s8 %v4161
      %v4163 = vlaneseq
      %v4164 = vshrl.u32 %v4163, 7
      %v4165 = vsub.s32 %v4162, %v4164
      %v4166 = vrot.slane %v4158, %v4165
      %v4168 = vunpack.c.l.s4 1983009808
      %v4169 = vunpack.c.0.s8 %v4168
      %v4170 = vlaneseq
      %v4171 = vshrl.u32 %v4170, 7
      %v4172 = vsub.s32 %v4169, %v4171
      %v4173 = vrot.slane %v4159, %v4172
      %v4174 = vcombine.low %v4166, %v4173
      %v4175 = vcombine.low %v3784, %v3793
      %v4176 = vcombine.low %v3801, %v3800
      %v4178 = vunpack.c.l.s4 1983009808
      %v4179 = vunpack.c.0.s8 %v4178
      %v4180 = vlaneseq
      %v4181 = vshrl.u32 %v4180, 7
      %v4182 = vsub.s32 %v4179, %v4181
      %v4183 = vrot.slane %v4175, %v4182
      %v4185 = vunpack.c.l.s4 1983009808
      %v4186 = vunpack.c.0.s8 %v4185
      %v4187 = vlaneseq
      %v4188 = vshrl.u32 %v4187, 7
      %v4189 = vsub.s32 %v4186, %v4188
      %v4190 = vrot.slane %v4176, %v4189
      %v4191 = vcombine.low %v4183, %v4190
      %v4192 = vcombine.low %v3809, %v3817
      %v4193 = vcombine.low %v3816, %v3825
      %v4195 = vunpack.c.l.s4 1983009808
      %v4196 = vunpack.c.0.s8 %v4195
      %v4197 = vlaneseq
      %v4198 = vshrl.u32 %v4197, 7
      %v4199 = vsub.s32 %v4196, %v4198
      %v4200 = vrot.slane %v4192, %v4199
      %v4202 = vunpack.c.l.s4 1983009808
      %v4203 = vunpack.c.0.s8 %v4202
      %v4204 = vlaneseq
      %v4205 = vshrl.u32 %v4204, 7
      %v4206 = vsub.s32 %v4203, %v4205
      %v4207 = vrot.slane %v4193, %v4206
      %v4208 = vcombine.low %v4200, %v4207
      %v4209 = vcombine.low %v3833, %v3832
      %v4210 = vcombine.low %v3841, %v3849
      %v4212 = vunpack.c.l.s4 1983009808
      %v4213 = vunpack.c.0.s8 %v4212
      %v4214 = vlaneseq
      %v4215 = vshrl.u32 %v4214, 7
      %v4216 = vsub.s32 %v4213, %v4215
      %v4217 = vrot.slane %v4209, %v4216
      %v4219 = vunpack.c.l.s4 1983009808
      %v4220 = vunpack.c.0.s8 %v4219
      %v4221 = vlaneseq
      %v4222 = vshrl.u32 %v4221, 7
      %v4223 = vsub.s32 %v4220, %v4222
      %v4224 = vrot.slane %v4210, %v4223
      %v4225 = vcombine.low %v4217, %v4224
      %v4226 = vcombine.low %v3848, %v3857
      %v4227 = vcombine.low %v3865, %v3864
      %v4229 = vunpack.c.l.s4 1983009808
      %v4230 = vunpack.c.0.s8 %v4229
      %v4231 = vlaneseq
      %v4232 = vshrl.u32 %v4231, 7
      %v4233 = vsub.s32 %v4230, %v4232
      %v4234 = vrot.slane %v4226, %v4233
      %v4236 = vunpack.c.l.s4 1983009808
      %v4237 = vunpack.c.0.s8 %v4236
      %v4238 = vlaneseq
      %v4239 = vshrl.u32 %v4238, 7
      %v4240 = vsub.s32 %v4237, %v4239
      %v4241 = vrot.slane %v4227, %v4240
      %v4242 = vcombine.low %v4234, %v4241
      %v4243 = vcombine.low %v3873, %v3881
      %v4244 = vcombine.low %v3880, %v3889
      %v4246 = vunpack.c.l.s4 1983009808
      %v4247 = vunpack.c.0.s8 %v4246
      %v4248 = vlaneseq
      %v4249 = vshrl.u32 %v4248, 7
      %v4250 = vsub.s32 %v4247, %v4249
      %v4251 = vrot.slane %v4243, %v4250
      %v4253 = vunpack.c.l.s4 1983009808
      %v4254 = vunpack.c.0.s8 %v4253
      %v4255 = vlaneseq
      %v4256 = vshrl.u32 %v4255, 7
      %v4257 = vsub.s32 %v4254, %v4256
      %v4258 = vrot.slane %v4244, %v4257
      %v4259 = vcombine.low %v4251, %v4258
      %v4260 = vcombine.low %v3897, %v3896
      %v4261 = vcombine.low %v3905, %v3913
      %v4263 = vunpack.c.l.s4 1983009808
      %v4264 = vunpack.c.0.s8 %v4263
      %v4265 = vlaneseq
      %v4266 = vshrl.u32 %v4265, 7
      %v4267 = vsub.s32 %v4264, %v4266
      %v4268 = vrot.slane %v4260, %v4267
      %v4270 = vunpack.c.l.s4 1983009808
      %v4271 = vunpack.c.0.s8 %v4270
      %v4272 = vlaneseq
      %v4273 = vshrl.u32 %v4272, 7
      %v4274 = vsub.s32 %v4271, %v4273
      %v4275 = vrot.slane %v4261, %v4274
      %v4276 = vcombine.low %v4268, %v4275
      %v4277 = vcombine.low %v3912, %v3921
      %v4278 = vcombine.low %v3929, %v3928
      %v4280 = vunpack.c.l.s4 1983009808
      %v4281 = vunpack.c.0.s8 %v4280
      %v4282 = vlaneseq
      %v4283 = vshrl.u32 %v4282, 7
      %v4284 = vsub.s32 %v4281, %v4283
      %v4285 = vrot.slane %v4277, %v4284
      %v4287 = vunpack.c.l.s4 1983009808
      %v4288 = vunpack.c.0.s8 %v4287
      %v4289 = vlaneseq
      %v4290 = vshrl.u32 %v4289, 7
      %v4291 = vsub.s32 %v4288, %v4290
      %v4292 = vrot.slane %v4278, %v4291
      %v4293 = vcombine.low %v4285, %v4292
      %v4294 = vcombine.low %v3937, %v3945
      %v4295 = vcombine.low %v3944, %v3953
      %v4297 = vunpack.c.l.s4 1983009808
      %v4298 = vunpack.c.0.s8 %v4297
      %v4299 = vlaneseq
      %v4300 = vshrl.u32 %v4299, 7
      %v4301 = vsub.s32 %v4298, %v4300
      %v4302 = vrot.slane %v4294, %v4301
      %v4304 = vunpack.c.l.s4 1983009808
      %v4305 = vunpack.c.0.s8 %v4304
      %v4306 = vlaneseq
      %v4307 = vshrl.u32 %v4306, 7
      %v4308 = vsub.s32 %v4305, %v4307
      %v4309 = vrot.slane %v4295, %v4308
      %v4310 = vcombine.low %v4302, %v4309
      %v4311 = vcombine.low %v3961, %v3960
      %v4312 = vcombine.low %v3969, %v3977
      %v4314 = vunpack.c.l.s4 1983009808
      %v4315 = vunpack.c.0.s8 %v4314
      %v4316 = vlaneseq
      %v4317 = vshrl.u32 %v4316, 7
      %v4318 = vsub.s32 %v4315, %v4317
      %v4319 = vrot.slane %v4311, %v4318
      %v4321 = vunpack.c.l.s4 1983009808
      %v4322 = vunpack.c.0.s8 %v4321
      %v4323 = vlaneseq
      %v4324 = vshrl.u32 %v4323, 7
      %v4325 = vsub.s32 %v4322, %v4324
      %v4326 = vrot.slane %v4312, %v4325
      %v4327 = vcombine.low %v4319, %v4326
      %v4328 = vcombine.low %v3976, %v3985
      %v4329 = vcombine.low %v3993, %v3992
      %v4331 = vunpack.c.l.s4 1983009808
      %v4332 = vunpack.c.0.s8 %v4331
      %v4333 = vlaneseq
      %v4334 = vshrl.u32 %v4333, 7
      %v4335 = vsub.s32 %v4332, %v4334
      %v4336 = vrot.slane %v4328, %v4335
      %v4338 = vunpack.c.l.s4 1983009808
      %v4339 = vunpack.c.0.s8 %v4338
      %v4340 = vlaneseq
      %v4341 = vshrl.u32 %v4340, 7
      %v4342 = vsub.s32 %v4339, %v4341
      %v4343 = vrot.slane %v4329, %v4342
      %v4344 = vcombine.low %v4336, %v4343
      %v4345 = vcombine.low %v4001, %v4009
      %v4346 = vcombine.low %v4008, %v4017
      %v4348 = vunpack.c.l.s4 1983009808
      %v4349 = vunpack.c.0.s8 %v4348
      %v4350 = vlaneseq
      %v4351 = vshrl.u32 %v4350, 7
      %v4352 = vsub.s32 %v4349, %v4351
      %v4353 = vrot.slane %v4345, %v4352
      %v4355 = vunpack.c.l.s4 1983009808
      %v4356 = vunpack.c.0.s8 %v4355
      %v4357 = vlaneseq
      %v4358 = vshrl.u32 %v4357, 7
      %v4359 = vsub.s32 %v4356, %v4358
      %v4360 = vrot.slane %v4346, %v4359
      %v4361 = vcombine.low %v4353, %v4360
      %v4362 = vcombine.low %v4025, %v4024
      %v4363 = vcombine.low %v4033, %v4041
      %v4365 = vunpack.c.l.s4 1983009808
      %v4366 = vunpack.c.0.s8 %v4365
      %v4367 = vlaneseq
      %v4368 = vshrl.u32 %v4367, 7
      %v4369 = vsub.s32 %v4366, %v4368
      %v4370 = vrot.slane %v4362, %v4369
      %v4372 = vunpack.c.l.s4 1983009808
      %v4373 = vunpack.c.0.s8 %v4372
      %v4374 = vlaneseq
      %v4375 = vshrl.u32 %v4374, 7
      %v4376 = vsub.s32 %v4373, %v4375
      %v4377 = vrot.slane %v4363, %v4376
      %v4378 = vcombine.low %v4370, %v4377
      %v4379 = vcombine.low %v4040, %v4049
      %v4380 = vcombine.low %v4057, %v4056
      %v4382 = vunpack.c.l.s4 1983009808
      %v4383 = vunpack.c.0.s8 %v4382
      %v4384 = vlaneseq
      %v4385 = vshrl.u32 %v4384, 7
      %v4386 = vsub.s32 %v4383, %v4385
      %v4387 = vrot.slane %v4379, %v4386
      %v4389 = vunpack.c.l.s4 1983009808
      %v4390 = vunpack.c.0.s8 %v4389
      %v4391 = vlaneseq
      %v4392 = vshrl.u32 %v4391, 7
      %v4393 = vsub.s32 %v4390, %v4392
      %v4394 = vrot.slane %v4380, %v4393
      %v4395 = vcombine.low %v4387, %v4394
      %v4396 = vcombine.low %v4065, %v4073
      %v4398 = vunpack.c.l.s4 1983009808
      %v4399 = vunpack.c.0.s8 %v4398
      %v4400 = vlaneseq
      %v4401 = vshrl.u32 %v4400, 7
      %v4402 = vsub.s32 %v4399, %v4401
      %v4403 = vrot.slane %v4396, %v4402
      %v4405 = vunpack.c.l.s4 1983009808
      %v4406 = vunpack.c.0.s8 %v4405
      %v4407 = vlaneseq
      %v4408 = vshrl.u32 %v4407, 7
      %v4409 = vsub.s32 %v4406, %v4408
      %v4410 = vrot.slane %v4072, %v4409
      %v4411 = vcombine.low %v4403, %v4410
      %v4412 = vcombine.low %v4081, %v4089
      %v4413 = vcombine.low %v4088, %v4081
      %v4415 = vunpack.c.l.s4 1983009808
      %v4416 = vunpack.c.0.s8 %v4415
      %v4417 = vlaneseq
      %v4418 = vshrl.u32 %v4417, 7
      %v4419 = vsub.s32 %v4416, %v4418
      %v4420 = vrot.slane %v4412, %v4419
      %v4422 = vunpack.c.l.s4 1983009808
      %v4423 = vunpack.c.0.s8 %v4422
      %v4424 = vlaneseq
      %v4425 = vshrl.u32 %v4424, 7
      %v4426 = vsub.s32 %v4423, %v4425
      %v4427 = vrot.slane %v4413, %v4426
      %v4428 = vcombine.low %v4420, %v4427
      %v4429 = vcombine.low %v4089, %v4088
      %v4431 = vunpack.c.l.s4 1983009808
      %v4432 = vunpack.c.0.s8 %v4431
      %v4433 = vlaneseq
      %v4434 = vshrl.u32 %v4433, 7
      %v4435 = vsub.s32 %v4432, %v4434
      %v4436 = vrot.slane %v4429, %v4435
      %v4437 = vcombine.low %v4436, %v4420
      %v4438 = vcombine.low %v4427, %v4436
      %v4440 = vunpack.c.l.s4 1983009808
      %v4441 = vunpack.c.0.s8 %v4440
      %v4442 = vlaneseq
      %v4443 = vshrl.u32 %v4442, 7
      %v4444 = vsub.s32 %v4441, %v4443
      %v4445 = vrot.slane %v4088, %v4444
      %v4446 = vcombine.low %v4420, %v4445
      %v4451 = vsel %vm1820, %v4106, 0
      %v4453 = vsel %vm1820, %v4123, 0
      %v4455 = vsel %vm1820, %v4140, 0
      %v4457 = vsel %vm1820, %v4157, 0
      %v4459 = vsel %vm1820, %v4174, 0
      %v4461 = vsel %vm1820, %v4191, 0
      %v4463 = vsel %vm1820, %v4208, 0
      %v4465 = vsel %vm1820, %v4225, 0
      %v4467 = vsel %vm1820, %v4242, 0
      %v4469 = vsel %vm1820, %v4259, 0
      %v4471 = vsel %vm1820, %v4276, 0
      %v4473 = vsel %vm1820, %v4293, 0
      %v4475 = vsel %vm1820, %v4310, 0
      %v4477 = vsel %vm1820, %v4327, 0
      %v4479 = vsel %vm1820, %v4344, 0
      %v4481 = vsel %vm1820, %v4361, 0
      %v4483 = vsel %vm1820, %v4378, 0
      %v4485 = vsel %vm1820, %v4395, 0
      %v4487 = vsel %vm1820, %v4411, 0
      %4489 = vmatprep.subr.mxu0 0.0
      %4490 = vmatpush1.msra.mxu0 0.0
      %4491 = vmatprep.subr.mxu0 0.0
      %4492 = vmatpush1.msra.mxu0 0.0
      %4493 = vmatprep.subr.mxu0 0.0
      %4494 = vmatpush1.msra.mxu0 0.0
      %4495 = vmatprep.subr.mxu0 0.0
      %4496 = vmatpush1.msra.mxu0 0.0
      %4497 = vmatprep.subr.mxu0 0.0
      %4498 = vmatpush1.msra.mxu0 0.0
      %4499 = vmatprep.subr.mxu0 0.0
      %4500 = vmatpush1.msra.mxu0 0.0
      %4501 = vmatprep.subr.mxu0 0.0
      %4502 = vmatpush1.msra.mxu0 0.0
      %4503 = vmatprep.subr.mxu0 0.0
      %4504 = vmatpush1.msra.mxu0 0.0
      %4505 = vmatprep.subr.mxu0 0.0
      %4506 = vmatpush1.msra.mxu0 0.0
      %4507 = vmatprep.subr.mxu0 0.0
      %4508 = vmatpush1.msra.mxu0 0.0
      %4509 = vmatprep.subr.mxu0 0.0
      %4510 = vmatpush1.msra.mxu0 %v3642
      %4511 = vmatprep.subr.mxu0 0.0
      %4512 = vmatpush1.msra.mxu0 %v3641
      %4513 = vmatprep.subr.mxu0 0.0
      %4514 = vmatpush1.msra.mxu0 %v3640
      %4515 = vmatprep.subr.mxu0 0.0
      %4516 = vmatpush1.msra.mxu0 %v3639
      %4517 = vmatprep.subr.mxu0 0.0
      %4518 = vmatpush1.msra.mxu0 %v3638
      %4519 = vmatprep.subr.mxu0 0.0
      %4520 = vmatpush1.msra.mxu0 %v3637
      %4521 = vmatprep.subr.mxu0 0.0
      %4522 = vmatpush2.msra.mxu0 0.0
      %4523 = vmatprep.subr.mxu0 0.0
      %4524 = vmatpush2.msra.mxu0 0.0
      %4525 = vmatprep.subr.mxu0 0.0
      %4526 = vmatpush2.msra.mxu0 0.0
      %4527 = vmatprep.subr.mxu0 0.0
      %4528 = vmatpush2.msra.mxu0 0.0
      %4529 = vmatprep.subr.mxu0 0.0
      %4530 = vmatpush2.msra.mxu0 0.0
      %4531 = vmatprep.subr.mxu0 0.0
      %4532 = vmatpush2.msra.mxu0 0.0
      %4533 = vmatprep.subr.mxu0 0.0
      %4534 = vmatpush2.msra.mxu0 0.0
      %4535 = vmatprep.subr.mxu0 0.0
      %4536 = vmatpush2.msra.mxu0 0.0
      %4537 = vmatprep.subr.mxu0 0.0
      %4538 = vmatpush2.msra.mxu0 0.0
      %4539 = vmatprep.subr.mxu0 0.0
      %4540 = vmatpush2.msra.mxu0 0.0
      %4541 = vmatprep.subr.mxu0 0.0
      %4542 = vmatpush2.msra.mxu0 0.0
      %4543 = vmatprep.subr.mxu0 0.0
      %4544 = vmatpush2.msra.mxu0 0.0
      %4545 = vmatprep.subr.mxu0 0.0
      %4546 = vmatpush2.msra.mxu0 0.0
      %4547 = vmatprep.subr.mxu0 0.0
      %4548 = vmatpush2.msra.mxu0 0.0
      %4549 = vmatprep.subr.mxu0 0.0
      %4550 = vmatpush2.msra.mxu0 0.0
      %4551 = vmatprep.subr.mxu0 0.0
      %4552 = vmatpush2.msra.mxu0 0.0
      %4553 = vmatprep.mubr.f32.mxu0 0.0
      %4554 = vmatmul.mubr.f32.gmra.mxu0 %v4451
      %v4555 = vpop.f32.mrf.mxu0
      %v4556 = vadd.f32 %v4428, %v4555
      %v4557 = vpop.f32.mrf.mxu0
      %4558 = vmatprep.mubr.f32.mxu0 0.0
      %4559 = vmatmul.mubr.f32.gmra.mxu0 %v4453
      %v4560 = vpop.f32.mrf.mxu0
      %v4561 = vadd.f32 %v4437, %v4560
      %v4562 = vpop.f32.mrf.mxu0
      %4563 = vmatprep.mubr.f32.mxu0 0.0
      %4564 = vmatmul.mubr.f32.gmra.mxu0 %v4455
      %v4565 = vpop.f32.mrf.mxu0
      %v4566 = vadd.f32 %v4438, %v4565
      %v4567 = vpop.f32.mrf.mxu0
      %4568 = vmatprep.mubr.f32.mxu0 0.0
      %4569 = vmatmul.mubr.f32.gmra.mxu0 %v4457
      %v4570 = vpop.f32.mrf.mxu0
      %v4571 = vadd.f32 %v4428, %v4570
      %v4572 = vpop.f32.mrf.mxu0
      %4573 = vmatprep.mubr.f32.mxu0 0.0
      %4574 = vmatmul.mubr.f32.gmra.mxu0 %v4459
      %v4575 = vpop.f32.mrf.mxu0
      %v4576 = vadd.f32 %v4437, %v4575
      %v4577 = vpop.f32.mrf.mxu0
      %4578 = vmatprep.mubr.f32.mxu0 0.0
      %4579 = vmatmul.mubr.f32.gmra.mxu0 %v4461
      %v4580 = vpop.f32.mrf.mxu0
      %v4581 = vadd.f32 %v4438, %v4580
      %v4582 = vpop.f32.mrf.mxu0
      %4583 = vmatprep.mubr.f32.mxu0 0.0
      %4584 = vmatmul.mubr.f32.gmra.mxu0 %v4463
      %v4585 = vpop.f32.mrf.mxu0
      %v4586 = vadd.f32 %v4428, %v4585
      %v4587 = vpop.f32.mrf.mxu0
      %4588 = vmatprep.mubr.f32.mxu0 0.0
      %4589 = vmatmul.mubr.f32.gmra.mxu0 %v4465
      %v4590 = vpop.f32.mrf.mxu0
      %v4591 = vadd.f32 %v4437, %v4590
      %v4592 = vpop.f32.mrf.mxu0
      %4593 = vmatprep.mubr.f32.mxu0 0.0
      %4594 = vmatmul.mubr.f32.gmra.mxu0 %v4467
      %v4595 = vpop.f32.mrf.mxu0
      %v4596 = vadd.f32 %v4438, %v4595
      %v4597 = vpop.f32.mrf.mxu0
      %4598 = vmatprep.mubr.f32.mxu0 0.0
      %4599 = vmatmul.mubr.f32.gmra.mxu0 %v4469
      %v4600 = vpop.f32.mrf.mxu0
      %v4601 = vadd.f32 %v4428, %v4600
      %v4602 = vpop.f32.mrf.mxu0
      %4603 = vmatprep.mubr.f32.mxu0 0.0
      %4604 = vmatmul.mubr.f32.gmra.mxu0 %v4471
      %v4605 = vpop.f32.mrf.mxu0
      %v4606 = vadd.f32 %v4437, %v4605
      %v4607 = vpop.f32.mrf.mxu0
      %4608 = vmatprep.mubr.f32.mxu0 0.0
      %4609 = vmatmul.mubr.f32.gmra.mxu0 %v4473
      %v4610 = vpop.f32.mrf.mxu0
      %v4611 = vadd.f32 %v4438, %v4610
      %v4612 = vpop.f32.mrf.mxu0
      %4613 = vmatprep.mubr.f32.mxu0 0.0
      %4614 = vmatmul.mubr.f32.gmra.mxu0 %v4475
      %v4615 = vpop.f32.mrf.mxu0
      %v4616 = vadd.f32 %v4428, %v4615
      %v4617 = vpop.f32.mrf.mxu0
      %4618 = vmatprep.mubr.f32.mxu0 0.0
      %4619 = vmatmul.mubr.f32.gmra.mxu0 %v4477
      %v4620 = vpop.f32.mrf.mxu0
      %v4621 = vadd.f32 %v4437, %v4620
      %v4622 = vpop.f32.mrf.mxu0
      %4623 = vmatprep.mubr.f32.mxu0 0.0
      %4624 = vmatmul.mubr.f32.gmra.mxu0 %v4479
      %v4625 = vpop.f32.mrf.mxu0
      %v4626 = vadd.f32 %v4438, %v4625
      %v4627 = vpop.f32.mrf.mxu0
      %4628 = vmatprep.mubr.f32.mxu0 0.0
      %4629 = vmatmul.mubr.f32.gmra.mxu0 %v4481
      %v4630 = vpop.f32.mrf.mxu0
      %v4631 = vadd.f32 %v4428, %v4630
      %v4632 = vpop.f32.mrf.mxu0
      %4633 = vmatprep.mubr.f32.mxu0 0.0
      %4634 = vmatmul.mubr.f32.gmra.mxu0 %v4483
      %v4635 = vpop.f32.mrf.mxu0
      %v4636 = vadd.f32 %v4437, %v4635
      %v4637 = vpop.f32.mrf.mxu0
      %4638 = vmatprep.mubr.f32.mxu0 0.0
      %4639 = vmatmul.mubr.f32.gmra.mxu0 %v4485
      %v4640 = vpop.f32.mrf.mxu0
      %v4641 = vadd.f32 %v4438, %v4640
      %v4642 = vpop.f32.mrf.mxu0
      %4643 = vmatprep.mubr.f32.mxu0 0.0
      %4644 = vmatmul.mubr.f32.gmra.mxu0 %v4487
      %v4645 = vpop.f32.mrf.mxu0
      %v4646 = vadd.f32 %v4446, %v4645
      %v4647 = vpop.f32.mrf.mxu0
      %4648 = vdwg.mxu0
      %v4668 = vcombine.high %v4556, %v4556
      %v4670 = vunpack.c.l.s4 1983009808
      %v4671 = vunpack.c.0.s8 %v4670
      %v4672 = vlaneseq
      %v4673 = vshrl.u32 %v4672, 7
      %v4674 = vsub.s32 %v4671, %v4673
      %v4675 = vrot.slane %v4556, %v4674
      %v4677 = vunpack.c.l.s4 1983009808
      %v4678 = vunpack.c.0.s8 %v4677
      %v4679 = vlaneseq
      %v4680 = vshrl.u32 %v4679, 7
      %v4681 = vsub.s32 %v4678, %v4680
      %v4682 = vrot.slane %v4668, %v4681
      %v4683 = vcombine.high %v4675, %v4675
      %v4684 = vcombine.high %v4682, %v4682
      %v4685 = vcombine.high %v4561, %v4561
      %v4687 = vunpack.c.l.s4 1983009808
      %v4688 = vunpack.c.0.s8 %v4687
      %v4689 = vlaneseq
      %v4690 = vshrl.u32 %v4689, 7
      %v4691 = vsub.s32 %v4688, %v4690
      %v4692 = vrot.slane %v4561, %v4691
      %v4694 = vunpack.c.l.s4 1983009808
      %v4695 = vunpack.c.0.s8 %v4694
      %v4696 = vlaneseq
      %v4697 = vshrl.u32 %v4696, 7
      %v4698 = vsub.s32 %v4695, %v4697
      %v4699 = vrot.slane %v4685, %v4698
      %v4700 = vcombine.high %v4692, %v4692
      %v4701 = vcombine.high %v4699, %v4699
      %v4702 = vcombine.high %v4566, %v4566
      %v4704 = vunpack.c.l.s4 1983009808
      %v4705 = vunpack.c.0.s8 %v4704
      %v4706 = vlaneseq
      %v4707 = vshrl.u32 %v4706, 7
      %v4708 = vsub.s32 %v4705, %v4707
      %v4709 = vrot.slane %v4566, %v4708
      %v4711 = vunpack.c.l.s4 1983009808
      %v4712 = vunpack.c.0.s8 %v4711
      %v4713 = vlaneseq
      %v4714 = vshrl.u32 %v4713, 7
      %v4715 = vsub.s32 %v4712, %v4714
      %v4716 = vrot.slane %v4702, %v4715
      %v4717 = vcombine.high %v4709, %v4709
      %v4718 = vcombine.high %v4716, %v4716
      %v4719 = vcombine.high %v4571, %v4571
      %v4721 = vunpack.c.l.s4 1983009808
      %v4722 = vunpack.c.0.s8 %v4721
      %v4723 = vlaneseq
      %v4724 = vshrl.u32 %v4723, 7
      %v4725 = vsub.s32 %v4722, %v4724
      %v4726 = vrot.slane %v4571, %v4725
      %v4728 = vunpack.c.l.s4 1983009808
      %v4729 = vunpack.c.0.s8 %v4728
      %v4730 = vlaneseq
      %v4731 = vshrl.u32 %v4730, 7
      %v4732 = vsub.s32 %v4729, %v4731
      %v4733 = vrot.slane %v4719, %v4732
      %v4734 = vcombine.high %v4726, %v4726
      %v4735 = vcombine.high %v4733, %v4733
      %v4736 = vcombine.high %v4576, %v4576
      %v4738 = vunpack.c.l.s4 1983009808
      %v4739 = vunpack.c.0.s8 %v4738
      %v4740 = vlaneseq
      %v4741 = vshrl.u32 %v4740, 7
      %v4742 = vsub.s32 %v4739, %v4741
      %v4743 = vrot.slane %v4576, %v4742
      %v4745 = vunpack.c.l.s4 1983009808
      %v4746 = vunpack.c.0.s8 %v4745
      %v4747 = vlaneseq
      %v4748 = vshrl.u32 %v4747, 7
      %v4749 = vsub.s32 %v4746, %v4748
      %v4750 = vrot.slane %v4736, %v4749
      %v4751 = vcombine.high %v4743, %v4743
      %v4752 = vcombine.high %v4750, %v4750
      %v4753 = vcombine.high %v4581, %v4581
      %v4755 = vunpack.c.l.s4 1983009808
      %v4756 = vunpack.c.0.s8 %v4755
      %v4757 = vlaneseq
      %v4758 = vshrl.u32 %v4757, 7
      %v4759 = vsub.s32 %v4756, %v4758
      %v4760 = vrot.slane %v4581, %v4759
      %v4762 = vunpack.c.l.s4 1983009808
      %v4763 = vunpack.c.0.s8 %v4762
      %v4764 = vlaneseq
      %v4765 = vshrl.u32 %v4764, 7
      %v4766 = vsub.s32 %v4763, %v4765
      %v4767 = vrot.slane %v4753, %v4766
      %v4768 = vcombine.high %v4760, %v4760
      %v4769 = vcombine.high %v4767, %v4767
      %v4770 = vcombine.high %v4586, %v4586
      %v4772 = vunpack.c.l.s4 1983009808
      %v4773 = vunpack.c.0.s8 %v4772
      %v4774 = vlaneseq
      %v4775 = vshrl.u32 %v4774, 7
      %v4776 = vsub.s32 %v4773, %v4775
      %v4777 = vrot.slane %v4586, %v4776
      %v4779 = vunpack.c.l.s4 1983009808
      %v4780 = vunpack.c.0.s8 %v4779
      %v4781 = vlaneseq
      %v4782 = vshrl.u32 %v4781, 7
      %v4783 = vsub.s32 %v4780, %v4782
      %v4784 = vrot.slane %v4770, %v4783
      %v4785 = vcombine.high %v4777, %v4777
      %v4786 = vcombine.high %v4784, %v4784
      %v4787 = vcombine.high %v4591, %v4591
      %v4789 = vunpack.c.l.s4 1983009808
      %v4790 = vunpack.c.0.s8 %v4789
      %v4791 = vlaneseq
      %v4792 = vshrl.u32 %v4791, 7
      %v4793 = vsub.s32 %v4790, %v4792
      %v4794 = vrot.slane %v4591, %v4793
      %v4796 = vunpack.c.l.s4 1983009808
      %v4797 = vunpack.c.0.s8 %v4796
      %v4798 = vlaneseq
      %v4799 = vshrl.u32 %v4798, 7
      %v4800 = vsub.s32 %v4797, %v4799
      %v4801 = vrot.slane %v4787, %v4800
      %v4802 = vcombine.high %v4794, %v4794
      %v4803 = vcombine.high %v4801, %v4801
      %v4804 = vcombine.high %v4596, %v4596
      %v4806 = vunpack.c.l.s4 1983009808
      %v4807 = vunpack.c.0.s8 %v4806
      %v4808 = vlaneseq
      %v4809 = vshrl.u32 %v4808, 7
      %v4810 = vsub.s32 %v4807, %v4809
      %v4811 = vrot.slane %v4596, %v4810
      %v4813 = vunpack.c.l.s4 1983009808
      %v4814 = vunpack.c.0.s8 %v4813
      %v4815 = vlaneseq
      %v4816 = vshrl.u32 %v4815, 7
      %v4817 = vsub.s32 %v4814, %v4816
      %v4818 = vrot.slane %v4804, %v4817
      %v4819 = vcombine.high %v4811, %v4811
      %v4820 = vcombine.high %v4818, %v4818
      %v4821 = vcombine.high %v4601, %v4601
      %v4823 = vunpack.c.l.s4 1983009808
      %v4824 = vunpack.c.0.s8 %v4823
      %v4825 = vlaneseq
      %v4826 = vshrl.u32 %v4825, 7
      %v4827 = vsub.s32 %v4824, %v4826
      %v4828 = vrot.slane %v4601, %v4827
      %v4830 = vunpack.c.l.s4 1983009808
      %v4831 = vunpack.c.0.s8 %v4830
      %v4832 = vlaneseq
      %v4833 = vshrl.u32 %v4832, 7
      %v4834 = vsub.s32 %v4831, %v4833
      %v4835 = vrot.slane %v4821, %v4834
      %v4836 = vcombine.high %v4828, %v4828
      %v4837 = vcombine.high %v4835, %v4835
      %v4838 = vcombine.high %v4606, %v4606
      %v4840 = vunpack.c.l.s4 1983009808
      %v4841 = vunpack.c.0.s8 %v4840
      %v4842 = vlaneseq
      %v4843 = vshrl.u32 %v4842, 7
      %v4844 = vsub.s32 %v4841, %v4843
      %v4845 = vrot.slane %v4606, %v4844
      %v4847 = vunpack.c.l.s4 1983009808
      %v4848 = vunpack.c.0.s8 %v4847
      %v4849 = vlaneseq
      %v4850 = vshrl.u32 %v4849, 7
      %v4851 = vsub.s32 %v4848, %v4850
      %v4852 = vrot.slane %v4838, %v4851
      %v4853 = vcombine.high %v4845, %v4845
      %v4854 = vcombine.high %v4852, %v4852
      %v4855 = vcombine.high %v4611, %v4611
      %v4857 = vunpack.c.l.s4 1983009808
      %v4858 = vunpack.c.0.s8 %v4857
      %v4859 = vlaneseq
      %v4860 = vshrl.u32 %v4859, 7
      %v4861 = vsub.s32 %v4858, %v4860
      %v4862 = vrot.slane %v4611, %v4861
      %v4864 = vunpack.c.l.s4 1983009808
      %v4865 = vunpack.c.0.s8 %v4864
      %v4866 = vlaneseq
      %v4867 = vshrl.u32 %v4866, 7
      %v4868 = vsub.s32 %v4865, %v4867
      %v4869 = vrot.slane %v4855, %v4868
      %v4870 = vcombine.high %v4862, %v4862
      %v4871 = vcombine.high %v4869, %v4869
      %v4872 = vcombine.high %v4616, %v4616
      %v4874 = vunpack.c.l.s4 1983009808
      %v4875 = vunpack.c.0.s8 %v4874
      %v4876 = vlaneseq
      %v4877 = vshrl.u32 %v4876, 7
      %v4878 = vsub.s32 %v4875, %v4877
      %v4879 = vrot.slane %v4616, %v4878
      %v4881 = vunpack.c.l.s4 1983009808
      %v4882 = vunpack.c.0.s8 %v4881
      %v4883 = vlaneseq
      %v4884 = vshrl.u32 %v4883, 7
      %v4885 = vsub.s32 %v4882, %v4884
      %v4886 = vrot.slane %v4872, %v4885
      %v4887 = vcombine.high %v4879, %v4879
      %v4888 = vcombine.high %v4886, %v4886
      %v4889 = vcombine.high %v4621, %v4621
      %v4891 = vunpack.c.l.s4 1983009808
      %v4892 = vunpack.c.0.s8 %v4891
      %v4893 = vlaneseq
      %v4894 = vshrl.u32 %v4893, 7
      %v4895 = vsub.s32 %v4892, %v4894
      %v4896 = vrot.slane %v4621, %v4895
      %v4898 = vunpack.c.l.s4 1983009808
      %v4899 = vunpack.c.0.s8 %v4898
      %v4900 = vlaneseq
      %v4901 = vshrl.u32 %v4900, 7
      %v4902 = vsub.s32 %v4899, %v4901
      %v4903 = vrot.slane %v4889, %v4902
      %v4904 = vcombine.high %v4896, %v4896
      %v4905 = vcombine.high %v4903, %v4903
      %v4906 = vcombine.high %v4626, %v4626
      %v4908 = vunpack.c.l.s4 1983009808
      %v4909 = vunpack.c.0.s8 %v4908
      %v4910 = vlaneseq
      %v4911 = vshrl.u32 %v4910, 7
      %v4912 = vsub.s32 %v4909, %v4911
      %v4913 = vrot.slane %v4626, %v4912
      %v4915 = vunpack.c.l.s4 1983009808
      %v4916 = vunpack.c.0.s8 %v4915
      %v4917 = vlaneseq
      %v4918 = vshrl.u32 %v4917, 7
      %v4919 = vsub.s32 %v4916, %v4918
      %v4920 = vrot.slane %v4906, %v4919
      %v4921 = vcombine.high %v4913, %v4913
      %v4922 = vcombine.high %v4920, %v4920
      %v4923 = vcombine.high %v4631, %v4631
      %v4925 = vunpack.c.l.s4 1983009808
      %v4926 = vunpack.c.0.s8 %v4925
      %v4927 = vlaneseq
      %v4928 = vshrl.u32 %v4927, 7
      %v4929 = vsub.s32 %v4926, %v4928
      %v4930 = vrot.slane %v4631, %v4929
      %v4932 = vunpack.c.l.s4 1983009808
      %v4933 = vunpack.c.0.s8 %v4932
      %v4934 = vlaneseq
      %v4935 = vshrl.u32 %v4934, 7
      %v4936 = vsub.s32 %v4933, %v4935
      %v4937 = vrot.slane %v4923, %v4936
      %v4938 = vcombine.high %v4930, %v4930
      %v4939 = vcombine.high %v4937, %v4937
      %v4940 = vcombine.high %v4636, %v4636
      %v4942 = vunpack.c.l.s4 1983009808
      %v4943 = vunpack.c.0.s8 %v4942
      %v4944 = vlaneseq
      %v4945 = vshrl.u32 %v4944, 7
      %v4946 = vsub.s32 %v4943, %v4945
      %v4947 = vrot.slane %v4636, %v4946
      %v4949 = vunpack.c.l.s4 1983009808
      %v4950 = vunpack.c.0.s8 %v4949
      %v4951 = vlaneseq
      %v4952 = vshrl.u32 %v4951, 7
      %v4953 = vsub.s32 %v4950, %v4952
      %v4954 = vrot.slane %v4940, %v4953
      %v4955 = vcombine.high %v4947, %v4947
      %v4956 = vcombine.high %v4954, %v4954
      %v4957 = vcombine.high %v4641, %v4641
      %v4959 = vunpack.c.l.s4 1983009808
      %v4960 = vunpack.c.0.s8 %v4959
      %v4961 = vlaneseq
      %v4962 = vshrl.u32 %v4961, 7
      %v4963 = vsub.s32 %v4960, %v4962
      %v4964 = vrot.slane %v4641, %v4963
      %v4966 = vunpack.c.l.s4 1983009808
      %v4967 = vunpack.c.0.s8 %v4966
      %v4968 = vlaneseq
      %v4969 = vshrl.u32 %v4968, 7
      %v4970 = vsub.s32 %v4967, %v4969
      %v4971 = vrot.slane %v4957, %v4970
      %v4972 = vcombine.high %v4964, %v4964
      %v4973 = vcombine.high %v4971, %v4971
      %v4974 = vcombine.high %v4646, %v4646
      %v4976 = vunpack.c.l.s4 1983009808
      %v4977 = vunpack.c.0.s8 %v4976
      %v4978 = vlaneseq
      %v4979 = vshrl.u32 %v4978, 7
      %v4980 = vsub.s32 %v4977, %v4979
      %v4981 = vrot.slane %v4646, %v4980
      %v4983 = vunpack.c.l.s4 1983009808
      %v4984 = vunpack.c.0.s8 %v4983
      %v4985 = vlaneseq
      %v4986 = vshrl.u32 %v4985, 7
      %v4987 = vsub.s32 %v4984, %v4986
      %v4988 = vrot.slane %v4974, %v4987
      %v4989 = vcombine.high %v4981, %v4981
      %v5065 = vmax.f32 %v4675, 0.0
      %v5066 = vmax.f32 %v4683, 0.0
      %v5067 = vmax.f32 %v4682, 0.0
      %v5068 = vmax.f32 %v4684, 0.0
      %v5069 = vmax.f32 %v4692, 0.0
      %v5070 = vmax.f32 %v4700, 0.0
      %v5071 = vmax.f32 %v4699, 0.0
      %v5072 = vmax.f32 %v4701, 0.0
      %v5073 = vmax.f32 %v4709, 0.0
      %v5074 = vmax.f32 %v4717, 0.0
      %v5075 = vmax.f32 %v4716, 0.0
      %v5076 = vmax.f32 %v4718, 0.0
      %v5077 = vmax.f32 %v4726, 0.0
      %v5078 = vmax.f32 %v4734, 0.0
      %v5079 = vmax.f32 %v4733, 0.0
      %v5080 = vmax.f32 %v4735, 0.0
      %v5081 = vmax.f32 %v4743, 0.0
      %v5082 = vmax.f32 %v4751, 0.0
      %v5083 = vmax.f32 %v4750, 0.0
      %v5084 = vmax.f32 %v4752, 0.0
      %v5085 = vmax.f32 %v4760, 0.0
      %v5086 = vmax.f32 %v4768, 0.0
      %v5087 = vmax.f32 %v4767, 0.0
      %v5088 = vmax.f32 %v4769, 0.0
      %v5089 = vmax.f32 %v4777, 0.0
      %v5090 = vmax.f32 %v4785, 0.0
      %v5091 = vmax.f32 %v4784, 0.0
      %v5092 = vmax.f32 %v4786, 0.0
      %v5093 = vmax.f32 %v4794, 0.0
      %v5094 = vmax.f32 %v4802, 0.0
      %v5095 = vmax.f32 %v4801, 0.0
      %v5096 = vmax.f32 %v4803, 0.0
      %v5097 = vmax.f32 %v4811, 0.0
      %v5098 = vmax.f32 %v4819, 0.0
      %v5099 = vmax.f32 %v4818, 0.0
      %v5100 = vmax.f32 %v4820, 0.0
      %v5101 = vmax.f32 %v4828, 0.0
      %v5102 = vmax.f32 %v4836, 0.0
      %v5103 = vmax.f32 %v4835, 0.0
      %v5104 = vmax.f32 %v4837, 0.0
      %v5105 = vmax.f32 %v4845, 0.0
      %v5106 = vmax.f32 %v4853, 0.0
      %v5107 = vmax.f32 %v4852, 0.0
      %v5108 = vmax.f32 %v4854, 0.0
      %v5109 = vmax.f32 %v4862, 0.0
      %v5110 = vmax.f32 %v4870, 0.0
      %v5111 = vmax.f32 %v4869, 0.0
      %v5112 = vmax.f32 %v4871, 0.0
      %v5113 = vmax.f32 %v4879, 0.0
      %v5114 = vmax.f32 %v4887, 0.0
      %v5115 = vmax.f32 %v4886, 0.0
      %v5116 = vmax.f32 %v4888, 0.0
      %v5117 = vmax.f32 %v4896, 0.0
      %v5118 = vmax.f32 %v4904, 0.0
      %v5119 = vmax.f32 %v4903, 0.0
      %v5120 = vmax.f32 %v4905, 0.0
      %v5121 = vmax.f32 %v4913, 0.0
      %v5122 = vmax.f32 %v4921, 0.0
      %v5123 = vmax.f32 %v4920, 0.0
      %v5124 = vmax.f32 %v4922, 0.0
      %v5125 = vmax.f32 %v4930, 0.0
      %v5126 = vmax.f32 %v4938, 0.0
      %v5127 = vmax.f32 %v4937, 0.0
      %v5128 = vmax.f32 %v4939, 0.0
      %v5129 = vmax.f32 %v4947, 0.0
      %v5130 = vmax.f32 %v4955, 0.0
      %v5131 = vmax.f32 %v4954, 0.0
      %v5132 = vmax.f32 %v4956, 0.0
      %v5133 = vmax.f32 %v4964, 0.0
      %v5134 = vmax.f32 %v4972, 0.0
      %v5135 = vmax.f32 %v4971, 0.0
      %v5136 = vmax.f32 %v4973, 0.0
      %v5137 = vmax.f32 %v4981, 0.0
      %v5138 = vmax.f32 %v4989, 0.0
      %v5139 = vmax.f32 %v4988, 0.0
      %v5215 = vcombine.low %v5065, %v5066
      %v5217 = vunpack.c.l.s4 1983009808
      %v5218 = vunpack.c.0.s8 %v5217
      %v5219 = vlaneseq
      %v5220 = vshrl.u32 %v5219, 7
      %v5221 = vsub.s32 %v5218, %v5220
      %v5222 = vrot.slane %v5215, %v5221
      %v5224 = vunpack.c.l.s4 1983009808
      %v5225 = vunpack.c.0.s8 %v5224
      %v5226 = vlaneseq
      %v5227 = vshrl.u32 %v5226, 7
      %v5228 = vsub.s32 %v5225, %v5227
      %v5229 = vrot.slane %v5067, %v5228
      %v5230 = vcombine.low %v5222, %v5229
      %v5231 = vcombine.low %v5068, %v5069
      %v5233 = vunpack.c.l.s4 1983009808
      %v5234 = vunpack.c.0.s8 %v5233
      %v5235 = vlaneseq
      %v5236 = vshrl.u32 %v5235, 7
      %v5237 = vsub.s32 %v5234, %v5236
      %v5238 = vrot.slane %v5231, %v5237
      %v5240 = vunpack.c.l.s4 1983009808
      %v5241 = vunpack.c.0.s8 %v5240
      %v5242 = vlaneseq
      %v5243 = vshrl.u32 %v5242, 7
      %v5244 = vsub.s32 %v5241, %v5243
      %v5245 = vrot.slane %v5070, %v5244
      %v5246 = vcombine.low %v5238, %v5245
      %v5247 = vcombine.low %v5071, %v5072
      %v5249 = vunpack.c.l.s4 1983009808
      %v5250 = vunpack.c.0.s8 %v5249
      %v5251 = vlaneseq
      %v5252 = vshrl.u32 %v5251, 7
      %v5253 = vsub.s32 %v5250, %v5252
      %v5254 = vrot.slane %v5247, %v5253
      %v5256 = vunpack.c.l.s4 1983009808
      %v5257 = vunpack.c.0.s8 %v5256
      %v5258 = vlaneseq
      %v5259 = vshrl.u32 %v5258, 7
      %v5260 = vsub.s32 %v5257, %v5259
      %v5261 = vrot.slane %v5073, %v5260
      %v5262 = vcombine.low %v5254, %v5261
      %v5263 = vcombine.low %v5074, %v5075
      %v5265 = vunpack.c.l.s4 1983009808
      %v5266 = vunpack.c.0.s8 %v5265
      %v5267 = vlaneseq
      %v5268 = vshrl.u32 %v5267, 7
      %v5269 = vsub.s32 %v5266, %v5268
      %v5270 = vrot.slane %v5263, %v5269
      %v5272 = vunpack.c.l.s4 1983009808
      %v5273 = vunpack.c.0.s8 %v5272
      %v5274 = vlaneseq
      %v5275 = vshrl.u32 %v5274, 7
      %v5276 = vsub.s32 %v5273, %v5275
      %v5277 = vrot.slane %v5076, %v5276
      %v5278 = vcombine.low %v5270, %v5277
      %v5279 = vcombine.low %v5077, %v5078
      %v5281 = vunpack.c.l.s4 1983009808
      %v5282 = vunpack.c.0.s8 %v5281
      %v5283 = vlaneseq
      %v5284 = vshrl.u32 %v5283, 7
      %v5285 = vsub.s32 %v5282, %v5284
      %v5286 = vrot.slane %v5279, %v5285
      %v5288 = vunpack.c.l.s4 1983009808
      %v5289 = vunpack.c.0.s8 %v5288
      %v5290 = vlaneseq
      %v5291 = vshrl.u32 %v5290, 7
      %v5292 = vsub.s32 %v5289, %v5291
      %v5293 = vrot.slane %v5079, %v5292
      %v5294 = vcombine.low %v5286, %v5293
      %v5295 = vcombine.low %v5080, %v5081
      %v5297 = vunpack.c.l.s4 1983009808
      %v5298 = vunpack.c.0.s8 %v5297
      %v5299 = vlaneseq
      %v5300 = vshrl.u32 %v5299, 7
      %v5301 = vsub.s32 %v5298, %v5300
      %v5302 = vrot.slane %v5295, %v5301
      %v5304 = vunpack.c.l.s4 1983009808
      %v5305 = vunpack.c.0.s8 %v5304
      %v5306 = vlaneseq
      %v5307 = vshrl.u32 %v5306, 7
      %v5308 = vsub.s32 %v5305, %v5307
      %v5309 = vrot.slane %v5082, %v5308
      %v5310 = vcombine.low %v5302, %v5309
      %v5311 = vcombine.low %v5083, %v5084
      %v5313 = vunpack.c.l.s4 1983009808
      %v5314 = vunpack.c.0.s8 %v5313
      %v5315 = vlaneseq
      %v5316 = vshrl.u32 %v5315, 7
      %v5317 = vsub.s32 %v5314, %v5316
      %v5318 = vrot.slane %v5311, %v5317
      %v5320 = vunpack.c.l.s4 1983009808
      %v5321 = vunpack.c.0.s8 %v5320
      %v5322 = vlaneseq
      %v5323 = vshrl.u32 %v5322, 7
      %v5324 = vsub.s32 %v5321, %v5323
      %v5325 = vrot.slane %v5085, %v5324
      %v5326 = vcombine.low %v5318, %v5325
      %v5327 = vcombine.low %v5086, %v5087
      %v5329 = vunpack.c.l.s4 1983009808
      %v5330 = vunpack.c.0.s8 %v5329
      %v5331 = vlaneseq
      %v5332 = vshrl.u32 %v5331, 7
      %v5333 = vsub.s32 %v5330, %v5332
      %v5334 = vrot.slane %v5327, %v5333
      %v5336 = vunpack.c.l.s4 1983009808
      %v5337 = vunpack.c.0.s8 %v5336
      %v5338 = vlaneseq
      %v5339 = vshrl.u32 %v5338, 7
      %v5340 = vsub.s32 %v5337, %v5339
      %v5341 = vrot.slane %v5088, %v5340
      %v5342 = vcombine.low %v5334, %v5341
      %v5343 = vcombine.low %v5089, %v5090
      %v5345 = vunpack.c.l.s4 1983009808
      %v5346 = vunpack.c.0.s8 %v5345
      %v5347 = vlaneseq
      %v5348 = vshrl.u32 %v5347, 7
      %v5349 = vsub.s32 %v5346, %v5348
      %v5350 = vrot.slane %v5343, %v5349
      %v5352 = vunpack.c.l.s4 1983009808
      %v5353 = vunpack.c.0.s8 %v5352
      %v5354 = vlaneseq
      %v5355 = vshrl.u32 %v5354, 7
      %v5356 = vsub.s32 %v5353, %v5355
      %v5357 = vrot.slane %v5091, %v5356
      %v5358 = vcombine.low %v5350, %v5357
      %v5359 = vcombine.low %v5092, %v5093
      %v5361 = vunpack.c.l.s4 1983009808
      %v5362 = vunpack.c.0.s8 %v5361
      %v5363 = vlaneseq
      %v5364 = vshrl.u32 %v5363, 7
      %v5365 = vsub.s32 %v5362, %v5364
      %v5366 = vrot.slane %v5359, %v5365
      %v5368 = vunpack.c.l.s4 1983009808
      %v5369 = vunpack.c.0.s8 %v5368
      %v5370 = vlaneseq
      %v5371 = vshrl.u32 %v5370, 7
      %v5372 = vsub.s32 %v5369, %v5371
      %v5373 = vrot.slane %v5094, %v5372
      %v5374 = vcombine.low %v5366, %v5373
      %v5375 = vcombine.low %v5095, %v5096
      %v5377 = vunpack.c.l.s4 1983009808
      %v5378 = vunpack.c.0.s8 %v5377
      %v5379 = vlaneseq
      %v5380 = vshrl.u32 %v5379, 7
      %v5381 = vsub.s32 %v5378, %v5380
      %v5382 = vrot.slane %v5375, %v5381
      %v5384 = vunpack.c.l.s4 1983009808
      %v5385 = vunpack.c.0.s8 %v5384
      %v5386 = vlaneseq
      %v5387 = vshrl.u32 %v5386, 7
      %v5388 = vsub.s32 %v5385, %v5387
      %v5389 = vrot.slane %v5097, %v5388
      %v5390 = vcombine.low %v5382, %v5389
      %v5391 = vcombine.low %v5098, %v5099
      %v5393 = vunpack.c.l.s4 1983009808
      %v5394 = vunpack.c.0.s8 %v5393
      %v5395 = vlaneseq
      %v5396 = vshrl.u32 %v5395, 7
      %v5397 = vsub.s32 %v5394, %v5396
      %v5398 = vrot.slane %v5391, %v5397
      %v5400 = vunpack.c.l.s4 1983009808
      %v5401 = vunpack.c.0.s8 %v5400
      %v5402 = vlaneseq
      %v5403 = vshrl.u32 %v5402, 7
      %v5404 = vsub.s32 %v5401, %v5403
      %v5405 = vrot.slane %v5100, %v5404
      %v5406 = vcombine.low %v5398, %v5405
      %v5407 = vcombine.low %v5101, %v5102
      %v5409 = vunpack.c.l.s4 1983009808
      %v5410 = vunpack.c.0.s8 %v5409
      %v5411 = vlaneseq
      %v5412 = vshrl.u32 %v5411, 7
      %v5413 = vsub.s32 %v5410, %v5412
      %v5414 = vrot.slane %v5407, %v5413
      %v5416 = vunpack.c.l.s4 1983009808
      %v5417 = vunpack.c.0.s8 %v5416
      %v5418 = vlaneseq
      %v5419 = vshrl.u32 %v5418, 7
      %v5420 = vsub.s32 %v5417, %v5419
      %v5421 = vrot.slane %v5103, %v5420
      %v5422 = vcombine.low %v5414, %v5421
      %v5423 = vcombine.low %v5104, %v5105
      %v5425 = vunpack.c.l.s4 1983009808
      %v5426 = vunpack.c.0.s8 %v5425
      %v5427 = vlaneseq
      %v5428 = vshrl.u32 %v5427, 7
      %v5429 = vsub.s32 %v5426, %v5428
      %v5430 = vrot.slane %v5423, %v5429
      %v5432 = vunpack.c.l.s4 1983009808
      %v5433 = vunpack.c.0.s8 %v5432
      %v5434 = vlaneseq
      %v5435 = vshrl.u32 %v5434, 7
      %v5436 = vsub.s32 %v5433, %v5435
      %v5437 = vrot.slane %v5106, %v5436
      %v5438 = vcombine.low %v5430, %v5437
      %v5439 = vcombine.low %v5107, %v5108
      %v5441 = vunpack.c.l.s4 1983009808
      %v5442 = vunpack.c.0.s8 %v5441
      %v5443 = vlaneseq
      %v5444 = vshrl.u32 %v5443, 7
      %v5445 = vsub.s32 %v5442, %v5444
      %v5446 = vrot.slane %v5439, %v5445
      %v5448 = vunpack.c.l.s4 1983009808
      %v5449 = vunpack.c.0.s8 %v5448
      %v5450 = vlaneseq
      %v5451 = vshrl.u32 %v5450, 7
      %v5452 = vsub.s32 %v5449, %v5451
      %v5453 = vrot.slane %v5109, %v5452
      %v5454 = vcombine.low %v5446, %v5453
      %v5455 = vcombine.low %v5110, %v5111
      %v5457 = vunpack.c.l.s4 1983009808
      %v5458 = vunpack.c.0.s8 %v5457
      %v5459 = vlaneseq
      %v5460 = vshrl.u32 %v5459, 7
      %v5461 = vsub.s32 %v5458, %v5460
      %v5462 = vrot.slane %v5455, %v5461
      %v5464 = vunpack.c.l.s4 1983009808
      %v5465 = vunpack.c.0.s8 %v5464
      %v5466 = vlaneseq
      %v5467 = vshrl.u32 %v5466, 7
      %v5468 = vsub.s32 %v5465, %v5467
      %v5469 = vrot.slane %v5112, %v5468
      %v5470 = vcombine.low %v5462, %v5469
      %v5471 = vcombine.low %v5113, %v5114
      %v5473 = vunpack.c.l.s4 1983009808
      %v5474 = vunpack.c.0.s8 %v5473
      %v5475 = vlaneseq
      %v5476 = vshrl.u32 %v5475, 7
      %v5477 = vsub.s32 %v5474, %v5476
      %v5478 = vrot.slane %v5471, %v5477
      %v5480 = vunpack.c.l.s4 1983009808
      %v5481 = vunpack.c.0.s8 %v5480
      %v5482 = vlaneseq
      %v5483 = vshrl.u32 %v5482, 7
      %v5484 = vsub.s32 %v5481, %v5483
      %v5485 = vrot.slane %v5115, %v5484
      %v5486 = vcombine.low %v5478, %v5485
      %v5487 = vcombine.low %v5116, %v5117
      %v5489 = vunpack.c.l.s4 1983009808
      %v5490 = vunpack.c.0.s8 %v5489
      %v5491 = vlaneseq
      %v5492 = vshrl.u32 %v5491, 7
      %v5493 = vsub.s32 %v5490, %v5492
      %v5494 = vrot.slane %v5487, %v5493
      %v5496 = vunpack.c.l.s4 1983009808
      %v5497 = vunpack.c.0.s8 %v5496
      %v5498 = vlaneseq
      %v5499 = vshrl.u32 %v5498, 7
      %v5500 = vsub.s32 %v5497, %v5499
      %v5501 = vrot.slane %v5118, %v5500
      %v5502 = vcombine.low %v5494, %v5501
      %v5503 = vcombine.low %v5119, %v5120
      %v5505 = vunpack.c.l.s4 1983009808
      %v5506 = vunpack.c.0.s8 %v5505
      %v5507 = vlaneseq
      %v5508 = vshrl.u32 %v5507, 7
      %v5509 = vsub.s32 %v5506, %v5508
      %v5510 = vrot.slane %v5503, %v5509
      %v5512 = vunpack.c.l.s4 1983009808
      %v5513 = vunpack.c.0.s8 %v5512
      %v5514 = vlaneseq
      %v5515 = vshrl.u32 %v5514, 7
      %v5516 = vsub.s32 %v5513, %v5515
      %v5517 = vrot.slane %v5121, %v5516
      %v5518 = vcombine.low %v5510, %v5517
      %v5519 = vcombine.low %v5122, %v5123
      %v5521 = vunpack.c.l.s4 1983009808
      %v5522 = vunpack.c.0.s8 %v5521
      %v5523 = vlaneseq
      %v5524 = vshrl.u32 %v5523, 7
      %v5525 = vsub.s32 %v5522, %v5524
      %v5526 = vrot.slane %v5519, %v5525
      %v5528 = vunpack.c.l.s4 1983009808
      %v5529 = vunpack.c.0.s8 %v5528
      %v5530 = vlaneseq
      %v5531 = vshrl.u32 %v5530, 7
      %v5532 = vsub.s32 %v5529, %v5531
      %v5533 = vrot.slane %v5124, %v5532
      %v5534 = vcombine.low %v5526, %v5533
      %v5535 = vcombine.low %v5125, %v5126
      %v5537 = vunpack.c.l.s4 1983009808
      %v5538 = vunpack.c.0.s8 %v5537
      %v5539 = vlaneseq
      %v5540 = vshrl.u32 %v5539, 7
      %v5541 = vsub.s32 %v5538, %v5540
      %v5542 = vrot.slane %v5535, %v5541
      %v5544 = vunpack.c.l.s4 1983009808
      %v5545 = vunpack.c.0.s8 %v5544
      %v5546 = vlaneseq
      %v5547 = vshrl.u32 %v5546, 7
      %v5548 = vsub.s32 %v5545, %v5547
      %v5549 = vrot.slane %v5127, %v5548
      %v5550 = vcombine.low %v5542, %v5549
      %v5551 = vcombine.low %v5128, %v5129
      %v5553 = vunpack.c.l.s4 1983009808
      %v5554 = vunpack.c.0.s8 %v5553
      %v5555 = vlaneseq
      %v5556 = vshrl.u32 %v5555, 7
      %v5557 = vsub.s32 %v5554, %v5556
      %v5558 = vrot.slane %v5551, %v5557
      %v5560 = vunpack.c.l.s4 1983009808
      %v5561 = vunpack.c.0.s8 %v5560
      %v5562 = vlaneseq
      %v5563 = vshrl.u32 %v5562, 7
      %v5564 = vsub.s32 %v5561, %v5563
      %v5565 = vrot.slane %v5130, %v5564
      %v5566 = vcombine.low %v5558, %v5565
      %v5567 = vcombine.low %v5131, %v5132
      %v5569 = vunpack.c.l.s4 1983009808
      %v5570 = vunpack.c.0.s8 %v5569
      %v5571 = vlaneseq
      %v5572 = vshrl.u32 %v5571, 7
      %v5573 = vsub.s32 %v5570, %v5572
      %v5574 = vrot.slane %v5567, %v5573
      %v5576 = vunpack.c.l.s4 1983009808
      %v5577 = vunpack.c.0.s8 %v5576
      %v5578 = vlaneseq
      %v5579 = vshrl.u32 %v5578, 7
      %v5580 = vsub.s32 %v5577, %v5579
      %v5581 = vrot.slane %v5133, %v5580
      %v5582 = vcombine.low %v5574, %v5581
      %v5583 = vcombine.low %v5134, %v5135
      %v5585 = vunpack.c.l.s4 1983009808
      %v5586 = vunpack.c.0.s8 %v5585
      %v5587 = vlaneseq
      %v5588 = vshrl.u32 %v5587, 7
      %v5589 = vsub.s32 %v5586, %v5588
      %v5590 = vrot.slane %v5583, %v5589
      %v5592 = vunpack.c.l.s4 1983009808
      %v5593 = vunpack.c.0.s8 %v5592
      %v5594 = vlaneseq
      %v5595 = vshrl.u32 %v5594, 7
      %v5596 = vsub.s32 %v5593, %v5595
      %v5597 = vrot.slane %v5136, %v5596
      %v5598 = vcombine.low %v5590, %v5597
      %v5599 = vcombine.low %v5137, %v5138
      %v5601 = vunpack.c.l.s4 1983009808
      %v5602 = vunpack.c.0.s8 %v5601
      %v5603 = vlaneseq
      %v5604 = vshrl.u32 %v5603, 7
      %v5605 = vsub.s32 %v5602, %v5604
      %v5606 = vrot.slane %v5599, %v5605
      %v5608 = vunpack.c.l.s4 1983009808
      %v5609 = vunpack.c.0.s8 %v5608
      %v5610 = vlaneseq
      %v5611 = vshrl.u32 %v5610, 7
      %v5612 = vsub.s32 %v5609, %v5611
      %v5613 = vrot.slane %v5139, %v5612
      %v5614 = vcombine.low %v5606, %v5613
      %v5640 = vsel %vm3010, %v5230, -inf
      %v5641 = vrot.slane %v5640, 4
      %v5642 = vmax.f32 %v5640, %v5641
      %v5643 = vrot.slane %v5642, 2
      %v5644 = vmax.f32 %v5642, %v5643
      %v5645 = vrot.slane %v5644, 1
      %v5646 = vmax.f32 %v5644, %v5645
      %v5647 = vsel %vm3010, %v5246, -inf
      %v5648 = vrot.slane %v5647, 4
      %v5649 = vmax.f32 %v5647, %v5648
      %v5650 = vrot.slane %v5649, 2
      %v5651 = vmax.f32 %v5649, %v5650
      %v5652 = vrot.slane %v5651, 1
      %v5653 = vmax.f32 %v5651, %v5652
      %v5654 = vsel %vm3010, %v5262, -inf
      %v5655 = vrot.slane %v5654, 4
      %v5656 = vmax.f32 %v5654, %v5655
      %v5657 = vrot.slane %v5656, 2
      %v5658 = vmax.f32 %v5656, %v5657
      %v5659 = vrot.slane %v5658, 1
      %v5660 = vmax.f32 %v5658, %v5659
      %v5661 = vsel %vm3010, %v5278, -inf
      %v5662 = vrot.slane %v5661, 4
      %v5663 = vmax.f32 %v5661, %v5662
      %v5664 = vrot.slane %v5663, 2
      %v5665 = vmax.f32 %v5663, %v5664
      %v5666 = vrot.slane %v5665, 1
      %v5667 = vmax.f32 %v5665, %v5666
      %v5668 = vsel %vm3010, %v5294, -inf
      %v5669 = vrot.slane %v5668, 4
      %v5670 = vmax.f32 %v5668, %v5669
      %v5671 = vrot.slane %v5670, 2
      %v5672 = vmax.f32 %v5670, %v5671
      %v5673 = vrot.slane %v5672, 1
      %v5674 = vmax.f32 %v5672, %v5673
      %v5675 = vsel %vm3010, %v5310, -inf
      %v5676 = vrot.slane %v5675, 4
      %v5677 = vmax.f32 %v5675, %v5676
      %v5678 = vrot.slane %v5677, 2
      %v5679 = vmax.f32 %v5677, %v5678
      %v5680 = vrot.slane %v5679, 1
      %v5681 = vmax.f32 %v5679, %v5680
      %v5682 = vsel %vm3010, %v5326, -inf
      %v5683 = vrot.slane %v5682, 4
      %v5684 = vmax.f32 %v5682, %v5683
      %v5685 = vrot.slane %v5684, 2
      %v5686 = vmax.f32 %v5684, %v5685
      %v5687 = vrot.slane %v5686, 1
      %v5688 = vmax.f32 %v5686, %v5687
      %v5689 = vsel %vm3010, %v5342, -inf
      %v5690 = vrot.slane %v5689, 4
      %v5691 = vmax.f32 %v5689, %v5690
      %v5692 = vrot.slane %v5691, 2
      %v5693 = vmax.f32 %v5691, %v5692
      %v5694 = vrot.slane %v5693, 1
      %v5695 = vmax.f32 %v5693, %v5694
      %v5696 = vsel %vm3010, %v5358, -inf
      %v5697 = vrot.slane %v5696, 4
      %v5698 = vmax.f32 %v5696, %v5697
      %v5699 = vrot.slane %v5698, 2
      %v5700 = vmax.f32 %v5698, %v5699
      %v5701 = vrot.slane %v5700, 1
      %v5702 = vmax.f32 %v5700, %v5701
      %v5703 = vsel %vm3010, %v5374, -inf
      %v5704 = vrot.slane %v5703, 4
      %v5705 = vmax.f32 %v5703, %v5704
      %v5706 = vrot.slane %v5705, 2
      %v5707 = vmax.f32 %v5705, %v5706
      %v5708 = vrot.slane %v5707, 1
      %v5709 = vmax.f32 %v5707, %v5708
      %v5710 = vsel %vm3010, %v5390, -inf
      %v5711 = vrot.slane %v5710, 4
      %v5712 = vmax.f32 %v5710, %v5711
      %v5713 = vrot.slane %v5712, 2
      %v5714 = vmax.f32 %v5712, %v5713
      %v5715 = vrot.slane %v5714, 1
      %v5716 = vmax.f32 %v5714, %v5715
      %v5717 = vsel %vm3010, %v5406, -inf
      %v5718 = vrot.slane %v5717, 4
      %v5719 = vmax.f32 %v5717, %v5718
      %v5720 = vrot.slane %v5719, 2
      %v5721 = vmax.f32 %v5719, %v5720
      %v5722 = vrot.slane %v5721, 1
      %v5723 = vmax.f32 %v5721, %v5722
      %v5724 = vsel %vm3010, %v5422, -inf
      %v5725 = vrot.slane %v5724, 4
      %v5726 = vmax.f32 %v5724, %v5725
      %v5727 = vrot.slane %v5726, 2
      %v5728 = vmax.f32 %v5726, %v5727
      %v5729 = vrot.slane %v5728, 1
      %v5730 = vmax.f32 %v5728, %v5729
      %v5731 = vsel %vm3010, %v5438, -inf
      %v5732 = vrot.slane %v5731, 4
      %v5733 = vmax.f32 %v5731, %v5732
      %v5734 = vrot.slane %v5733, 2
      %v5735 = vmax.f32 %v5733, %v5734
      %v5736 = vrot.slane %v5735, 1
      %v5737 = vmax.f32 %v5735, %v5736
      %v5738 = vsel %vm3010, %v5454, -inf
      %v5739 = vrot.slane %v5738, 4
      %v5740 = vmax.f32 %v5738, %v5739
      %v5741 = vrot.slane %v5740, 2
      %v5742 = vmax.f32 %v5740, %v5741
      %v5743 = vrot.slane %v5742, 1
      %v5744 = vmax.f32 %v5742, %v5743
      %v5745 = vsel %vm3010, %v5470, -inf
      %v5746 = vrot.slane %v5745, 4
      %v5747 = vmax.f32 %v5745, %v5746
      %v5748 = vrot.slane %v5747, 2
      %v5749 = vmax.f32 %v5747, %v5748
      %v5750 = vrot.slane %v5749, 1
      %v5751 = vmax.f32 %v5749, %v5750
      %v5752 = vsel %vm3010, %v5486, -inf
      %v5753 = vrot.slane %v5752, 4
      %v5754 = vmax.f32 %v5752, %v5753
      %v5755 = vrot.slane %v5754, 2
      %v5756 = vmax.f32 %v5754, %v5755
      %v5757 = vrot.slane %v5756, 1
      %v5758 = vmax.f32 %v5756, %v5757
      %v5759 = vsel %vm3010, %v5502, -inf
      %v5760 = vrot.slane %v5759, 4
      %v5761 = vmax.f32 %v5759, %v5760
      %v5762 = vrot.slane %v5761, 2
      %v5763 = vmax.f32 %v5761, %v5762
      %v5764 = vrot.slane %v5763, 1
      %v5765 = vmax.f32 %v5763, %v5764
      %v5766 = vsel %vm3010, %v5518, -inf
      %v5767 = vrot.slane %v5766, 4
      %v5768 = vmax.f32 %v5766, %v5767
      %v5769 = vrot.slane %v5768, 2
      %v5770 = vmax.f32 %v5768, %v5769
      %v5771 = vrot.slane %v5770, 1
      %v5772 = vmax.f32 %v5770, %v5771
      %v5773 = vsel %vm3010, %v5534, -inf
      %v5774 = vrot.slane %v5773, 4
      %v5775 = vmax.f32 %v5773, %v5774
      %v5776 = vrot.slane %v5775, 2
      %v5777 = vmax.f32 %v5775, %v5776
      %v5778 = vrot.slane %v5777, 1
      %v5779 = vmax.f32 %v5777, %v5778
      %v5780 = vsel %vm3010, %v5550, -inf
      %v5781 = vrot.slane %v5780, 4
      %v5782 = vmax.f32 %v5780, %v5781
      %v5783 = vrot.slane %v5782, 2
      %v5784 = vmax.f32 %v5782, %v5783
      %v5785 = vrot.slane %v5784, 1
      %v5786 = vmax.f32 %v5784, %v5785
      %v5787 = vsel %vm3010, %v5566, -inf
      %v5788 = vrot.slane %v5787, 4
      %v5789 = vmax.f32 %v5787, %v5788
      %v5790 = vrot.slane %v5789, 2
      %v5791 = vmax.f32 %v5789, %v5790
      %v5792 = vrot.slane %v5791, 1
      %v5793 = vmax.f32 %v5791, %v5792
      %v5794 = vsel %vm3010, %v5582, -inf
      %v5795 = vrot.slane %v5794, 4
      %v5796 = vmax.f32 %v5794, %v5795
      %v5797 = vrot.slane %v5796, 2
      %v5798 = vmax.f32 %v5796, %v5797
      %v5799 = vrot.slane %v5798, 1
      %v5800 = vmax.f32 %v5798, %v5799
      %v5801 = vsel %vm3010, %v5598, -inf
      %v5802 = vrot.slane %v5801, 4
      %v5803 = vmax.f32 %v5801, %v5802
      %v5804 = vrot.slane %v5803, 2
      %v5805 = vmax.f32 %v5803, %v5804
      %v5806 = vrot.slane %v5805, 1
      %v5807 = vmax.f32 %v5805, %v5806
      %v5808 = vsel %vm3010, %v5614, -inf
      %v5809 = vrot.slane %v5808, 4
      %v5810 = vmax.f32 %v5808, %v5809
      %v5811 = vrot.slane %v5810, 2
      %v5812 = vmax.f32 %v5810, %v5811
      %v5813 = vrot.slane %v5812, 1
      %v5814 = vmax.f32 %v5812, %v5813
      %v5815 = vld [vmem:[%s962] sm:$0xff]
      %v5816 = vld [vmem:[%s962 + $0x8] sm:$0xff]
      %v5817 = vld [vmem:[%s962 + $0x10] sm:$0xff]
      %v5818 = vld [vmem:[%s962 + $0x18] sm:$0x1]
      %v5844 = vsel %vm3215, %v5653, %v5646
      %v5845 = vsel %vm3217, %v5660, %v5844
      %v5846 = vsel %vm3219, %v5667, %v5845
      %v5847 = vsel %vm3221, %v5674, %v5846
      %v5848 = vsel %vm3223, %v5681, %v5847
      %v5849 = vsel %vm3225, %v5688, %v5848
      %v5850 = vsel %vm3227, %v5695, %v5849
      %v5851 = vsel %vm3215, %v5709, %v5702
      %v5852 = vsel %vm3217, %v5716, %v5851
      %v5853 = vsel %vm3219, %v5723, %v5852
      %v5854 = vsel %vm3221, %v5730, %v5853
      %v5855 = vsel %vm3223, %v5737, %v5854
      %v5856 = vsel %vm3225, %v5744, %v5855
      %v5857 = vsel %vm3227, %v5751, %v5856
      %v5858 = vsel %vm3215, %v5765, %v5758
      %v5859 = vsel %vm3217, %v5772, %v5858
      %v5860 = vsel %vm3219, %v5779, %v5859
      %v5861 = vsel %vm3221, %v5786, %v5860
      %v5862 = vsel %vm3223, %v5793, %v5861
      %v5863 = vsel %vm3225, %v5800, %v5862
      %v5864 = vsel %vm3227, %v5807, %v5863
      %v5869 = vld [vmem:[%s16] sm:$0xff]
      %v5870 = vld [vmem:[%s16 + $0x8] sm:$0xff]
      %v5871 = vld [vmem:[%s16 + $0x10] sm:$0xff]
      %v5872 = vld [vmem:[%s16 + $0x18] sm:$0xff]
      %v5873 = vld [vmem:[%s16 + $0x20] sm:$0xff]
      %v5874 = vld [vmem:[%s16 + $0x28] sm:$0xff]
      %v5875 = vld [vmem:[%s16 + $0x30] sm:$0xff]
      %v5876 = vld [vmem:[%s16 + $0x38] sm:$0xff]
      %v5877 = vld [vmem:[%s16 + $0x40] sm:$0xff]
      %v5878 = vld [vmem:[%s16 + $0x48] sm:$0xff]
      %v5879 = vld [vmem:[%s16 + $0x50] sm:$0xff]
      %v5880 = vld [vmem:[%s16 + $0x58] sm:$0xff]
      %v5881 = vld [vmem:[%s16 + $0x60] sm:$0xff]
      %v5882 = vld [vmem:[%s16 + $0x68] sm:$0xff]
      %v5883 = vld [vmem:[%s16 + $0x70] sm:$0xff]
      %v5884 = vld [vmem:[%s16 + $0x78] sm:$0xff]
      %v5885 = vld [vmem:[%s16 + $0x80] sm:$0xff]
      %v5886 = vld [vmem:[%s16 + $0x88] sm:$0xff]
      %v5887 = vld [vmem:[%s16 + $0x90] sm:$0xff]
      %v5888 = vld [vmem:[%s16 + $0x98] sm:$0xff]
      %v5889 = vld [vmem:[%s17] sm:$0x1]
      %v5891 = vlaneseq
      %v5892 = vshrl.u32 %v5891, 7
      %v5893 = vsub.s32 0, %v5892
      %v5894 = vrot.slane %v5889, %v5893
      %v5897 = vsel %vm3274, %v5815, 0
      %v5900 = vsel %vm3274, %v5816, 0
      %v5903 = vsel %vm3274, %v5817, 0
      %v5906 = vsel %vm3274, %v5818, 0
      %5908 = vmatprep.subr.mxu0 0.0
      %5909 = vmatpush1.msra.mxu0 %v5884
      %5910 = vmatprep.subr.mxu0 0.0
      %5911 = vmatpush1.msra.mxu0 %v5883
      %5912 = vmatprep.subr.mxu0 0.0
      %5913 = vmatpush1.msra.mxu0 %v5882
      %5914 = vmatprep.subr.mxu0 0.0
      %5915 = vmatpush1.msra.mxu0 %v5881
      %5916 = vmatprep.subr.mxu0 0.0
      %5917 = vmatpush1.msra.mxu0 %v5880
      %5918 = vmatprep.subr.mxu0 0.0
      %5919 = vmatpush1.msra.mxu0 %v5879
      %5920 = vmatprep.subr.mxu0 0.0
      %5921 = vmatpush1.msra.mxu0 %v5878
      %5922 = vmatprep.subr.mxu0 0.0
      %5923 = vmatpush1.msra.mxu0 %v5877
      %5924 = vmatprep.subr.mxu0 0.0
      %5925 = vmatpush1.msra.mxu0 %v5876
      %5926 = vmatprep.subr.mxu0 0.0
      %5927 = vmatpush1.msra.mxu0 %v5875
      %5928 = vmatprep.subr.mxu0 0.0
      %5929 = vmatpush1.msra.mxu0 %v5874
      %5930 = vmatprep.subr.mxu0 0.0
      %5931 = vmatpush1.msra.mxu0 %v5873
      %5932 = vmatprep.subr.mxu0 0.0
      %5933 = vmatpush1.msra.mxu0 %v5872
      %5934 = vmatprep.subr.mxu0 0.0
      %5935 = vmatpush1.msra.mxu0 %v5871
      %5936 = vmatprep.subr.mxu0 0.0
      %5937 = vmatpush1.msra.mxu0 %v5870
      %5938 = vmatprep.subr.mxu0 0.0
      %5939 = vmatpush1.msra.mxu0 %v5869
      %5940 = vmatprep.subr.mxu0 0.0
      %5941 = vmatpush2.msra.mxu0 0.0
      %5942 = vmatprep.subr.mxu0 0.0
      %5943 = vmatpush2.msra.mxu0 0.0
      %5944 = vmatprep.subr.mxu0 0.0
      %5945 = vmatpush2.msra.mxu0 0.0
      %5946 = vmatprep.subr.mxu0 0.0
      %5947 = vmatpush2.msra.mxu0 0.0
      %5948 = vmatprep.subr.mxu0 0.0
      %5949 = vmatpush2.msra.mxu0 0.0
      %5950 = vmatprep.subr.mxu0 0.0
      %5951 = vmatpush2.msra.mxu0 0.0
      %5952 = vmatprep.subr.mxu0 0.0
      %5953 = vmatpush2.msra.mxu0 0.0
      %5954 = vmatprep.subr.mxu0 0.0
      %5955 = vmatpush2.msra.mxu0 0.0
      %5956 = vmatprep.subr.mxu0 0.0
      %5957 = vmatpush2.msra.mxu0 0.0
      %5958 = vmatprep.subr.mxu0 0.0
      %5959 = vmatpush2.msra.mxu0 0.0
      %5960 = vmatprep.subr.mxu0 0.0
      %5961 = vmatpush2.msra.mxu0 0.0
      %5962 = vmatprep.subr.mxu0 0.0
      %5963 = vmatpush2.msra.mxu0 0.0
      %5964 = vmatprep.subr.mxu0 0.0
      %5965 = vmatpush2.msra.mxu0 %v5888
      %5966 = vmatprep.subr.mxu0 0.0
      %5967 = vmatpush2.msra.mxu0 %v5887
      %5968 = vmatprep.subr.mxu0 0.0
      %5969 = vmatpush2.msra.mxu0 %v5886
      %5970 = vmatprep.subr.mxu0 0.0
      %5971 = vmatpush2.msra.mxu0 %v5885
      %5972 = vmatprep.mubr.f32.mxu0 %v5897
      %5973 = vmatmul.mubr.f32.gmra.mxu0 %v5850
      %v5974 = vpop.f32.mrf.mxu0
      %v5975 = vadd.f32 %v5894, %v5974
      %v5976 = vpop.f32.mrf.mxu0
      %5977 = vmatprep.mubr.f32.mxu0 %v5900
      %5978 = vmatmul.mubr.f32.gmra.mxu0 %v5857
      %v5979 = vpop.f32.mrf.mxu0
      %v5980 = vadd.f32 %v5894, %v5979
      %v5981 = vpop.f32.mrf.mxu0
      %5982 = vmatprep.mubr.f32.mxu0 %v5903
      %5983 = vmatmul.mubr.f32.gmra.mxu0 %v5864
      %v5984 = vpop.f32.mrf.mxu0
      %v5985 = vadd.f32 %v5894, %v5984
      %v5986 = vpop.f32.mrf.mxu0
      %5987 = vmatprep.mubr.f32.mxu0 %v5906
      %5988 = vmatmul.mubr.f32.gmra.mxu0 %v5814
      %v5989 = vpop.f32.mrf.mxu0
      %v5990 = vadd.f32 %v5894, %v5989
      %v5991 = vpop.f32.mrf.mxu0
      %5992 = vdwg.mxu0
      %v5993 = vmax.f32 %v5975, 0.0
      %v5994 = vmax.f32 %v5980, 0.0
      %v5995 = vmax.f32 %v5985, 0.0
      %v5996 = vmax.f32 %v5990, 0.0
      %v5997 = vld [vmem:[%s18] sm:$0x1]
      %v5999 = vlaneseq
      %v6000 = vshrl.u32 %v5999, 7
      %v6001 = vsub.s32 0, %v6000
      %v6002 = vrot.slane %v5997, %v6001
      %v6004 = vmul.f32 %v5993, %v6002
      %v6005 = vmul.f32 %v5994, %v6002
      %v6006 = vmul.f32 %v5995, %v6002
      %v6007 = vmul.f32 %v5996, %v6002
      %v6008 = vsel %vm3274, %v6004, 0.0
      %6009 = vadd.xlane.f32.xlu0 %v6008
      %v6010 = vpop.xlane.xlu0 %6009
      %v6011 = vsel %vm3274, %v6005, 0.0
      %6012 = vadd.xlane.f32.xlu0 %v6011
      %v6013 = vpop.xlane.xlu0 %6012
      %v6014 = vsel %vm3274, %v6006, 0.0
      %6015 = vadd.xlane.f32.xlu0 %v6014
      %v6016 = vpop.xlane.xlu0 %6015
      %v6017 = vsel %vm3396, %v6007, 0.0
      %6018 = vadd.xlane.f32.xlu0 %v6017
      %v6019 = vpop.xlane.xlu0 %6018
      %v6020 = vld [vmem:[#allocation3] sm:$0x1]
      %v6022 = vlaneseq
      %v6023 = vshrl.u32 %v6022, 7
      %v6024 = vsub.s32 0, %v6023
      %v6025 = vrot.slane %v6020, %v6024
      %v6027 = vadd.f32 %v6010, %v6025
      %v6028 = vadd.f32 %v6013, %v6025
      %v6029 = vadd.f32 %v6016, %v6025
      %v6030 = vadd.f32 %v6019, %v6025
      %v6031 = vsel %vm3411, %v6027, -inf
      %v6032 = vsel %vm3411, %v6028, -inf
      %v6033 = vsel %vm3411, %v6029, -inf
      %v6034 = vsel %vm3415, %v6030, -inf
      %v6035 = vmax.f32 %v6031, %v6032
      %v6036 = vmax.f32 %v6033, %v6034
      %v6037 = vmax.f32 %v6035, %v6036
      %v6038 = vrot.slane %v6037, 4
      %v6039 = vmax.f32 %v6037, %v6038
      %v6040 = vrot.slane %v6039, 2
      %v6041 = vmax.f32 %v6039, %v6040
      %v6042 = vrot.slane %v6041, 1
      %v6043 = vmax.f32 %v6041, %v6042
      %v6044 = vsub.f32 %v6027, %v6043
      %v6045 = vsub.f32 %v6028, %v6043
      %v6046 = vsub.f32 %v6029, %v6043
      %v6047 = vsub.f32 %v6030, %v6043
      %v6048 = vmul.f32 %v6044, 1.442695
      %v6049 = vpow.pop %v6048
      %v6050 = vmul.f32 %v6045, 1.442695
      %v6051 = vpow.pop %v6050
      %v6052 = vmul.f32 %v6046, 1.442695
      %v6053 = vpow.pop %v6052
      %v6054 = vmul.f32 %v6047, 1.442695
      %v6055 = vpow.pop %v6054
      %v6056 = vsel %vm3411, %v6049, 0.0
      %v6057 = vsel %vm3411, %v6051, 0.0
      %v6058 = vadd.f32 %v6056, %v6057
      %v6059 = vsel %vm3411, %v6053, 0.0
      %v6060 = vadd.f32 %v6058, %v6059
      %v6061 = vsel %vm3415, %v6055, 0.0
      %v6062 = vadd.f32 %v6060, %v6061
      %v6063 = vrot.slane %v6062, 4
      %v6064 = vadd.f32 %v6062, %v6063
      %v6065 = vrot.slane %v6064, 2
      %v6066 = vadd.f32 %v6064, %v6065
      %v6067 = vrot.slane %v6066, 1
      %v6068 = vadd.f32 %v6066, %v6067
      %v6069 = vrcp.pop %v6068
      %v6070 = vmul.f32 %v6049, %v6069
      %v6071 = vmul.f32 %v6051, %v6069
      %v6072 = vmul.f32 %v6053, %v6069
      %v6073 = vmul.f32 %v6055, %v6069
      %6075 = vset.pattern.permute.xlu0 0
      %6076 = vperm.xlu0 %6075, %v6070
      %v6077 = vpop.permute.xlu0 %6076
      %6080 = vset.pattern.permute.xlu0 0
      %6081 = vperm.xlu0 %6080, %v6071
      %v6082 = vpop.permute.xlu0 %6081
      %6085 = vset.pattern.permute.xlu0 0
      %6086 = vperm.xlu0 %6085, %v6072
      %v6087 = vpop.permute.xlu0 %6086
      %6090 = vset.pattern.permute.xlu0 0
      %6091 = vperm.xlu0 %6090, %v6073
      %v6092 = vpop.permute.xlu0 %6091
      %v6094 = vmul.f32 %v6077, %v5850
      %v6095 = vmul.f32 %v6082, %v5857
      %v6096 = vmul.f32 %v6087, %v5864
      %v6097 = vmul.f32 %v6092, %v5814
      %v6098 = vadd.f32 %v6094, %v6095
      %v6099 = vadd.f32 %v6098, %v6096
      %v6100 = vsel %vm3482, %v6097, 0.0
      %v6101 = vadd.f32 %v6099, %v6100
      %v6102 = vrot.slane %v6101, 4
      %v6103 = vadd.f32 %v6101, %v6102
      %v6104 = vrot.slane %v6103, 2
      %v6105 = vadd.f32 %v6103, %v6104
      %v6106 = vrot.slane %v6105, 1
      %v6107 = vadd.f32 %v6105, %v6106
      %v6108 = vld [vmem:[%s20] sm:$0xff]
      %v6109 = vld [vmem:[%s20 + $0x8] sm:$0xff]
      %v6110 = vld [vmem:[%s20 + $0x10] sm:$0xff]
      %v6111 = vld [vmem:[%s20 + $0x18] sm:$0xff]
      %v6112 = vld [vmem:[%s20 + $0x20] sm:$0xff]
      %v6113 = vld [vmem:[%s20 + $0x28] sm:$0xff]
      %v6114 = vld [vmem:[%s20 + $0x30] sm:$0xff]
      %v6115 = vld [vmem:[%s20 + $0x38] sm:$0xff]
      %v6116 = vld [vmem:[%s20 + $0x40] sm:$0xff]
      %v6117 = vld [vmem:[%s20 + $0x48] sm:$0xff]
      %v6118 = vld [vmem:[%s20 + $0x50] sm:$0xff]
      %v6119 = vld [vmem:[%s20 + $0x58] sm:$0xff]
      %v6120 = vld [vmem:[%s20 + $0x60] sm:$0xff]
      %v6121 = vld [vmem:[%s20 + $0x68] sm:$0xff]
      %v6122 = vld [vmem:[%s20 + $0x70] sm:$0xff]
      %v6123 = vld [vmem:[%s20 + $0x78] sm:$0xff]
      %v6124 = vld [vmem:[%s21] sm:$0x1]
      %6125 = vmatprep.subr.mxu0 0.0
      %6126 = vmatpush1.msra.mxu0 %v6123
      %6127 = vmatprep.subr.mxu0 0.0
      %6128 = vmatpush1.msra.mxu0 %v6122
      %6129 = vmatprep.subr.mxu0 0.0
      %6130 = vmatpush1.msra.mxu0 %v6121
      %6131 = vmatprep.subr.mxu0 0.0
      %6132 = vmatpush1.msra.mxu0 %v6120
      %6133 = vmatprep.subr.mxu0 0.0
      %6134 = vmatpush1.msra.mxu0 %v6119
      %6135 = vmatprep.subr.mxu0 0.0
      %6136 = vmatpush1.msra.mxu0 %v6118
      %6137 = vmatprep.subr.mxu0 0.0
      %6138 = vmatpush1.msra.mxu0 %v6117
      %6139 = vmatprep.subr.mxu0 0.0
      %6140 = vmatpush1.msra.mxu0 %v6116
      %6141 = vmatprep.subr.mxu0 0.0
      %6142 = vmatpush1.msra.mxu0 %v6115
      %6143 = vmatprep.subr.mxu0 0.0
      %6144 = vmatpush1.msra.mxu0 %v6114
      %6145 = vmatprep.subr.mxu0 0.0
      %6146 = vmatpush1.msra.mxu0 %v6113
      %6147 = vmatprep.subr.mxu0 0.0
      %6148 = vmatpush1.msra.mxu0 %v6112
      %6149 = vmatprep.subr.mxu0 0.0
      %6150 = vmatpush1.msra.mxu0 %v6111
      %6151 = vmatprep.subr.mxu0 0.0
      %6152 = vmatpush1.msra.mxu0 %v6110
      %6153 = vmatprep.subr.mxu0 0.0
      %6154 = vmatpush1.msra.mxu0 %v6109
      %6155 = vmatprep.subr.mxu0 0.0
      %6156 = vmatpush1.msra.mxu0 %v6108
      %6157 = vmatprep.subr.mxu0 0.0
      %6158 = vmatpush2.msra.mxu0 0.0
      %6159 = vmatprep.subr.mxu0 0.0
      %6160 = vmatpush2.msra.mxu0 0.0
      %6161 = vmatprep.subr.mxu0 0.0
      %6162 = vmatpush2.msra.mxu0 0.0
      %6163 = vmatprep.subr.mxu0 0.0
      %6164 = vmatpush2.msra.mxu0 0.0
      %6165 = vmatprep.subr.mxu0 0.0
      %6166 = vmatpush2.msra.mxu0 0.0
      %6167 = vmatprep.subr.mxu0 0.0
      %6168 = vmatpush2.msra.mxu0 0.0
      %6169 = vmatprep.subr.mxu0 0.0
      %6170 = vmatpush2.msra.mxu0 0.0
      %6171 = vmatprep.subr.mxu0 0.0
      %6172 = vmatpush2.msra.mxu0 0.0
      %6173 = vmatprep.subr.mxu0 0.0
      %6174 = vmatpush2.msra.mxu0 0.0
      %6175 = vmatprep.subr.mxu0 0.0
      %6176 = vmatpush2.msra.mxu0 0.0
      %6177 = vmatprep.subr.mxu0 0.0
      %6178 = vmatpush2.msra.mxu0 0.0
      %6179 = vmatprep.subr.mxu0 0.0
      %6180 = vmatpush2.msra.mxu0 0.0
      %6181 = vmatprep.subr.mxu0 0.0
      %6182 = vmatpush2.msra.mxu0 0.0
      %6183 = vmatprep.subr.mxu0 0.0
      %6184 = vmatpush2.msra.mxu0 0.0
      %6185 = vmatprep.subr.mxu0 0.0
      %6186 = vmatpush2.msra.mxu0 0.0
      %6187 = vmatprep.subr.mxu0 0.0
      %6188 = vmatpush2.msra.mxu0 0.0
      %6189 = vmatprep.mubr.f32.mxu0 0.0
      %6190 = vmatmul.mubr.f32.gmra.mxu0 %v6107
      %v6191 = vpop.f32.mrf.mxu0
      %v6192 = vadd.f32 %v6124, %v6191
      %v6193 = vpop.f32.mrf.mxu0
      %6194 = vdwg.mxu0
      %v6195 = vld [vmem:[%s965] sm:$0x1]
      %v6196 = vadd.f32 %v6192, %v6195
      %vm6197 = vcmp.ge.f32.partialorder %v6027, %v6043
      %vm6198 = vcmp.ge.f32.partialorder %v6028, %v6043
      %vm6199 = vcmp.ge.f32.partialorder %v6029, %v6043
      %vm6200 = vcmp.ge.f32.partialorder %v6030, %v6043
      %v6201 = vsel %vm6197, %v3581, 25
      %v6202 = vsel %vm6198, %v3582, 25
      %v6203 = vsel %vm6199, %v3583, 25
      %v6204 = vsel %vm6200, %v3584, 25
      %v6205 = vsel %vm3411, %v6201, 2147483647
      %v6206 = vsel %vm3411, %v6202, 2147483647
      %v6207 = vsel %vm3411, %v6203, 2147483647
      %v6208 = vsel %vm3415, %v6204, 2147483647
      %vm6209 = vcmp.lt.s32.totalorder %v6205, %v6206
      %v6210 = vsel %vm6209, %v6205, %v6206
      %vm6211 = vcmp.lt.s32.totalorder %v6207, %v6208
      %v6212 = vsel %vm6211, %v6207, %v6208
      %vm6213 = vcmp.lt.s32.totalorder %v6210, %v6212
      %v6214 = vsel %vm6213, %v6210, %v6212
      %v6215 = vrot.slane %v6214, 4
      %vm6216 = vcmp.lt.s32.totalorder %v6214, %v6215
      %v6217 = vsel %vm6216, %v6214, %v6215
      %v6218 = vrot.slane %v6217, 2
      %vm6219 = vcmp.lt.s32.totalorder %v6217, %v6218
      %v6220 = vsel %vm6219, %v6217, %v6218
      %v6221 = vrot.slane %v6220, 1
      %vm6222 = vcmp.lt.s32.totalorder %v6220, %v6221
      %v6223 = vsel %vm6222, %v6220, %v6221
      %v6224 = vmul.f32 %v3579, %v6196
      %v6225 = vld [vmem:[%s22] sm:$0x1]
      %v6226 = vmul.f32 %v6224, %v6225
      %v6227 = vsel %vm3396, %v6226, 0.0
      %6228 = vadd.xlane.f32.xlu0 %v6227
      %v6229 = vpop.xlane.xlu0 %6228
      %v6230 = vld [vmem:[#allocation4] sm:$0x1]
      %v6231 = vadd.f32 %v6229, %v6230
      %v6232 = vld [vmem:[%s968] sm:$0x1]
      %v6233 = vadd.f32 %v6231, %v6232
      %v6234 = vld [vmem:[%s971] sm:$0x1]
      %v6235 = vadd.f32 %v6233, %v6234
      %6236 = vst.msk [vmem:[%s974] sm:$0x1] %vm3415, %v6235
      %6237 = vst.msk [vmem:[%s977] sm:$0x1] %vm3415, %v3611
      %6238 = vst.msk [vmem:[%s980] sm:$0x1] %vm3415, %v6223
      %p6239 = scmp.lt.s32.totalorder %s46, 1
      %s6240 = scalar_select %p6239, %s46, 1
      %s6241 = scalar_lea.vmem %s26, %s6240
      %p6242 = scmp.lt.s32.totalorder %s46, 1
      %s6243 = scalar_select %p6242, %s46, 1
      %s6244 = scalar_lea.vmem %s27, %s6243
      %p6245 = scmp.lt.s32.totalorder %s46, 1
      %s6246 = scalar_select %p6245, %s46, 1
      %s6247 = scalar_lea.vmem %s28, %s6246
      // Predicated region
      $region125: #{narre_forward.1} parent=123 // pred_check
        %p6248 = pneg %p650
      $region126: #{narre_forward.1} parent=123 // pred_check_branch
        %6250 = sbr.rel (%p6248) target = $region128
      $region127: #{narre_forward.1} parent=123 // pred_region
        _
      $region128: #{narre_forward.1} parent=123 // pred_fallthru
        _
      // Predicated region
      $region129: #{narre_forward.1} parent=123 // pred_check
        %p6251 = pneg %p676
      $region130: #{narre_forward.1} parent=123 // pred_check_branch
        %6253 = sbr.rel (%p6251) target = $region132
      $region131: #{narre_forward.1} parent=123 // pred_region
        _
      $region132: #{narre_forward.1} parent=123 // pred_fallthru
        _
      // Predicated region
      $region133: #{narre_forward.1} parent=123 // pred_check
        %p6254 = pneg %p702
      $region134: #{narre_forward.1} parent=123 // pred_check_branch
        %6256 = sbr.rel (%p6254) target = $region136
      $region135: #{narre_forward.1} parent=123 // pred_region
        _
      $region136: #{narre_forward.1} parent=123 // pred_fallthru
        _
    $region124: #{narre_forward.1} parent=5 // pred_fallthru
      _
    %p6257 = scmp.le.s32.totalorder 2, %s41
    // Predicated region
    $region137: #{narre_forward.1} parent=5 // pred_check
      %p6258 = pneg %p6257
    $region138: #{narre_forward.1} parent=5 // pred_check_branch
      %6260 = sbr.rel (%p6258) target = $region140
    $region139: #{narre_forward.1} parent=5 // pred_region
      %s6261 = ssub.s32 %s41, 2
      // Predicated region
      $region141: #{narre_forward.1} parent=139 // pred_check
        %p6262 = pneg %p656
      $region142: #{narre_forward.1} parent=139 // pred_check_branch
        %6264 = sbr.rel (%p6262) target = $region144
      $region143: #{narre_forward.1} parent=139 // pred_region
        %p6265 = scmp.lt.s32.totalorder %s47, 1
        %s6266 = scalar_select %p6265, %s47, 1
        %s6267 = scalar_lea.vmem %s26, %s6266
      $region144: #{narre_forward.1} parent=139 // pred_fallthru
        _
      // Predicated region
      $region145: #{narre_forward.1} parent=139 // pred_check
        %p6268 = pneg %p682
      $region146: #{narre_forward.1} parent=139 // pred_check_branch
        %6270 = sbr.rel (%p6268) target = $region148
      $region147: #{narre_forward.1} parent=139 // pred_region
        %p6271 = scmp.lt.s32.totalorder %s47, 1
        %s6272 = scalar_select %p6271, %s47, 1
        %s6273 = scalar_lea.vmem %s27, %s6272
      $region148: #{narre_forward.1} parent=139 // pred_fallthru
        _
      // Predicated region
      $region149: #{narre_forward.1} parent=139 // pred_check
        %p6274 = pneg %p708
      $region150: #{narre_forward.1} parent=139 // pred_check_branch
        %6276 = sbr.rel (%p6274) target = $region152
      $region151: #{narre_forward.1} parent=139 // pred_region
        %p6277 = scmp.lt.s32.totalorder %s47, 1
        %s6278 = scalar_select %p6277, %s47, 1
        %s6279 = scalar_lea.vmem %s28, %s6278
      $region152: #{narre_forward.1} parent=139 // pred_fallthru
        _
    $region140: #{narre_forward.1} parent=5 // pred_fallthru
      _
  $region6: #{narre_forward.1} parent=0 // loop_footer
    %s45 = sadd.s32 1, %s41
  $region7: #{narre_forward.1} parent=0 // loop_footer_branch
    %40 = sbr.rel target = $region3
  $region8: #{narre_forward.1} parent=0 // loop_exit
    _

</llo_original>
